<compile_context>
chip_gen: v7x
topology: tpu7x:2x2x1
jax: 0.10.0
libtpu: 0.0.40
codegen_flags: <defaults>
</compile_context>

<pallas_src>
import functools

import jax
import jax.numpy as jnp
from jax import lax
from jax.experimental import pallas as pl
from jax.experimental.pallas import tpu as pltpu

EPS = 1e-5
VMEM_SPEC = pl.BlockSpec(memory_space=pltpu.MemorySpace.VMEM)


# --------------------------------------------------------------------------
# Fused whole-block kernel. Activations are carried in folded
# (channels, N*L padded to a 128 multiple) lane-dense layout.
# --------------------------------------------------------------------------
def _inception_block_kernel(lpos_ref, x_ref, *refs, L, n_valid, metas):
    *prefs, out_ref = refs
    it = iter(prefs)

    NLp = x_ref.shape[-1]
    inv_cnt = 1.0 / float(n_valid)
    lpos = lpos_ref[...]                       # (1, NLp) int32; pad lanes hold L
    valid = lpos < L                           # (1, NLp) bool — excludes pad lanes

    def bn(z):
        # torch BatchNorm1d training mode: biased variance, eps=1e-5.
        mean = jnp.where(valid, z, 0.0).sum(axis=-1, keepdims=True) * inv_cnt
        zc = z - mean
        var = (jnp.where(valid, zc, 0.0) ** 2).sum(axis=-1, keepdims=True) * inv_cnt
        return zc * lax.rsqrt(var + EPS)

    def tap(v, d, fill_self=False):
        # out[:, i] = v[:, i + d] while i+d stays inside the same sample, else fill.
        if d == 0:
            return v
        rolled = pltpu.roll(v, shift=(-d) % NLp, axis=1)   # XLU lane rotation
        mask = (lpos >= -d) if d < 0 else (lpos <= L - 1 - d)
        return jnp.where(mask, rolled, v if fill_self else 0.0)

    x = x_ref[...]
    residual = x
    for m in metas:
        org = x
        if m['use_bottleneck']:
            w_b, b_b = next(it)[...], next(it)[...]
            mid = jnp.dot(w_b, org, preferred_element_type=jnp.float32) + b_b
        else:
            mid = org
        w_all, b_all = next(it)[...], next(it)[...]
        gamma, beta = next(it)[...], next(it)[...]

        # MaxPool1d(3, stride=1, padding=1) on the original input. Masked neighbors
        # fall back to org itself (always in the window) -> no -inf anywhere.
        pooled = jnp.maximum(jnp.maximum(tap(org, -1, fill_self=True), org),
                             tap(org, 1, fill_self=True))

        # im2col value = [Kmax masked taps of mid ; pooled]; one deep MXU matmul
        # yields all three conv branches AND the maxpool 1x1 conv at once.
        taps = [tap(mid, t - m['P']) for t in range(m['Kmax'])]
        col = jnp.concatenate(taps + [pooled], axis=0)
        z = jnp.dot(w_all, col, preferred_element_type=jnp.float32) + b_all
        y = jnp.maximum(bn(z) * gamma + beta, 0.0)            # BN + ReLU

        if m['shortcut'] is not None:
            if m['shortcut'] == 'conv_bn':
                w_s, b_s = next(it)[...], next(it)[...]
                zr = jnp.dot(w_s, residual, preferred_element_type=jnp.float32) + b_s
            else:
                zr = residual
            g_s, be_s = next(it)[...], next(it)[...]
            y = jnp.maximum(y + bn(zr) * g_s + be_s, 0.0)
            residual = y
        x = y

    out_ref[...] = x.astype(out_ref.dtype)


# --------------------------------------------------------------------------
# JAX-side wrapper
# --------------------------------------------------------------------------
def _flatten_block_params(params):
    flat, metas = [], []
    for d in range(params['depth']):
        p = params['inception'][d]
        kmax = max(p['ksizes'])
        m = {'use_bottleneck': p['use_bottleneck'], 'Kmax': kmax,
             'P': (kmax - 1) // 2, 'shortcut': None}
        if p['use_bottleneck']:
            flat += [p['w_b'], p['b_b']]
        flat += [p['w_all'], p['b_all'], p['gamma'], p['beta']]
        if params['use_residuals'] and d % 3 == 2:
            sc = params['shortcut'][d // 3]
            m['shortcut'] = sc['type']
            if sc['type'] == 'conv_bn':
                flat += [sc['w'], sc['b']]
            flat += [sc['gamma'], sc['beta']]
        metas.append(m)
    return flat, tuple(metas)


def inception_block_forward(x, params):
    N, C_in, L = x.shape
    NL = N * L
    NLp = ((NL + 127) // 128) * 128            # lane-dense folded extent
    # fold batch onto lanes: (N, C, L) -> (C, N*L), pad lanes to a 128 multiple
    xf = jnp.transpose(x, (1, 0, 2)).reshape(C_in, NL)
    xf = jnp.pad(xf, ((0, 0), (0, NLp - NL)))
    lpos = jnp.pad(jnp.arange(NL, dtype=jnp.int32) % L, (0, NLp - NL),
                   constant_values=L).reshape(1, NLp)

    flat, metas = _flatten_block_params(params)
    c_out4 = params['inception'][-1]['w_all'].shape[0]

    kernel = functools.partial(_inception_block_kernel, L=L, n_valid=NL, metas=metas)
    y = pl.pallas_call(
        kernel,
        out_shape=jax.ShapeDtypeStruct((c_out4, NLp), jnp.float32),
        in_specs=[VMEM_SPEC] * (2 + len(flat)),
        out_specs=VMEM_SPEC,
    )(lpos, xf, *flat)

    # unfold: (C, N*L) -> (N, C, L), dropping the pad lanes
    return y[:, :NL].reshape(c_out4, N, L).transpose(1, 0, 2)


# --------------------------------------------------------------------------
# Deterministic parameter init (shapes follow the torch __init__) + packing
# --------------------------------------------------------------------------
def _winit(key, shape, fan_in):
    bound = 1.0 / (fan_in ** 0.5)
    return jax.random.uniform(key, shape, jnp.float32, -bound, bound)


def init_inception_module(key, c_in, c_out, kernel_size, use_bottleneck):
    assert kernel_size > 3, 'Kernel size must be strictly greater than 3'
    ksizes = [kernel_size // (2 ** i) for i in range(3)]
    ksizes = [k if k % 2 != 0 else k - 1 for k in ksizes]
    use_bn = use_bottleneck and c_in > 1
    c_mid = c_out if use_bn else c_in
    kmax = max(ksizes)
    ks = jax.random.split(key, 12)
    p = {'use_bottleneck': use_bn, 'ksizes': tuple(ksizes)}
    if use_bn:
        p['w_b'] = _winit(ks[0], (c_out, c_in), c_in)
        p['b_b'] = _winit(ks[1], (c_out, 1), c_in)
    raw_branches, packed_w, packed_b = [], [], []
    for i, K in enumerate(ksizes):
        w = _winit(ks[2 + 2 * i], (c_out, c_mid, K), c_mid * K)
        b = _winit(ks[3 + 2 * i], (c_out, 1), c_mid * K)
        raw_branches.append((w, b))
        pad = (kmax - K) // 2
        wp = jnp.pad(w, ((0, 0), (0, 0), (pad, pad)))            # center in kmax window
        wp = jnp.transpose(wp, (0, 2, 1)).reshape(c_out, kmax * c_mid)   # tap-major
        wp = jnp.pad(wp, ((0, 0), (0, c_in)))                    # zero block vs pooled rows
        packed_w.append(wp)
        packed_b.append(b)
    w_mp = _winit(ks[8], (c_out, c_in), c_in)
    b_mp = _winit(ks[9], (c_out, 1), c_in)
    mp_row = jnp.concatenate([jnp.zeros((c_out, kmax * c_mid), jnp.float32), w_mp], axis=1)
    # single packed weight: 3 conv branches + maxpool 1x1 conv share one matmul
    p['w_all'] = jnp.concatenate(packed_w + [mp_row], axis=0)    # (4*c_out, kmax*c_mid+c_in)
    p['b_all'] = jnp.concatenate(packed_b + [b_mp], axis=0)      # (4*c_out, 1)
    p['gamma'] = 1.0 + 0.1 * jax.random.normal(ks[10], (4 * c_out, 1), jnp.float32)
    p['beta'] = 0.1 * jax.random.normal(ks[11], (4 * c_out, 1), jnp.float32)
    p['raw_branches'] = raw_branches                             # kept for the reference
    p['w_mp'], p['b_mp'] = w_mp, b_mp
    return p


def init_inception_block(key, in_channels, out_channels, *, kernel_size=8, depth=6,
                         use_bottleneck=True, use_residuals=True):
    keys = jax.random.split(key, depth + max(depth // 3, 1))
    inception, shortcuts = [], []
    for d in range(depth):
        c_in = in_channels if d == 0 else out_channels * 4
        inception.append(init_inception_module(keys[d], c_in, out_channels,
                                               kernel_size, use_bottleneck))
        if use_residuals and d % 3 == 2:
            n_in = in_channels if d == 2 else out_channels * 4
            n_out = out_channels * 4
            sk = jax.random.split(keys[depth + d // 3], 4)
            sc = {'gamma': 1.0 + 0.1 * jax.random.normal(sk[0], (n_out, 1), jnp.float32),
                  'beta': 0.1 * jax.random.normal(sk[1], (n_out, 1), jnp.float32)}
            if n_in == n_out:
                sc['type'] = 'bn'                  # BatchNorm1d(n_in)
            else:
                sc['type'] = 'conv_bn'             # ConvBlock(n_in, n_out, 1, 1, None)
                sc['w'] = _winit(sk[2], (n_out, n_in), n_in)
                sc['b'] = _winit(sk[3], (n_out, 1), n_in)
            shortcuts.append(sc)
    return {'inception': inception, 'shortcut': shortcuts,
            'depth': depth, 'use_residuals': use_residuals}


# --------------------------------------------------------------------------
# Pure-JAX reference of the torch forward (for numerical parity checking only)
# --------------------------------------------------------------------------
def _conv1d_ref(x, w, b, pad):
    out = lax.conv_general_dilated(x, w, window_strides=(1,), padding=[(pad, pad)],
                                   dimension_numbers=('NCH', 'OIH', 'NCH'),
                                   precision=lax.Precision.HIGHEST)
    return out + b.reshape(1, -1, 1)


def _bn_ref(x, gamma, beta):
    mean = x.mean(axis=(0, 2), keepdims=True)
    var = ((x - mean) ** 2).mean(axis=(0, 2), keepdims=True)
    return (x - mean) * lax.rsqrt(var + EPS) * gamma.reshape(1, -1, 1) + beta.reshape(1, -1, 1)


def _maxpool3_ref(x):
    return lax.reduce_window(x, -jnp.inf, lax.max, (1, 1, 3), (1, 1, 1),
                             ((0, 0), (0, 0), (1, 1)))


def reference_forward(x, params):
    residual, out = x, x
    for d in range(params['depth']):
        p = params['inception'][d]
        org = out
        h = _conv1d_ref(org, p['w_b'][..., None], p['b_b'], 0) if p['use_bottleneck'] else org
        branches = [_conv1d_ref(h, w, b, (w.shape[-1] - 1) // 2)
                    for (w, b) in p['raw_branches']]
        mp = _conv1d_ref(_maxpool3_ref(org), p['w_mp'][..., None], p['b_mp'], 0)
        z = jnp.concatenate(branches + [mp], axis=1)
        out = jax.nn.relu(_bn_ref(z, p['gamma'], p['beta']))
        if params['use_residuals'] and d % 3 == 2:
            sc = params['shortcut'][d // 3]
            r = (_conv1d_ref(residual, sc['w'][..., None], sc['b'], 0)
                 if sc['type'] == 'conv_bn' else residual)
            out = jax.nn.relu(out + _bn_ref(r, sc['gamma'], sc['beta']))
            residual = out
    return out


# --------------------------------------------------------------------------
if __name__ == "__main__":
    key = jax.random.PRNGKey(0)
    k_params, k_x = jax.random.split(key)

    N, C_in, L = 2, 4, 16        # batch, input channels, sequence length
    C_out = 8                    # per-branch channels (module output = 4*C_out = 32)
    kernel_size = 8              # > 3 -> branch kernel sizes [7, 3, 1]
    depth = 6

    params = init_inception_block(k_params, C_in, C_out,
                                  kernel_size=kernel_size, depth=depth)
    x = jax.random.normal(k_x, (N, C_in, L), jnp.float32)

    y = jax.block_until_ready(inception_block_forward(x, params))

    assert y.shape == (N, 4 * C_out, L), y.shape
    assert bool(jnp.all(jnp.isfinite(y)))

    # numerical parity vs the pure-JAX reference of the torch forward
    y_ref = reference_forward(x, params)
    max_err = float(jnp.max(jnp.abs(y - y_ref)))
    assert max_err < 5e-2, f"max abs error vs reference: {max_err}"
    print("KERNEL_OK")
</pallas_src>

<mosaic_0001>
module attributes {stable_mosaic.version = 11 : i64} {
  func.func @_inception_block_kernel(%arg0: memref<1x128xi32, #tpu.memory_space<vmem>>, %arg1: memref<4x128xf32, #tpu.memory_space<vmem>>, %arg2: memref<8x4xf32, #tpu.memory_space<vmem>>, %arg3: memref<8x1xf32, #tpu.memory_space<vmem>>, %arg4: memref<32x60xf32, #tpu.memory_space<vmem>>, %arg5: memref<32x1xf32, #tpu.memory_space<vmem>>, %arg6: memref<32x1xf32, #tpu.memory_space<vmem>>, %arg7: memref<32x1xf32, #tpu.memory_space<vmem>>, %arg8: memref<8x32xf32, #tpu.memory_space<vmem>>, %arg9: memref<8x1xf32, #tpu.memory_space<vmem>>, %arg10: memref<32x88xf32, #tpu.memory_space<vmem>>, %arg11: memref<32x1xf32, #tpu.memory_space<vmem>>, %arg12: memref<32x1xf32, #tpu.memory_space<vmem>>, %arg13: memref<32x1xf32, #tpu.memory_space<vmem>>, %arg14: memref<8x32xf32, #tpu.memory_space<vmem>>, %arg15: memref<8x1xf32, #tpu.memory_space<vmem>>, %arg16: memref<32x88xf32, #tpu.memory_space<vmem>>, %arg17: memref<32x1xf32, #tpu.memory_space<vmem>>, %arg18: memref<32x1xf32, #tpu.memory_space<vmem>>, %arg19: memref<32x1xf32, #tpu.memory_space<vmem>>, %arg20: memref<32x4xf32, #tpu.memory_space<vmem>>, %arg21: memref<32x1xf32, #tpu.memory_space<vmem>>, %arg22: memref<32x1xf32, #tpu.memory_space<vmem>>, %arg23: memref<32x1xf32, #tpu.memory_space<vmem>>, %arg24: memref<8x32xf32, #tpu.memory_space<vmem>>, %arg25: memref<8x1xf32, #tpu.memory_space<vmem>>, %arg26: memref<32x88xf32, #tpu.memory_space<vmem>>, %arg27: memref<32x1xf32, #tpu.memory_space<vmem>>, %arg28: memref<32x1xf32, #tpu.memory_space<vmem>>, %arg29: memref<32x1xf32, #tpu.memory_space<vmem>>, %arg30: memref<8x32xf32, #tpu.memory_space<vmem>>, %arg31: memref<8x1xf32, #tpu.memory_space<vmem>>, %arg32: memref<32x88xf32, #tpu.memory_space<vmem>>, %arg33: memref<32x1xf32, #tpu.memory_space<vmem>>, %arg34: memref<32x1xf32, #tpu.memory_space<vmem>>, %arg35: memref<32x1xf32, #tpu.memory_space<vmem>>, %arg36: memref<8x32xf32, #tpu.memory_space<vmem>>, %arg37: memref<8x1xf32, #tpu.memory_space<vmem>>, %arg38: memref<32x88xf32, #tpu.memory_space<vmem>>, %arg39: memref<32x1xf32, #tpu.memory_space<vmem>>, %arg40: memref<32x1xf32, #tpu.memory_space<vmem>>, %arg41: memref<32x1xf32, #tpu.memory_space<vmem>>, %arg42: memref<32x1xf32, #tpu.memory_space<vmem>>, %arg43: memref<32x1xf32, #tpu.memory_space<vmem>>, %arg44: memref<32x128xf32, #tpu.memory_space<vmem>>) attributes {dimension_semantics = [], scalar_prefetch = 0 : i64, scratch_operands = 0 : i64, tpu.core_type = #tpu.core_type<tc>} {
    %c0 = arith.constant 0 : index
    %c0_0 = arith.constant 0 : index
    %0 = vector.load %arg0[%c0, %c0_0] : memref<1x128xi32, #tpu.memory_space<vmem>>, vector<1x128xi32>
    %c16_i32 = arith.constant 16 : i32
    %1 = vector.broadcast %c16_i32 : i32 to vector<1x128xi32>
    %2 = arith.cmpi slt, %0, %1 : vector<1x128xi32>
    %c0_1 = arith.constant 0 : index
    %c0_2 = arith.constant 0 : index
    %3 = vector.load %arg1[%c0_1, %c0_2] : memref<4x128xf32, #tpu.memory_space<vmem>>, vector<4x128xf32>
    %c0_3 = arith.constant 0 : index
    %c0_4 = arith.constant 0 : index
    %4 = vector.load %arg2[%c0_3, %c0_4] : memref<8x4xf32, #tpu.memory_space<vmem>>, vector<8x4xf32>
    %c0_5 = arith.constant 0 : index
    %c0_6 = arith.constant 0 : index
    %5 = vector.load %arg3[%c0_5, %c0_6] : memref<8x1xf32, #tpu.memory_space<vmem>>, vector<8x1xf32>
    %cst = arith.constant dense<0.000000e+00> : vector<8x128xf32>
    %6 = tpu.matmul %4, %3, %cst {dimension_numbers = #tpu.dot_dimension_numbers<[1], [0], [0], [1], [0, 0, 1, 1], [], []>} : vector<8x4xf32>, vector<4x128xf32>, vector<8x128xf32> -> vector<8x128xf32>
    %7 = vector.broadcast %5 : vector<8x1xf32> to vector<8x128xf32>
    %8 = arith.addf %6, %7 : vector<8x128xf32>
    %c0_7 = arith.constant 0 : index
    %c0_8 = arith.constant 0 : index
    %9 = vector.load %arg4[%c0_7, %c0_8] : memref<32x60xf32, #tpu.memory_space<vmem>>, vector<32x60xf32>
    %c0_9 = arith.constant 0 : index
    %c0_10 = arith.constant 0 : index
    %10 = vector.load %arg5[%c0_9, %c0_10] : memref<32x1xf32, #tpu.memory_space<vmem>>, vector<32x1xf32>
    %c0_11 = arith.constant 0 : index
    %c0_12 = arith.constant 0 : index
    %11 = vector.load %arg6[%c0_11, %c0_12] : memref<32x1xf32, #tpu.memory_space<vmem>>, vector<32x1xf32>
    %c0_13 = arith.constant 0 : index
    %c0_14 = arith.constant 0 : index
    %12 = vector.load %arg7[%c0_13, %c0_14] : memref<32x1xf32, #tpu.memory_space<vmem>>, vector<32x1xf32>
    %c1_i32 = arith.constant 1 : i32
    %13 = tpu.dynamic_rotate %3 by %c1_i32 dim 1 : vector<4x128xf32>, i32 -> vector<4x128xf32>
    %c1_i32_15 = arith.constant 1 : i32
    %14 = vector.broadcast %c1_i32_15 : i32 to vector<1x128xi32>
    %15 = arith.cmpi sge, %0, %14 : vector<1x128xi32>
    %16 = vector.shape_cast %15 : vector<1x128xi1> to vector<1x128xi1>
    %17 = vector.broadcast %16 : vector<1x128xi1> to vector<4x128xi1>
    %18 = arith.select %17, %13, %3 : vector<4x128xi1>, vector<4x128xf32>
    %19 = arith.maximumf %18, %3 : vector<4x128xf32>
    %c127_i32 = arith.constant 127 : i32
    %20 = tpu.dynamic_rotate %3 by %c127_i32 dim 1 : vector<4x128xf32>, i32 -> vector<4x128xf32>
    %c14_i32 = arith.constant 14 : i32
    %21 = vector.broadcast %c14_i32 : i32 to vector<1x128xi32>
    %22 = arith.cmpi sle, %0, %21 : vector<1x128xi32>
    %23 = vector.shape_cast %22 : vector<1x128xi1> to vector<1x128xi1>
    %24 = vector.broadcast %23 : vector<1x128xi1> to vector<4x128xi1>
    %25 = arith.select %24, %20, %3 : vector<4x128xi1>, vector<4x128xf32>
    %26 = arith.maximumf %19, %25 : vector<4x128xf32>
    %c3_i32 = arith.constant 3 : i32
    %27 = tpu.dynamic_rotate %8 by %c3_i32 dim 1 : vector<8x128xf32>, i32 -> vector<8x128xf32>
    %c3_i32_16 = arith.constant 3 : i32
    %28 = vector.broadcast %c3_i32_16 : i32 to vector<1x128xi32>
    %29 = arith.cmpi sge, %0, %28 : vector<1x128xi32>
    %cst_17 = arith.constant 0.000000e+00 : f32
    %30 = vector.shape_cast %29 : vector<1x128xi1> to vector<1x128xi1>
    %31 = vector.broadcast %30 : vector<1x128xi1> to vector<8x128xi1>
    %32 = vector.broadcast %cst_17 : f32 to vector<8x128xf32>
    %33 = arith.select %31, %27, %32 : vector<8x128xi1>, vector<8x128xf32>
    %c2_i32 = arith.constant 2 : i32
    %34 = tpu.dynamic_rotate %8 by %c2_i32 dim 1 : vector<8x128xf32>, i32 -> vector<8x128xf32>
    %c2_i32_18 = arith.constant 2 : i32
    %35 = vector.broadcast %c2_i32_18 : i32 to vector<1x128xi32>
    %36 = arith.cmpi sge, %0, %35 : vector<1x128xi32>
    %cst_19 = arith.constant 0.000000e+00 : f32
    %37 = vector.shape_cast %36 : vector<1x128xi1> to vector<1x128xi1>
    %38 = vector.broadcast %37 : vector<1x128xi1> to vector<8x128xi1>
    %39 = vector.broadcast %cst_19 : f32 to vector<8x128xf32>
    %40 = arith.select %38, %34, %39 : vector<8x128xi1>, vector<8x128xf32>
    %c1_i32_20 = arith.constant 1 : i32
    %41 = tpu.dynamic_rotate %8 by %c1_i32_20 dim 1 : vector<8x128xf32>, i32 -> vector<8x128xf32>
    %c1_i32_21 = arith.constant 1 : i32
    %42 = vector.broadcast %c1_i32_21 : i32 to vector<1x128xi32>
    %43 = arith.cmpi sge, %0, %42 : vector<1x128xi32>
    %cst_22 = arith.constant 0.000000e+00 : f32
    %44 = vector.shape_cast %43 : vector<1x128xi1> to vector<1x128xi1>
    %45 = vector.broadcast %44 : vector<1x128xi1> to vector<8x128xi1>
    %46 = vector.broadcast %cst_22 : f32 to vector<8x128xf32>
    %47 = arith.select %45, %41, %46 : vector<8x128xi1>, vector<8x128xf32>
    %c127_i32_23 = arith.constant 127 : i32
    %48 = tpu.dynamic_rotate %8 by %c127_i32_23 dim 1 : vector<8x128xf32>, i32 -> vector<8x128xf32>
    %c14_i32_24 = arith.constant 14 : i32
    %49 = vector.broadcast %c14_i32_24 : i32 to vector<1x128xi32>
    %50 = arith.cmpi sle, %0, %49 : vector<1x128xi32>
    %cst_25 = arith.constant 0.000000e+00 : f32
    %51 = vector.shape_cast %50 : vector<1x128xi1> to vector<1x128xi1>
    %52 = vector.broadcast %51 : vector<1x128xi1> to vector<8x128xi1>
    %53 = vector.broadcast %cst_25 : f32 to vector<8x128xf32>
    %54 = arith.select %52, %48, %53 : vector<8x128xi1>, vector<8x128xf32>
    %c126_i32 = arith.constant 126 : i32
    %55 = tpu.dynamic_rotate %8 by %c126_i32 dim 1 : vector<8x128xf32>, i32 -> vector<8x128xf32>
    %c13_i32 = arith.constant 13 : i32
    %56 = vector.broadcast %c13_i32 : i32 to vector<1x128xi32>
    %57 = arith.cmpi sle, %0, %56 : vector<1x128xi32>
    %cst_26 = arith.constant 0.000000e+00 : f32
    %58 = vector.shape_cast %57 : vector<1x128xi1> to vector<1x128xi1>
    %59 = vector.broadcast %58 : vector<1x128xi1> to vector<8x128xi1>
    %60 = vector.broadcast %cst_26 : f32 to vector<8x128xf32>
    %61 = arith.select %59, %55, %60 : vector<8x128xi1>, vector<8x128xf32>
    %c125_i32 = arith.constant 125 : i32
    %62 = tpu.dynamic_rotate %8 by %c125_i32 dim 1 : vector<8x128xf32>, i32 -> vector<8x128xf32>
    %c12_i32 = arith.constant 12 : i32
    %63 = vector.broadcast %c12_i32 : i32 to vector<1x128xi32>
    %64 = arith.cmpi sle, %0, %63 : vector<1x128xi32>
    %cst_27 = arith.constant 0.000000e+00 : f32
    %65 = vector.shape_cast %64 : vector<1x128xi1> to vector<1x128xi1>
    %66 = vector.broadcast %65 : vector<1x128xi1> to vector<8x128xi1>
    %67 = vector.broadcast %cst_27 : f32 to vector<8x128xf32>
    %68 = arith.select %66, %62, %67 : vector<8x128xi1>, vector<8x128xf32>
    %69 = tpu.concatenate %33, %40, %47, %8, %54, %61, %68, %26 in 0 : vector<8x128xf32>, vector<8x128xf32>, vector<8x128xf32>, vector<8x128xf32>, vector<8x128xf32>, vector<8x128xf32>, vector<8x128xf32>, vector<4x128xf32> -> vector<60x128xf32>
    %cst_28 = arith.constant dense<0.000000e+00> : vector<32x128xf32>
    %70 = tpu.matmul %9, %69, %cst_28 {dimension_numbers = #tpu.dot_dimension_numbers<[1], [0], [0], [1], [0, 0, 1, 1], [], []>} : vector<32x60xf32>, vector<60x128xf32>, vector<32x128xf32> -> vector<32x128xf32>
    %71 = vector.broadcast %10 : vector<32x1xf32> to vector<32x128xf32>
    %72 = arith.addf %70, %71 : vector<32x128xf32>
    %cst_29 = arith.constant 0.000000e+00 : f32
    %73 = vector.shape_cast %2 : vector<1x128xi1> to vector<1x128xi1>
    %74 = vector.broadcast %73 : vector<1x128xi1> to vector<32x128xi1>
    %75 = vector.broadcast %cst_29 : f32 to vector<32x128xf32>
    %76 = arith.select %74, %72, %75 : vector<32x128xi1>, vector<32x128xf32>
    %cst_30 = arith.constant dense<0.000000e+00> : vector<32xf32>
    %77 = vector.multi_reduction <add>, %76, %cst_30 [1] : vector<32x128xf32> to vector<32xf32>
    %78 = vector.shape_cast %77 : vector<32xf32> to vector<32x1xf32>
    %cst_31 = arith.constant 3.125000e-02 : f32
    %79 = vector.broadcast %cst_31 : f32 to vector<32x1xf32>
    %80 = arith.mulf %78, %79 : vector<32x1xf32>
    %81 = vector.broadcast %80 : vector<32x1xf32> to vector<32x128xf32>
    %82 = arith.subf %72, %81 : vector<32x128xf32>
    %cst_32 = arith.constant 0.000000e+00 : f32
    %83 = vector.shape_cast %2 : vector<1x128xi1> to vector<1x128xi1>
    %84 = vector.broadcast %83 : vector<1x128xi1> to vector<32x128xi1>
    %85 = vector.broadcast %cst_32 : f32 to vector<32x128xf32>
    %86 = arith.select %84, %82, %85 : vector<32x128xi1>, vector<32x128xf32>
    %87 = arith.mulf %86, %86 : vector<32x128xf32>
    %cst_33 = arith.constant dense<0.000000e+00> : vector<32xf32>
    %88 = vector.multi_reduction <add>, %87, %cst_33 [1] : vector<32x128xf32> to vector<32xf32>
    %89 = vector.shape_cast %88 : vector<32xf32> to vector<32x1xf32>
    %cst_34 = arith.constant 3.125000e-02 : f32
    %90 = vector.broadcast %cst_34 : f32 to vector<32x1xf32>
    %91 = arith.mulf %89, %90 : vector<32x1xf32>
    %cst_35 = arith.constant 9.99999974E-6 : f32
    %92 = vector.broadcast %cst_35 : f32 to vector<32x1xf32>
    %93 = arith.addf %91, %92 : vector<32x1xf32>
    %94 = math.rsqrt %93 : vector<32x1xf32>
    %95 = vector.broadcast %94 : vector<32x1xf32> to vector<32x128xf32>
    %96 = arith.mulf %82, %95 : vector<32x128xf32>
    %97 = vector.broadcast %11 : vector<32x1xf32> to vector<32x128xf32>
    %98 = arith.mulf %96, %97 : vector<32x128xf32>
    %99 = vector.broadcast %12 : vector<32x1xf32> to vector<32x128xf32>
    %100 = arith.addf %98, %99 : vector<32x128xf32>
    %cst_36 = arith.constant 0.000000e+00 : f32
    %101 = vector.broadcast %cst_36 : f32 to vector<32x128xf32>
    %102 = arith.maximumf %100, %101 : vector<32x128xf32>
    %c0_37 = arith.constant 0 : index
    %c0_38 = arith.constant 0 : index
    %103 = vector.load %arg8[%c0_37, %c0_38] : memref<8x32xf32, #tpu.memory_space<vmem>>, vector<8x32xf32>
    %c0_39 = arith.constant 0 : index
    %c0_40 = arith.constant 0 : index
    %104 = vector.load %arg9[%c0_39, %c0_40] : memref<8x1xf32, #tpu.memory_space<vmem>>, vector<8x1xf32>
    %cst_41 = arith.constant dense<0.000000e+00> : vector<8x128xf32>
    %105 = tpu.matmul %103, %102, %cst_41 {dimension_numbers = #tpu.dot_dimension_numbers<[1], [0], [0], [1], [0, 0, 1, 1], [], []>} : vector<8x32xf32>, vector<32x128xf32>, vector<8x128xf32> -> vector<8x128xf32>
    %106 = vector.broadcast %104 : vector<8x1xf32> to vector<8x128xf32>
    %107 = arith.addf %105, %106 : vector<8x128xf32>
    %c0_42 = arith.constant 0 : index
    %c0_43 = arith.constant 0 : index
    %108 = vector.load %arg10[%c0_42, %c0_43] : memref<32x88xf32, #tpu.memory_space<vmem>>, vector<32x88xf32>
    %c0_44 = arith.constant 0 : index
    %c0_45 = arith.constant 0 : index
    %109 = vector.load %arg11[%c0_44, %c0_45] : memref<32x1xf32, #tpu.memory_space<vmem>>, vector<32x1xf32>
    %c0_46 = arith.constant 0 : index
    %c0_47 = arith.constant 0 : index
    %110 = vector.load %arg12[%c0_46, %c0_47] : memref<32x1xf32, #tpu.memory_space<vmem>>, vector<32x1xf32>
    %c0_48 = arith.constant 0 : index
    %c0_49 = arith.constant 0 : index
    %111 = vector.load %arg13[%c0_48, %c0_49] : memref<32x1xf32, #tpu.memory_space<vmem>>, vector<32x1xf32>
    %c1_i32_50 = arith.constant 1 : i32
    %112 = tpu.dynamic_rotate %102 by %c1_i32_50 dim 1 : vector<32x128xf32>, i32 -> vector<32x128xf32>
    %c1_i32_51 = arith.constant 1 : i32
    %113 = vector.broadcast %c1_i32_51 : i32 to vector<1x128xi32>
    %114 = arith.cmpi sge, %0, %113 : vector<1x128xi32>
    %115 = vector.shape_cast %114 : vector<1x128xi1> to vector<1x128xi1>
    %116 = vector.broadcast %115 : vector<1x128xi1> to vector<32x128xi1>
    %117 = arith.select %116, %112, %102 : vector<32x128xi1>, vector<32x128xf32>
    %118 = arith.maximumf %117, %102 : vector<32x128xf32>
    %c127_i32_52 = arith.constant 127 : i32
    %119 = tpu.dynamic_rotate %102 by %c127_i32_52 dim 1 : vector<32x128xf32>, i32 -> vector<32x128xf32>
    %c14_i32_53 = arith.constant 14 : i32
    %120 = vector.broadcast %c14_i32_53 : i32 to vector<1x128xi32>
    %121 = arith.cmpi sle, %0, %120 : vector<1x128xi32>
    %122 = vector.shape_cast %121 : vector<1x128xi1> to vector<1x128xi1>
    %123 = vector.broadcast %122 : vector<1x128xi1> to vector<32x128xi1>
    %124 = arith.select %123, %119, %102 : vector<32x128xi1>, vector<32x128xf32>
    %125 = arith.maximumf %118, %124 : vector<32x128xf32>
    %c3_i32_54 = arith.constant 3 : i32
    %126 = tpu.dynamic_rotate %107 by %c3_i32_54 dim 1 : vector<8x128xf32>, i32 -> vector<8x128xf32>
    %c3_i32_55 = arith.constant 3 : i32
    %127 = vector.broadcast %c3_i32_55 : i32 to vector<1x128xi32>
    %128 = arith.cmpi sge, %0, %127 : vector<1x128xi32>
    %cst_56 = arith.constant 0.000000e+00 : f32
    %129 = vector.shape_cast %128 : vector<1x128xi1> to vector<1x128xi1>
    %130 = vector.broadcast %129 : vector<1x128xi1> to vector<8x128xi1>
    %131 = vector.broadcast %cst_56 : f32 to vector<8x128xf32>
    %132 = arith.select %130, %126, %131 : vector<8x128xi1>, vector<8x128xf32>
    %c2_i32_57 = arith.constant 2 : i32
    %133 = tpu.dynamic_rotate %107 by %c2_i32_57 dim 1 : vector<8x128xf32>, i32 -> vector<8x128xf32>
    %c2_i32_58 = arith.constant 2 : i32
    %134 = vector.broadcast %c2_i32_58 : i32 to vector<1x128xi32>
    %135 = arith.cmpi sge, %0, %134 : vector<1x128xi32>
    %cst_59 = arith.constant 0.000000e+00 : f32
    %136 = vector.shape_cast %135 : vector<1x128xi1> to vector<1x128xi1>
    %137 = vector.broadcast %136 : vector<1x128xi1> to vector<8x128xi1>
    %138 = vector.broadcast %cst_59 : f32 to vector<8x128xf32>
    %139 = arith.select %137, %133, %138 : vector<8x128xi1>, vector<8x128xf32>
    %c1_i32_60 = arith.constant 1 : i32
    %140 = tpu.dynamic_rotate %107 by %c1_i32_60 dim 1 : vector<8x128xf32>, i32 -> vector<8x128xf32>
    %c1_i32_61 = arith.constant 1 : i32
    %141 = vector.broadcast %c1_i32_61 : i32 to vector<1x128xi32>
    %142 = arith.cmpi sge, %0, %141 : vector<1x128xi32>
    %cst_62 = arith.constant 0.000000e+00 : f32
    %143 = vector.shape_cast %142 : vector<1x128xi1> to vector<1x128xi1>
    %144 = vector.broadcast %143 : vector<1x128xi1> to vector<8x128xi1>
    %145 = vector.broadcast %cst_62 : f32 to vector<8x128xf32>
    %146 = arith.select %144, %140, %145 : vector<8x128xi1>, vector<8x128xf32>
    %c127_i32_63 = arith.constant 127 : i32
    %147 = tpu.dynamic_rotate %107 by %c127_i32_63 dim 1 : vector<8x128xf32>, i32 -> vector<8x128xf32>
    %c14_i32_64 = arith.constant 14 : i32
    %148 = vector.broadcast %c14_i32_64 : i32 to vector<1x128xi32>
    %149 = arith.cmpi sle, %0, %148 : vector<1x128xi32>
    %cst_65 = arith.constant 0.000000e+00 : f32
    %150 = vector.shape_cast %149 : vector<1x128xi1> to vector<1x128xi1>
    %151 = vector.broadcast %150 : vector<1x128xi1> to vector<8x128xi1>
    %152 = vector.broadcast %cst_65 : f32 to vector<8x128xf32>
    %153 = arith.select %151, %147, %152 : vector<8x128xi1>, vector<8x128xf32>
    %c126_i32_66 = arith.constant 126 : i32
    %154 = tpu.dynamic_rotate %107 by %c126_i32_66 dim 1 : vector<8x128xf32>, i32 -> vector<8x128xf32>
    %c13_i32_67 = arith.constant 13 : i32
    %155 = vector.broadcast %c13_i32_67 : i32 to vector<1x128xi32>
    %156 = arith.cmpi sle, %0, %155 : vector<1x128xi32>
    %cst_68 = arith.constant 0.000000e+00 : f32
    %157 = vector.shape_cast %156 : vector<1x128xi1> to vector<1x128xi1>
    %158 = vector.broadcast %157 : vector<1x128xi1> to vector<8x128xi1>
    %159 = vector.broadcast %cst_68 : f32 to vector<8x128xf32>
    %160 = arith.select %158, %154, %159 : vector<8x128xi1>, vector<8x128xf32>
    %c125_i32_69 = arith.constant 125 : i32
    %161 = tpu.dynamic_rotate %107 by %c125_i32_69 dim 1 : vector<8x128xf32>, i32 -> vector<8x128xf32>
    %c12_i32_70 = arith.constant 12 : i32
    %162 = vector.broadcast %c12_i32_70 : i32 to vector<1x128xi32>
    %163 = arith.cmpi sle, %0, %162 : vector<1x128xi32>
    %cst_71 = arith.constant 0.000000e+00 : f32
    %164 = vector.shape_cast %163 : vector<1x128xi1> to vector<1x128xi1>
    %165 = vector.broadcast %164 : vector<1x128xi1> to vector<8x128xi1>
    %166 = vector.broadcast %cst_71 : f32 to vector<8x128xf32>
    %167 = arith.select %165, %161, %166 : vector<8x128xi1>, vector<8x128xf32>
    %168 = tpu.concatenate %132, %139, %146, %107, %153, %160, %167, %125 in 0 : vector<8x128xf32>, vector<8x128xf32>, vector<8x128xf32>, vector<8x128xf32>, vector<8x128xf32>, vector<8x128xf32>, vector<8x128xf32>, vector<32x128xf32> -> vector<88x128xf32>
    %cst_72 = arith.constant dense<0.000000e+00> : vector<32x128xf32>
    %169 = tpu.matmul %108, %168, %cst_72 {dimension_numbers = #tpu.dot_dimension_numbers<[1], [0], [0], [1], [0, 0, 1, 1], [], []>} : vector<32x88xf32>, vector<88x128xf32>, vector<32x128xf32> -> vector<32x128xf32>
    %170 = vector.broadcast %109 : vector<32x1xf32> to vector<32x128xf32>
    %171 = arith.addf %169, %170 : vector<32x128xf32>
    %cst_73 = arith.constant 0.000000e+00 : f32
    %172 = vector.shape_cast %2 : vector<1x128xi1> to vector<1x128xi1>
    %173 = vector.broadcast %172 : vector<1x128xi1> to vector<32x128xi1>
    %174 = vector.broadcast %cst_73 : f32 to vector<32x128xf32>
    %175 = arith.select %173, %171, %174 : vector<32x128xi1>, vector<32x128xf32>
    %cst_74 = arith.constant dense<0.000000e+00> : vector<32xf32>
    %176 = vector.multi_reduction <add>, %175, %cst_74 [1] : vector<32x128xf32> to vector<32xf32>
    %177 = vector.shape_cast %176 : vector<32xf32> to vector<32x1xf32>
    %cst_75 = arith.constant 3.125000e-02 : f32
    %178 = vector.broadcast %cst_75 : f32 to vector<32x1xf32>
    %179 = arith.mulf %177, %178 : vector<32x1xf32>
    %180 = vector.broadcast %179 : vector<32x1xf32> to vector<32x128xf32>
    %181 = arith.subf %171, %180 : vector<32x128xf32>
    %cst_76 = arith.constant 0.000000e+00 : f32
    %182 = vector.shape_cast %2 : vector<1x128xi1> to vector<1x128xi1>
    %183 = vector.broadcast %182 : vector<1x128xi1> to vector<32x128xi1>
    %184 = vector.broadcast %cst_76 : f32 to vector<32x128xf32>
    %185 = arith.select %183, %181, %184 : vector<32x128xi1>, vector<32x128xf32>
    %186 = arith.mulf %185, %185 : vector<32x128xf32>
    %cst_77 = arith.constant dense<0.000000e+00> : vector<32xf32>
    %187 = vector.multi_reduction <add>, %186, %cst_77 [1] : vector<32x128xf32> to vector<32xf32>
    %188 = vector.shape_cast %187 : vector<32xf32> to vector<32x1xf32>
    %cst_78 = arith.constant 3.125000e-02 : f32
    %189 = vector.broadcast %cst_78 : f32 to vector<32x1xf32>
    %190 = arith.mulf %188, %189 : vector<32x1xf32>
    %cst_79 = arith.constant 9.99999974E-6 : f32
    %191 = vector.broadcast %cst_79 : f32 to vector<32x1xf32>
    %192 = arith.addf %190, %191 : vector<32x1xf32>
    %193 = math.rsqrt %192 : vector<32x1xf32>
    %194 = vector.broadcast %193 : vector<32x1xf32> to vector<32x128xf32>
    %195 = arith.mulf %181, %194 : vector<32x128xf32>
    %196 = vector.broadcast %110 : vector<32x1xf32> to vector<32x128xf32>
    %197 = arith.mulf %195, %196 : vector<32x128xf32>
    %198 = vector.broadcast %111 : vector<32x1xf32> to vector<32x128xf32>
    %199 = arith.addf %197, %198 : vector<32x128xf32>
    %cst_80 = arith.constant 0.000000e+00 : f32
    %200 = vector.broadcast %cst_80 : f32 to vector<32x128xf32>
    %201 = arith.maximumf %199, %200 : vector<32x128xf32>
    %c0_81 = arith.constant 0 : index
    %c0_82 = arith.constant 0 : index
    %202 = vector.load %arg14[%c0_81, %c0_82] : memref<8x32xf32, #tpu.memory_space<vmem>>, vector<8x32xf32>
    %c0_83 = arith.constant 0 : index
    %c0_84 = arith.constant 0 : index
    %203 = vector.load %arg15[%c0_83, %c0_84] : memref<8x1xf32, #tpu.memory_space<vmem>>, vector<8x1xf32>
    %cst_85 = arith.constant dense<0.000000e+00> : vector<8x128xf32>
    %204 = tpu.matmul %202, %201, %cst_85 {dimension_numbers = #tpu.dot_dimension_numbers<[1], [0], [0], [1], [0, 0, 1, 1], [], []>} : vector<8x32xf32>, vector<32x128xf32>, vector<8x128xf32> -> vector<8x128xf32>
    %205 = vector.broadcast %203 : vector<8x1xf32> to vector<8x128xf32>
    %206 = arith.addf %204, %205 : vector<8x128xf32>
    %c0_86 = arith.constant 0 : index
    %c0_87 = arith.constant 0 : index
    %207 = vector.load %arg16[%c0_86, %c0_87] : memref<32x88xf32, #tpu.memory_space<vmem>>, vector<32x88xf32>
    %c0_88 = arith.constant 0 : index
    %c0_89 = arith.constant 0 : index
    %208 = vector.load %arg17[%c0_88, %c0_89] : memref<32x1xf32, #tpu.memory_space<vmem>>, vector<32x1xf32>
    %c0_90 = arith.constant 0 : index
    %c0_91 = arith.constant 0 : index
    %209 = vector.load %arg18[%c0_90, %c0_91] : memref<32x1xf32, #tpu.memory_space<vmem>>, vector<32x1xf32>
    %c0_92 = arith.constant 0 : index
    %c0_93 = arith.constant 0 : index
    %210 = vector.load %arg19[%c0_92, %c0_93] : memref<32x1xf32, #tpu.memory_space<vmem>>, vector<32x1xf32>
    %c1_i32_94 = arith.constant 1 : i32
    %211 = tpu.dynamic_rotate %201 by %c1_i32_94 dim 1 : vector<32x128xf32>, i32 -> vector<32x128xf32>
    %c1_i32_95 = arith.constant 1 : i32
    %212 = vector.broadcast %c1_i32_95 : i32 to vector<1x128xi32>
    %213 = arith.cmpi sge, %0, %212 : vector<1x128xi32>
    %214 = vector.shape_cast %213 : vector<1x128xi1> to vector<1x128xi1>
    %215 = vector.broadcast %214 : vector<1x128xi1> to vector<32x128xi1>
    %216 = arith.select %215, %211, %201 : vector<32x128xi1>, vector<32x128xf32>
    %217 = arith.maximumf %216, %201 : vector<32x128xf32>
    %c127_i32_96 = arith.constant 127 : i32
    %218 = tpu.dynamic_rotate %201 by %c127_i32_96 dim 1 : vector<32x128xf32>, i32 -> vector<32x128xf32>
    %c14_i32_97 = arith.constant 14 : i32
    %219 = vector.broadcast %c14_i32_97 : i32 to vector<1x128xi32>
    %220 = arith.cmpi sle, %0, %219 : vector<1x128xi32>
    %221 = vector.shape_cast %220 : vector<1x128xi1> to vector<1x128xi1>
    %222 = vector.broadcast %221 : vector<1x128xi1> to vector<32x128xi1>
    %223 = arith.select %222, %218, %201 : vector<32x128xi1>, vector<32x128xf32>
    %224 = arith.maximumf %217, %223 : vector<32x128xf32>
    %c3_i32_98 = arith.constant 3 : i32
    %225 = tpu.dynamic_rotate %206 by %c3_i32_98 dim 1 : vector<8x128xf32>, i32 -> vector<8x128xf32>
    %c3_i32_99 = arith.constant 3 : i32
    %226 = vector.broadcast %c3_i32_99 : i32 to vector<1x128xi32>
    %227 = arith.cmpi sge, %0, %226 : vector<1x128xi32>
    %cst_100 = arith.constant 0.000000e+00 : f32
    %228 = vector.shape_cast %227 : vector<1x128xi1> to vector<1x128xi1>
    %229 = vector.broadcast %228 : vector<1x128xi1> to vector<8x128xi1>
    %230 = vector.broadcast %cst_100 : f32 to vector<8x128xf32>
    %231 = arith.select %229, %225, %230 : vector<8x128xi1>, vector<8x128xf32>
    %c2_i32_101 = arith.constant 2 : i32
    %232 = tpu.dynamic_rotate %206 by %c2_i32_101 dim 1 : vector<8x128xf32>, i32 -> vector<8x128xf32>
    %c2_i32_102 = arith.constant 2 : i32
    %233 = vector.broadcast %c2_i32_102 : i32 to vector<1x128xi32>
    %234 = arith.cmpi sge, %0, %233 : vector<1x128xi32>
    %cst_103 = arith.constant 0.000000e+00 : f32
    %235 = vector.shape_cast %234 : vector<1x128xi1> to vector<1x128xi1>
    %236 = vector.broadcast %235 : vector<1x128xi1> to vector<8x128xi1>
    %237 = vector.broadcast %cst_103 : f32 to vector<8x128xf32>
    %238 = arith.select %236, %232, %237 : vector<8x128xi1>, vector<8x128xf32>
    %c1_i32_104 = arith.constant 1 : i32
    %239 = tpu.dynamic_rotate %206 by %c1_i32_104 dim 1 : vector<8x128xf32>, i32 -> vector<8x128xf32>
    %c1_i32_105 = arith.constant 1 : i32
    %240 = vector.broadcast %c1_i32_105 : i32 to vector<1x128xi32>
    %241 = arith.cmpi sge, %0, %240 : vector<1x128xi32>
    %cst_106 = arith.constant 0.000000e+00 : f32
    %242 = vector.shape_cast %241 : vector<1x128xi1> to vector<1x128xi1>
    %243 = vector.broadcast %242 : vector<1x128xi1> to vector<8x128xi1>
    %244 = vector.broadcast %cst_106 : f32 to vector<8x128xf32>
    %245 = arith.select %243, %239, %244 : vector<8x128xi1>, vector<8x128xf32>
    %c127_i32_107 = arith.constant 127 : i32
    %246 = tpu.dynamic_rotate %206 by %c127_i32_107 dim 1 : vector<8x128xf32>, i32 -> vector<8x128xf32>
    %c14_i32_108 = arith.constant 14 : i32
    %247 = vector.broadcast %c14_i32_108 : i32 to vector<1x128xi32>
    %248 = arith.cmpi sle, %0, %247 : vector<1x128xi32>
    %cst_109 = arith.constant 0.000000e+00 : f32
    %249 = vector.shape_cast %248 : vector<1x128xi1> to vector<1x128xi1>
    %250 = vector.broadcast %249 : vector<1x128xi1> to vector<8x128xi1>
    %251 = vector.broadcast %cst_109 : f32 to vector<8x128xf32>
    %252 = arith.select %250, %246, %251 : vector<8x128xi1>, vector<8x128xf32>
    %c126_i32_110 = arith.constant 126 : i32
    %253 = tpu.dynamic_rotate %206 by %c126_i32_110 dim 1 : vector<8x128xf32>, i32 -> vector<8x128xf32>
    %c13_i32_111 = arith.constant 13 : i32
    %254 = vector.broadcast %c13_i32_111 : i32 to vector<1x128xi32>
    %255 = arith.cmpi sle, %0, %254 : vector<1x128xi32>
    %cst_112 = arith.constant 0.000000e+00 : f32
    %256 = vector.shape_cast %255 : vector<1x128xi1> to vector<1x128xi1>
    %257 = vector.broadcast %256 : vector<1x128xi1> to vector<8x128xi1>
    %258 = vector.broadcast %cst_112 : f32 to vector<8x128xf32>
    %259 = arith.select %257, %253, %258 : vector<8x128xi1>, vector<8x128xf32>
    %c125_i32_113 = arith.constant 125 : i32
    %260 = tpu.dynamic_rotate %206 by %c125_i32_113 dim 1 : vector<8x128xf32>, i32 -> vector<8x128xf32>
    %c12_i32_114 = arith.constant 12 : i32
    %261 = vector.broadcast %c12_i32_114 : i32 to vector<1x128xi32>
    %262 = arith.cmpi sle, %0, %261 : vector<1x128xi32>
    %cst_115 = arith.constant 0.000000e+00 : f32
    %263 = vector.shape_cast %262 : vector<1x128xi1> to vector<1x128xi1>
    %264 = vector.broadcast %263 : vector<1x128xi1> to vector<8x128xi1>
    %265 = vector.broadcast %cst_115 : f32 to vector<8x128xf32>
    %266 = arith.select %264, %260, %265 : vector<8x128xi1>, vector<8x128xf32>
    %267 = tpu.concatenate %231, %238, %245, %206, %252, %259, %266, %224 in 0 : vector<8x128xf32>, vector<8x128xf32>, vector<8x128xf32>, vector<8x128xf32>, vector<8x128xf32>, vector<8x128xf32>, vector<8x128xf32>, vector<32x128xf32> -> vector<88x128xf32>
    %cst_116 = arith.constant dense<0.000000e+00> : vector<32x128xf32>
    %268 = tpu.matmul %207, %267, %cst_116 {dimension_numbers = #tpu.dot_dimension_numbers<[1], [0], [0], [1], [0, 0, 1, 1], [], []>} : vector<32x88xf32>, vector<88x128xf32>, vector<32x128xf32> -> vector<32x128xf32>
    %269 = vector.broadcast %208 : vector<32x1xf32> to vector<32x128xf32>
    %270 = arith.addf %268, %269 : vector<32x128xf32>
    %cst_117 = arith.constant 0.000000e+00 : f32
    %271 = vector.shape_cast %2 : vector<1x128xi1> to vector<1x128xi1>
    %272 = vector.broadcast %271 : vector<1x128xi1> to vector<32x128xi1>
    %273 = vector.broadcast %cst_117 : f32 to vector<32x128xf32>
    %274 = arith.select %272, %270, %273 : vector<32x128xi1>, vector<32x128xf32>
    %cst_118 = arith.constant dense<0.000000e+00> : vector<32xf32>
    %275 = vector.multi_reduction <add>, %274, %cst_118 [1] : vector<32x128xf32> to vector<32xf32>
    %276 = vector.shape_cast %275 : vector<32xf32> to vector<32x1xf32>
    %cst_119 = arith.constant 3.125000e-02 : f32
    %277 = vector.broadcast %cst_119 : f32 to vector<32x1xf32>
    %278 = arith.mulf %276, %277 : vector<32x1xf32>
    %279 = vector.broadcast %278 : vector<32x1xf32> to vector<32x128xf32>
    %280 = arith.subf %270, %279 : vector<32x128xf32>
    %cst_120 = arith.constant 0.000000e+00 : f32
    %281 = vector.shape_cast %2 : vector<1x128xi1> to vector<1x128xi1>
    %282 = vector.broadcast %281 : vector<1x128xi1> to vector<32x128xi1>
    %283 = vector.broadcast %cst_120 : f32 to vector<32x128xf32>
    %284 = arith.select %282, %280, %283 : vector<32x128xi1>, vector<32x128xf32>
    %285 = arith.mulf %284, %284 : vector<32x128xf32>
    %cst_121 = arith.constant dense<0.000000e+00> : vector<32xf32>
    %286 = vector.multi_reduction <add>, %285, %cst_121 [1] : vector<32x128xf32> to vector<32xf32>
    %287 = vector.shape_cast %286 : vector<32xf32> to vector<32x1xf32>
    %cst_122 = arith.constant 3.125000e-02 : f32
    %288 = vector.broadcast %cst_122 : f32 to vector<32x1xf32>
    %289 = arith.mulf %287, %288 : vector<32x1xf32>
    %cst_123 = arith.constant 9.99999974E-6 : f32
    %290 = vector.broadcast %cst_123 : f32 to vector<32x1xf32>
    %291 = arith.addf %289, %290 : vector<32x1xf32>
    %292 = math.rsqrt %291 : vector<32x1xf32>
    %293 = vector.broadcast %292 : vector<32x1xf32> to vector<32x128xf32>
    %294 = arith.mulf %280, %293 : vector<32x128xf32>
    %295 = vector.broadcast %209 : vector<32x1xf32> to vector<32x128xf32>
    %296 = arith.mulf %294, %295 : vector<32x128xf32>
    %297 = vector.broadcast %210 : vector<32x1xf32> to vector<32x128xf32>
    %298 = arith.addf %296, %297 : vector<32x128xf32>
    %cst_124 = arith.constant 0.000000e+00 : f32
    %299 = vector.broadcast %cst_124 : f32 to vector<32x128xf32>
    %300 = arith.maximumf %298, %299 : vector<32x128xf32>
    %c0_125 = arith.constant 0 : index
    %c0_126 = arith.constant 0 : index
    %301 = vector.load %arg20[%c0_125, %c0_126] : memref<32x4xf32, #tpu.memory_space<vmem>>, vector<32x4xf32>
    %c0_127 = arith.constant 0 : index
    %c0_128 = arith.constant 0 : index
    %302 = vector.load %arg21[%c0_127, %c0_128] : memref<32x1xf32, #tpu.memory_space<vmem>>, vector<32x1xf32>
    %cst_129 = arith.constant dense<0.000000e+00> : vector<32x128xf32>
    %303 = tpu.matmul %301, %3, %cst_129 {dimension_numbers = #tpu.dot_dimension_numbers<[1], [0], [0], [1], [0, 0, 1, 1], [], []>} : vector<32x4xf32>, vector<4x128xf32>, vector<32x128xf32> -> vector<32x128xf32>
    %304 = vector.broadcast %302 : vector<32x1xf32> to vector<32x128xf32>
    %305 = arith.addf %303, %304 : vector<32x128xf32>
    %c0_130 = arith.constant 0 : index
    %c0_131 = arith.constant 0 : index
    %306 = vector.load %arg22[%c0_130, %c0_131] : memref<32x1xf32, #tpu.memory_space<vmem>>, vector<32x1xf32>
    %c0_132 = arith.constant 0 : index
    %c0_133 = arith.constant 0 : index
    %307 = vector.load %arg23[%c0_132, %c0_133] : memref<32x1xf32, #tpu.memory_space<vmem>>, vector<32x1xf32>
    %cst_134 = arith.constant 0.000000e+00 : f32
    %308 = vector.shape_cast %2 : vector<1x128xi1> to vector<1x128xi1>
    %309 = vector.broadcast %308 : vector<1x128xi1> to vector<32x128xi1>
    %310 = vector.broadcast %cst_134 : f32 to vector<32x128xf32>
    %311 = arith.select %309, %305, %310 : vector<32x128xi1>, vector<32x128xf32>
    %cst_135 = arith.constant dense<0.000000e+00> : vector<32xf32>
    %312 = vector.multi_reduction <add>, %311, %cst_135 [1] : vector<32x128xf32> to vector<32xf32>
    %313 = vector.shape_cast %312 : vector<32xf32> to vector<32x1xf32>
    %cst_136 = arith.constant 3.125000e-02 : f32
    %314 = vector.broadcast %cst_136 : f32 to vector<32x1xf32>
    %315 = arith.mulf %313, %314 : vector<32x1xf32>
    %316 = vector.broadcast %315 : vector<32x1xf32> to vector<32x128xf32>
    %317 = arith.subf %305, %316 : vector<32x128xf32>
    %cst_137 = arith.constant 0.000000e+00 : f32
    %318 = vector.shape_cast %2 : vector<1x128xi1> to vector<1x128xi1>
    %319 = vector.broadcast %318 : vector<1x128xi1> to vector<32x128xi1>
    %320 = vector.broadcast %cst_137 : f32 to vector<32x128xf32>
    %321 = arith.select %319, %317, %320 : vector<32x128xi1>, vector<32x128xf32>
    %322 = arith.mulf %321, %321 : vector<32x128xf32>
    %cst_138 = arith.constant dense<0.000000e+00> : vector<32xf32>
    %323 = vector.multi_reduction <add>, %322, %cst_138 [1] : vector<32x128xf32> to vector<32xf32>
    %324 = vector.shape_cast %323 : vector<32xf32> to vector<32x1xf32>
    %cst_139 = arith.constant 3.125000e-02 : f32
    %325 = vector.broadcast %cst_139 : f32 to vector<32x1xf32>
    %326 = arith.mulf %324, %325 : vector<32x1xf32>
    %cst_140 = arith.constant 9.99999974E-6 : f32
    %327 = vector.broadcast %cst_140 : f32 to vector<32x1xf32>
    %328 = arith.addf %326, %327 : vector<32x1xf32>
    %329 = math.rsqrt %328 : vector<32x1xf32>
    %330 = vector.broadcast %329 : vector<32x1xf32> to vector<32x128xf32>
    %331 = arith.mulf %317, %330 : vector<32x128xf32>
    %332 = vector.broadcast %306 : vector<32x1xf32> to vector<32x128xf32>
    %333 = arith.mulf %331, %332 : vector<32x128xf32>
    %334 = arith.addf %300, %333 : vector<32x128xf32>
    %335 = vector.broadcast %307 : vector<32x1xf32> to vector<32x128xf32>
    %336 = arith.addf %334, %335 : vector<32x128xf32>
    %cst_141 = arith.constant 0.000000e+00 : f32
    %337 = vector.broadcast %cst_141 : f32 to vector<32x128xf32>
    %338 = arith.maximumf %336, %337 : vector<32x128xf32>
    %c0_142 = arith.constant 0 : index
    %c0_143 = arith.constant 0 : index
    %339 = vector.load %arg24[%c0_142, %c0_143] : memref<8x32xf32, #tpu.memory_space<vmem>>, vector<8x32xf32>
    %c0_144 = arith.constant 0 : index
    %c0_145 = arith.constant 0 : index
    %340 = vector.load %arg25[%c0_144, %c0_145] : memref<8x1xf32, #tpu.memory_space<vmem>>, vector<8x1xf32>
    %cst_146 = arith.constant dense<0.000000e+00> : vector<8x128xf32>
    %341 = tpu.matmul %339, %338, %cst_146 {dimension_numbers = #tpu.dot_dimension_numbers<[1], [0], [0], [1], [0, 0, 1, 1], [], []>} : vector<8x32xf32>, vector<32x128xf32>, vector<8x128xf32> -> vector<8x128xf32>
    %342 = vector.broadcast %340 : vector<8x1xf32> to vector<8x128xf32>
    %343 = arith.addf %341, %342 : vector<8x128xf32>
    %c0_147 = arith.constant 0 : index
    %c0_148 = arith.constant 0 : index
    %344 = vector.load %arg26[%c0_147, %c0_148] : memref<32x88xf32, #tpu.memory_space<vmem>>, vector<32x88xf32>
    %c0_149 = arith.constant 0 : index
    %c0_150 = arith.constant 0 : index
    %345 = vector.load %arg27[%c0_149, %c0_150] : memref<32x1xf32, #tpu.memory_space<vmem>>, vector<32x1xf32>
    %c0_151 = arith.constant 0 : index
    %c0_152 = arith.constant 0 : index
    %346 = vector.load %arg28[%c0_151, %c0_152] : memref<32x1xf32, #tpu.memory_space<vmem>>, vector<32x1xf32>
    %c0_153 = arith.constant 0 : index
    %c0_154 = arith.constant 0 : index
    %347 = vector.load %arg29[%c0_153, %c0_154] : memref<32x1xf32, #tpu.memory_space<vmem>>, vector<32x1xf32>
    %c1_i32_155 = arith.constant 1 : i32
    %348 = tpu.dynamic_rotate %338 by %c1_i32_155 dim 1 : vector<32x128xf32>, i32 -> vector<32x128xf32>
    %c1_i32_156 = arith.constant 1 : i32
    %349 = vector.broadcast %c1_i32_156 : i32 to vector<1x128xi32>
    %350 = arith.cmpi sge, %0, %349 : vector<1x128xi32>
    %351 = vector.shape_cast %350 : vector<1x128xi1> to vector<1x128xi1>
    %352 = vector.broadcast %351 : vector<1x128xi1> to vector<32x128xi1>
    %353 = arith.select %352, %348, %338 : vector<32x128xi1>, vector<32x128xf32>
    %354 = arith.maximumf %353, %338 : vector<32x128xf32>
    %c127_i32_157 = arith.constant 127 : i32
    %355 = tpu.dynamic_rotate %338 by %c127_i32_157 dim 1 : vector<32x128xf32>, i32 -> vector<32x128xf32>
    %c14_i32_158 = arith.constant 14 : i32
    %356 = vector.broadcast %c14_i32_158 : i32 to vector<1x128xi32>
    %357 = arith.cmpi sle, %0, %356 : vector<1x128xi32>
    %358 = vector.shape_cast %357 : vector<1x128xi1> to vector<1x128xi1>
    %359 = vector.broadcast %358 : vector<1x128xi1> to vector<32x128xi1>
    %360 = arith.select %359, %355, %338 : vector<32x128xi1>, vector<32x128xf32>
    %361 = arith.maximumf %354, %360 : vector<32x128xf32>
    %c3_i32_159 = arith.constant 3 : i32
    %362 = tpu.dynamic_rotate %343 by %c3_i32_159 dim 1 : vector<8x128xf32>, i32 -> vector<8x128xf32>
    %c3_i32_160 = arith.constant 3 : i32
    %363 = vector.broadcast %c3_i32_160 : i32 to vector<1x128xi32>
    %364 = arith.cmpi sge, %0, %363 : vector<1x128xi32>
    %cst_161 = arith.constant 0.000000e+00 : f32
    %365 = vector.shape_cast %364 : vector<1x128xi1> to vector<1x128xi1>
    %366 = vector.broadcast %365 : vector<1x128xi1> to vector<8x128xi1>
    %367 = vector.broadcast %cst_161 : f32 to vector<8x128xf32>
    %368 = arith.select %366, %362, %367 : vector<8x128xi1>, vector<8x128xf32>
    %c2_i32_162 = arith.constant 2 : i32
    %369 = tpu.dynamic_rotate %343 by %c2_i32_162 dim 1 : vector<8x128xf32>, i32 -> vector<8x128xf32>
    %c2_i32_163 = arith.constant 2 : i32
    %370 = vector.broadcast %c2_i32_163 : i32 to vector<1x128xi32>
    %371 = arith.cmpi sge, %0, %370 : vector<1x128xi32>
    %cst_164 = arith.constant 0.000000e+00 : f32
    %372 = vector.shape_cast %371 : vector<1x128xi1> to vector<1x128xi1>
    %373 = vector.broadcast %372 : vector<1x128xi1> to vector<8x128xi1>
    %374 = vector.broadcast %cst_164 : f32 to vector<8x128xf32>
    %375 = arith.select %373, %369, %374 : vector<8x128xi1>, vector<8x128xf32>
    %c1_i32_165 = arith.constant 1 : i32
    %376 = tpu.dynamic_rotate %343 by %c1_i32_165 dim 1 : vector<8x128xf32>, i32 -> vector<8x128xf32>
    %c1_i32_166 = arith.constant 1 : i32
    %377 = vector.broadcast %c1_i32_166 : i32 to vector<1x128xi32>
    %378 = arith.cmpi sge, %0, %377 : vector<1x128xi32>
    %cst_167 = arith.constant 0.000000e+00 : f32
    %379 = vector.shape_cast %378 : vector<1x128xi1> to vector<1x128xi1>
    %380 = vector.broadcast %379 : vector<1x128xi1> to vector<8x128xi1>
    %381 = vector.broadcast %cst_167 : f32 to vector<8x128xf32>
    %382 = arith.select %380, %376, %381 : vector<8x128xi1>, vector<8x128xf32>
    %c127_i32_168 = arith.constant 127 : i32
    %383 = tpu.dynamic_rotate %343 by %c127_i32_168 dim 1 : vector<8x128xf32>, i32 -> vector<8x128xf32>
    %c14_i32_169 = arith.constant 14 : i32
    %384 = vector.broadcast %c14_i32_169 : i32 to vector<1x128xi32>
    %385 = arith.cmpi sle, %0, %384 : vector<1x128xi32>
    %cst_170 = arith.constant 0.000000e+00 : f32
    %386 = vector.shape_cast %385 : vector<1x128xi1> to vector<1x128xi1>
    %387 = vector.broadcast %386 : vector<1x128xi1> to vector<8x128xi1>
    %388 = vector.broadcast %cst_170 : f32 to vector<8x128xf32>
    %389 = arith.select %387, %383, %388 : vector<8x128xi1>, vector<8x128xf32>
    %c126_i32_171 = arith.constant 126 : i32
    %390 = tpu.dynamic_rotate %343 by %c126_i32_171 dim 1 : vector<8x128xf32>, i32 -> vector<8x128xf32>
    %c13_i32_172 = arith.constant 13 : i32
    %391 = vector.broadcast %c13_i32_172 : i32 to vector<1x128xi32>
    %392 = arith.cmpi sle, %0, %391 : vector<1x128xi32>
    %cst_173 = arith.constant 0.000000e+00 : f32
    %393 = vector.shape_cast %392 : vector<1x128xi1> to vector<1x128xi1>
    %394 = vector.broadcast %393 : vector<1x128xi1> to vector<8x128xi1>
    %395 = vector.broadcast %cst_173 : f32 to vector<8x128xf32>
    %396 = arith.select %394, %390, %395 : vector<8x128xi1>, vector<8x128xf32>
    %c125_i32_174 = arith.constant 125 : i32
    %397 = tpu.dynamic_rotate %343 by %c125_i32_174 dim 1 : vector<8x128xf32>, i32 -> vector<8x128xf32>
    %c12_i32_175 = arith.constant 12 : i32
    %398 = vector.broadcast %c12_i32_175 : i32 to vector<1x128xi32>
    %399 = arith.cmpi sle, %0, %398 : vector<1x128xi32>
    %cst_176 = arith.constant 0.000000e+00 : f32
    %400 = vector.shape_cast %399 : vector<1x128xi1> to vector<1x128xi1>
    %401 = vector.broadcast %400 : vector<1x128xi1> to vector<8x128xi1>
    %402 = vector.broadcast %cst_176 : f32 to vector<8x128xf32>
    %403 = arith.select %401, %397, %402 : vector<8x128xi1>, vector<8x128xf32>
    %404 = tpu.concatenate %368, %375, %382, %343, %389, %396, %403, %361 in 0 : vector<8x128xf32>, vector<8x128xf32>, vector<8x128xf32>, vector<8x128xf32>, vector<8x128xf32>, vector<8x128xf32>, vector<8x128xf32>, vector<32x128xf32> -> vector<88x128xf32>
    %cst_177 = arith.constant dense<0.000000e+00> : vector<32x128xf32>
    %405 = tpu.matmul %344, %404, %cst_177 {dimension_numbers = #tpu.dot_dimension_numbers<[1], [0], [0], [1], [0, 0, 1, 1], [], []>} : vector<32x88xf32>, vector<88x128xf32>, vector<32x128xf32> -> vector<32x128xf32>
    %406 = vector.broadcast %345 : vector<32x1xf32> to vector<32x128xf32>
    %407 = arith.addf %405, %406 : vector<32x128xf32>
    %cst_178 = arith.constant 0.000000e+00 : f32
    %408 = vector.shape_cast %2 : vector<1x128xi1> to vector<1x128xi1>
    %409 = vector.broadcast %408 : vector<1x128xi1> to vector<32x128xi1>
    %410 = vector.broadcast %cst_178 : f32 to vector<32x128xf32>
    %411 = arith.select %409, %407, %410 : vector<32x128xi1>, vector<32x128xf32>
    %cst_179 = arith.constant dense<0.000000e+00> : vector<32xf32>
    %412 = vector.multi_reduction <add>, %411, %cst_179 [1] : vector<32x128xf32> to vector<32xf32>
    %413 = vector.shape_cast %412 : vector<32xf32> to vector<32x1xf32>
    %cst_180 = arith.constant 3.125000e-02 : f32
    %414 = vector.broadcast %cst_180 : f32 to vector<32x1xf32>
    %415 = arith.mulf %413, %414 : vector<32x1xf32>
    %416 = vector.broadcast %415 : vector<32x1xf32> to vector<32x128xf32>
    %417 = arith.subf %407, %416 : vector<32x128xf32>
    %cst_181 = arith.constant 0.000000e+00 : f32
    %418 = vector.shape_cast %2 : vector<1x128xi1> to vector<1x128xi1>
    %419 = vector.broadcast %418 : vector<1x128xi1> to vector<32x128xi1>
    %420 = vector.broadcast %cst_181 : f32 to vector<32x128xf32>
    %421 = arith.select %419, %417, %420 : vector<32x128xi1>, vector<32x128xf32>
    %422 = arith.mulf %421, %421 : vector<32x128xf32>
    %cst_182 = arith.constant dense<0.000000e+00> : vector<32xf32>
    %423 = vector.multi_reduction <add>, %422, %cst_182 [1] : vector<32x128xf32> to vector<32xf32>
    %424 = vector.shape_cast %423 : vector<32xf32> to vector<32x1xf32>
    %cst_183 = arith.constant 3.125000e-02 : f32
    %425 = vector.broadcast %cst_183 : f32 to vector<32x1xf32>
    %426 = arith.mulf %424, %425 : vector<32x1xf32>
    %cst_184 = arith.constant 9.99999974E-6 : f32
    %427 = vector.broadcast %cst_184 : f32 to vector<32x1xf32>
    %428 = arith.addf %426, %427 : vector<32x1xf32>
    %429 = math.rsqrt %428 : vector<32x1xf32>
    %430 = vector.broadcast %429 : vector<32x1xf32> to vector<32x128xf32>
    %431 = arith.mulf %417, %430 : vector<32x128xf32>
    %432 = vector.broadcast %346 : vector<32x1xf32> to vector<32x128xf32>
    %433 = arith.mulf %431, %432 : vector<32x128xf32>
    %434 = vector.broadcast %347 : vector<32x1xf32> to vector<32x128xf32>
    %435 = arith.addf %433, %434 : vector<32x128xf32>
    %cst_185 = arith.constant 0.000000e+00 : f32
    %436 = vector.broadcast %cst_185 : f32 to vector<32x128xf32>
    %437 = arith.maximumf %435, %436 : vector<32x128xf32>
    %c0_186 = arith.constant 0 : index
    %c0_187 = arith.constant 0 : index
    %438 = vector.load %arg30[%c0_186, %c0_187] : memref<8x32xf32, #tpu.memory_space<vmem>>, vector<8x32xf32>
    %c0_188 = arith.constant 0 : index
    %c0_189 = arith.constant 0 : index
    %439 = vector.load %arg31[%c0_188, %c0_189] : memref<8x1xf32, #tpu.memory_space<vmem>>, vector<8x1xf32>
    %cst_190 = arith.constant dense<0.000000e+00> : vector<8x128xf32>
    %440 = tpu.matmul %438, %437, %cst_190 {dimension_numbers = #tpu.dot_dimension_numbers<[1], [0], [0], [1], [0, 0, 1, 1], [], []>} : vector<8x32xf32>, vector<32x128xf32>, vector<8x128xf32> -> vector<8x128xf32>
    %441 = vector.broadcast %439 : vector<8x1xf32> to vector<8x128xf32>
    %442 = arith.addf %440, %441 : vector<8x128xf32>
    %c0_191 = arith.constant 0 : index
    %c0_192 = arith.constant 0 : index
    %443 = vector.load %arg32[%c0_191, %c0_192] : memref<32x88xf32, #tpu.memory_space<vmem>>, vector<32x88xf32>
    %c0_193 = arith.constant 0 : index
    %c0_194 = arith.constant 0 : index
    %444 = vector.load %arg33[%c0_193, %c0_194] : memref<32x1xf32, #tpu.memory_space<vmem>>, vector<32x1xf32>
    %c0_195 = arith.constant 0 : index
    %c0_196 = arith.constant 0 : index
    %445 = vector.load %arg34[%c0_195, %c0_196] : memref<32x1xf32, #tpu.memory_space<vmem>>, vector<32x1xf32>
    %c0_197 = arith.constant 0 : index
    %c0_198 = arith.constant 0 : index
    %446 = vector.load %arg35[%c0_197, %c0_198] : memref<32x1xf32, #tpu.memory_space<vmem>>, vector<32x1xf32>
    %c1_i32_199 = arith.constant 1 : i32
    %447 = tpu.dynamic_rotate %437 by %c1_i32_199 dim 1 : vector<32x128xf32>, i32 -> vector<32x128xf32>
    %c1_i32_200 = arith.constant 1 : i32
    %448 = vector.broadcast %c1_i32_200 : i32 to vector<1x128xi32>
    %449 = arith.cmpi sge, %0, %448 : vector<1x128xi32>
    %450 = vector.shape_cast %449 : vector<1x128xi1> to vector<1x128xi1>
    %451 = vector.broadcast %450 : vector<1x128xi1> to vector<32x128xi1>
    %452 = arith.select %451, %447, %437 : vector<32x128xi1>, vector<32x128xf32>
    %453 = arith.maximumf %452, %437 : vector<32x128xf32>
    %c127_i32_201 = arith.constant 127 : i32
    %454 = tpu.dynamic_rotate %437 by %c127_i32_201 dim 1 : vector<32x128xf32>, i32 -> vector<32x128xf32>
    %c14_i32_202 = arith.constant 14 : i32
    %455 = vector.broadcast %c14_i32_202 : i32 to vector<1x128xi32>
    %456 = arith.cmpi sle, %0, %455 : vector<1x128xi32>
    %457 = vector.shape_cast %456 : vector<1x128xi1> to vector<1x128xi1>
    %458 = vector.broadcast %457 : vector<1x128xi1> to vector<32x128xi1>
    %459 = arith.select %458, %454, %437 : vector<32x128xi1>, vector<32x128xf32>
    %460 = arith.maximumf %453, %459 : vector<32x128xf32>
    %c3_i32_203 = arith.constant 3 : i32
    %461 = tpu.dynamic_rotate %442 by %c3_i32_203 dim 1 : vector<8x128xf32>, i32 -> vector<8x128xf32>
    %c3_i32_204 = arith.constant 3 : i32
    %462 = vector.broadcast %c3_i32_204 : i32 to vector<1x128xi32>
    %463 = arith.cmpi sge, %0, %462 : vector<1x128xi32>
    %cst_205 = arith.constant 0.000000e+00 : f32
    %464 = vector.shape_cast %463 : vector<1x128xi1> to vector<1x128xi1>
    %465 = vector.broadcast %464 : vector<1x128xi1> to vector<8x128xi1>
    %466 = vector.broadcast %cst_205 : f32 to vector<8x128xf32>
    %467 = arith.select %465, %461, %466 : vector<8x128xi1>, vector<8x128xf32>
    %c2_i32_206 = arith.constant 2 : i32
    %468 = tpu.dynamic_rotate %442 by %c2_i32_206 dim 1 : vector<8x128xf32>, i32 -> vector<8x128xf32>
    %c2_i32_207 = arith.constant 2 : i32
    %469 = vector.broadcast %c2_i32_207 : i32 to vector<1x128xi32>
    %470 = arith.cmpi sge, %0, %469 : vector<1x128xi32>
    %cst_208 = arith.constant 0.000000e+00 : f32
    %471 = vector.shape_cast %470 : vector<1x128xi1> to vector<1x128xi1>
    %472 = vector.broadcast %471 : vector<1x128xi1> to vector<8x128xi1>
    %473 = vector.broadcast %cst_208 : f32 to vector<8x128xf32>
    %474 = arith.select %472, %468, %473 : vector<8x128xi1>, vector<8x128xf32>
    %c1_i32_209 = arith.constant 1 : i32
    %475 = tpu.dynamic_rotate %442 by %c1_i32_209 dim 1 : vector<8x128xf32>, i32 -> vector<8x128xf32>
    %c1_i32_210 = arith.constant 1 : i32
    %476 = vector.broadcast %c1_i32_210 : i32 to vector<1x128xi32>
    %477 = arith.cmpi sge, %0, %476 : vector<1x128xi32>
    %cst_211 = arith.constant 0.000000e+00 : f32
    %478 = vector.shape_cast %477 : vector<1x128xi1> to vector<1x128xi1>
    %479 = vector.broadcast %478 : vector<1x128xi1> to vector<8x128xi1>
    %480 = vector.broadcast %cst_211 : f32 to vector<8x128xf32>
    %481 = arith.select %479, %475, %480 : vector<8x128xi1>, vector<8x128xf32>
    %c127_i32_212 = arith.constant 127 : i32
    %482 = tpu.dynamic_rotate %442 by %c127_i32_212 dim 1 : vector<8x128xf32>, i32 -> vector<8x128xf32>
    %c14_i32_213 = arith.constant 14 : i32
    %483 = vector.broadcast %c14_i32_213 : i32 to vector<1x128xi32>
    %484 = arith.cmpi sle, %0, %483 : vector<1x128xi32>
    %cst_214 = arith.constant 0.000000e+00 : f32
    %485 = vector.shape_cast %484 : vector<1x128xi1> to vector<1x128xi1>
    %486 = vector.broadcast %485 : vector<1x128xi1> to vector<8x128xi1>
    %487 = vector.broadcast %cst_214 : f32 to vector<8x128xf32>
    %488 = arith.select %486, %482, %487 : vector<8x128xi1>, vector<8x128xf32>
    %c126_i32_215 = arith.constant 126 : i32
    %489 = tpu.dynamic_rotate %442 by %c126_i32_215 dim 1 : vector<8x128xf32>, i32 -> vector<8x128xf32>
    %c13_i32_216 = arith.constant 13 : i32
    %490 = vector.broadcast %c13_i32_216 : i32 to vector<1x128xi32>
    %491 = arith.cmpi sle, %0, %490 : vector<1x128xi32>
    %cst_217 = arith.constant 0.000000e+00 : f32
    %492 = vector.shape_cast %491 : vector<1x128xi1> to vector<1x128xi1>
    %493 = vector.broadcast %492 : vector<1x128xi1> to vector<8x128xi1>
    %494 = vector.broadcast %cst_217 : f32 to vector<8x128xf32>
    %495 = arith.select %493, %489, %494 : vector<8x128xi1>, vector<8x128xf32>
    %c125_i32_218 = arith.constant 125 : i32
    %496 = tpu.dynamic_rotate %442 by %c125_i32_218 dim 1 : vector<8x128xf32>, i32 -> vector<8x128xf32>
    %c12_i32_219 = arith.constant 12 : i32
    %497 = vector.broadcast %c12_i32_219 : i32 to vector<1x128xi32>
    %498 = arith.cmpi sle, %0, %497 : vector<1x128xi32>
    %cst_220 = arith.constant 0.000000e+00 : f32
    %499 = vector.shape_cast %498 : vector<1x128xi1> to vector<1x128xi1>
    %500 = vector.broadcast %499 : vector<1x128xi1> to vector<8x128xi1>
    %501 = vector.broadcast %cst_220 : f32 to vector<8x128xf32>
    %502 = arith.select %500, %496, %501 : vector<8x128xi1>, vector<8x128xf32>
    %503 = tpu.concatenate %467, %474, %481, %442, %488, %495, %502, %460 in 0 : vector<8x128xf32>, vector<8x128xf32>, vector<8x128xf32>, vector<8x128xf32>, vector<8x128xf32>, vector<8x128xf32>, vector<8x128xf32>, vector<32x128xf32> -> vector<88x128xf32>
    %cst_221 = arith.constant dense<0.000000e+00> : vector<32x128xf32>
    %504 = tpu.matmul %443, %503, %cst_221 {dimension_numbers = #tpu.dot_dimension_numbers<[1], [0], [0], [1], [0, 0, 1, 1], [], []>} : vector<32x88xf32>, vector<88x128xf32>, vector<32x128xf32> -> vector<32x128xf32>
    %505 = vector.broadcast %444 : vector<32x1xf32> to vector<32x128xf32>
    %506 = arith.addf %504, %505 : vector<32x128xf32>
    %cst_222 = arith.constant 0.000000e+00 : f32
    %507 = vector.shape_cast %2 : vector<1x128xi1> to vector<1x128xi1>
    %508 = vector.broadcast %507 : vector<1x128xi1> to vector<32x128xi1>
    %509 = vector.broadcast %cst_222 : f32 to vector<32x128xf32>
    %510 = arith.select %508, %506, %509 : vector<32x128xi1>, vector<32x128xf32>
    %cst_223 = arith.constant dense<0.000000e+00> : vector<32xf32>
    %511 = vector.multi_reduction <add>, %510, %cst_223 [1] : vector<32x128xf32> to vector<32xf32>
    %512 = vector.shape_cast %511 : vector<32xf32> to vector<32x1xf32>
    %cst_224 = arith.constant 3.125000e-02 : f32
    %513 = vector.broadcast %cst_224 : f32 to vector<32x1xf32>
    %514 = arith.mulf %512, %513 : vector<32x1xf32>
    %515 = vector.broadcast %514 : vector<32x1xf32> to vector<32x128xf32>
    %516 = arith.subf %506, %515 : vector<32x128xf32>
    %cst_225 = arith.constant 0.000000e+00 : f32
    %517 = vector.shape_cast %2 : vector<1x128xi1> to vector<1x128xi1>
    %518 = vector.broadcast %517 : vector<1x128xi1> to vector<32x128xi1>
    %519 = vector.broadcast %cst_225 : f32 to vector<32x128xf32>
    %520 = arith.select %518, %516, %519 : vector<32x128xi1>, vector<32x128xf32>
    %521 = arith.mulf %520, %520 : vector<32x128xf32>
    %cst_226 = arith.constant dense<0.000000e+00> : vector<32xf32>
    %522 = vector.multi_reduction <add>, %521, %cst_226 [1] : vector<32x128xf32> to vector<32xf32>
    %523 = vector.shape_cast %522 : vector<32xf32> to vector<32x1xf32>
    %cst_227 = arith.constant 3.125000e-02 : f32
    %524 = vector.broadcast %cst_227 : f32 to vector<32x1xf32>
    %525 = arith.mulf %523, %524 : vector<32x1xf32>
    %cst_228 = arith.constant 9.99999974E-6 : f32
    %526 = vector.broadcast %cst_228 : f32 to vector<32x1xf32>
    %527 = arith.addf %525, %526 : vector<32x1xf32>
    %528 = math.rsqrt %527 : vector<32x1xf32>
    %529 = vector.broadcast %528 : vector<32x1xf32> to vector<32x128xf32>
    %530 = arith.mulf %516, %529 : vector<32x128xf32>
    %531 = vector.broadcast %445 : vector<32x1xf32> to vector<32x128xf32>
    %532 = arith.mulf %530, %531 : vector<32x128xf32>
    %533 = vector.broadcast %446 : vector<32x1xf32> to vector<32x128xf32>
    %534 = arith.addf %532, %533 : vector<32x128xf32>
    %cst_229 = arith.constant 0.000000e+00 : f32
    %535 = vector.broadcast %cst_229 : f32 to vector<32x128xf32>
    %536 = arith.maximumf %534, %535 : vector<32x128xf32>
    %c0_230 = arith.constant 0 : index
    %c0_231 = arith.constant 0 : index
    %537 = vector.load %arg36[%c0_230, %c0_231] : memref<8x32xf32, #tpu.memory_space<vmem>>, vector<8x32xf32>
    %c0_232 = arith.constant 0 : index
    %c0_233 = arith.constant 0 : index
    %538 = vector.load %arg37[%c0_232, %c0_233] : memref<8x1xf32, #tpu.memory_space<vmem>>, vector<8x1xf32>
    %cst_234 = arith.constant dense<0.000000e+00> : vector<8x128xf32>
    %539 = tpu.matmul %537, %536, %cst_234 {dimension_numbers = #tpu.dot_dimension_numbers<[1], [0], [0], [1], [0, 0, 1, 1], [], []>} : vector<8x32xf32>, vector<32x128xf32>, vector<8x128xf32> -> vector<8x128xf32>
    %540 = vector.broadcast %538 : vector<8x1xf32> to vector<8x128xf32>
    %541 = arith.addf %539, %540 : vector<8x128xf32>
    %c0_235 = arith.constant 0 : index
    %c0_236 = arith.constant 0 : index
    %542 = vector.load %arg38[%c0_235, %c0_236] : memref<32x88xf32, #tpu.memory_space<vmem>>, vector<32x88xf32>
    %c0_237 = arith.constant 0 : index
    %c0_238 = arith.constant 0 : index
    %543 = vector.load %arg39[%c0_237, %c0_238] : memref<32x1xf32, #tpu.memory_space<vmem>>, vector<32x1xf32>
    %c0_239 = arith.constant 0 : index
    %c0_240 = arith.constant 0 : index
    %544 = vector.load %arg40[%c0_239, %c0_240] : memref<32x1xf32, #tpu.memory_space<vmem>>, vector<32x1xf32>
    %c0_241 = arith.constant 0 : index
    %c0_242 = arith.constant 0 : index
    %545 = vector.load %arg41[%c0_241, %c0_242] : memref<32x1xf32, #tpu.memory_space<vmem>>, vector<32x1xf32>
    %c1_i32_243 = arith.constant 1 : i32
    %546 = tpu.dynamic_rotate %536 by %c1_i32_243 dim 1 : vector<32x128xf32>, i32 -> vector<32x128xf32>
    %c1_i32_244 = arith.constant 1 : i32
    %547 = vector.broadcast %c1_i32_244 : i32 to vector<1x128xi32>
    %548 = arith.cmpi sge, %0, %547 : vector<1x128xi32>
    %549 = vector.shape_cast %548 : vector<1x128xi1> to vector<1x128xi1>
    %550 = vector.broadcast %549 : vector<1x128xi1> to vector<32x128xi1>
    %551 = arith.select %550, %546, %536 : vector<32x128xi1>, vector<32x128xf32>
    %552 = arith.maximumf %551, %536 : vector<32x128xf32>
    %c127_i32_245 = arith.constant 127 : i32
    %553 = tpu.dynamic_rotate %536 by %c127_i32_245 dim 1 : vector<32x128xf32>, i32 -> vector<32x128xf32>
    %c14_i32_246 = arith.constant 14 : i32
    %554 = vector.broadcast %c14_i32_246 : i32 to vector<1x128xi32>
    %555 = arith.cmpi sle, %0, %554 : vector<1x128xi32>
    %556 = vector.shape_cast %555 : vector<1x128xi1> to vector<1x128xi1>
    %557 = vector.broadcast %556 : vector<1x128xi1> to vector<32x128xi1>
    %558 = arith.select %557, %553, %536 : vector<32x128xi1>, vector<32x128xf32>
    %559 = arith.maximumf %552, %558 : vector<32x128xf32>
    %c3_i32_247 = arith.constant 3 : i32
    %560 = tpu.dynamic_rotate %541 by %c3_i32_247 dim 1 : vector<8x128xf32>, i32 -> vector<8x128xf32>
    %c3_i32_248 = arith.constant 3 : i32
    %561 = vector.broadcast %c3_i32_248 : i32 to vector<1x128xi32>
    %562 = arith.cmpi sge, %0, %561 : vector<1x128xi32>
    %cst_249 = arith.constant 0.000000e+00 : f32
    %563 = vector.shape_cast %562 : vector<1x128xi1> to vector<1x128xi1>
    %564 = vector.broadcast %563 : vector<1x128xi1> to vector<8x128xi1>
    %565 = vector.broadcast %cst_249 : f32 to vector<8x128xf32>
    %566 = arith.select %564, %560, %565 : vector<8x128xi1>, vector<8x128xf32>
    %c2_i32_250 = arith.constant 2 : i32
    %567 = tpu.dynamic_rotate %541 by %c2_i32_250 dim 1 : vector<8x128xf32>, i32 -> vector<8x128xf32>
    %c2_i32_251 = arith.constant 2 : i32
    %568 = vector.broadcast %c2_i32_251 : i32 to vector<1x128xi32>
    %569 = arith.cmpi sge, %0, %568 : vector<1x128xi32>
    %cst_252 = arith.constant 0.000000e+00 : f32
    %570 = vector.shape_cast %569 : vector<1x128xi1> to vector<1x128xi1>
    %571 = vector.broadcast %570 : vector<1x128xi1> to vector<8x128xi1>
    %572 = vector.broadcast %cst_252 : f32 to vector<8x128xf32>
    %573 = arith.select %571, %567, %572 : vector<8x128xi1>, vector<8x128xf32>
    %c1_i32_253 = arith.constant 1 : i32
    %574 = tpu.dynamic_rotate %541 by %c1_i32_253 dim 1 : vector<8x128xf32>, i32 -> vector<8x128xf32>
    %c1_i32_254 = arith.constant 1 : i32
    %575 = vector.broadcast %c1_i32_254 : i32 to vector<1x128xi32>
    %576 = arith.cmpi sge, %0, %575 : vector<1x128xi32>
    %cst_255 = arith.constant 0.000000e+00 : f32
    %577 = vector.shape_cast %576 : vector<1x128xi1> to vector<1x128xi1>
    %578 = vector.broadcast %577 : vector<1x128xi1> to vector<8x128xi1>
    %579 = vector.broadcast %cst_255 : f32 to vector<8x128xf32>
    %580 = arith.select %578, %574, %579 : vector<8x128xi1>, vector<8x128xf32>
    %c127_i32_256 = arith.constant 127 : i32
    %581 = tpu.dynamic_rotate %541 by %c127_i32_256 dim 1 : vector<8x128xf32>, i32 -> vector<8x128xf32>
    %c14_i32_257 = arith.constant 14 : i32
    %582 = vector.broadcast %c14_i32_257 : i32 to vector<1x128xi32>
    %583 = arith.cmpi sle, %0, %582 : vector<1x128xi32>
    %cst_258 = arith.constant 0.000000e+00 : f32
    %584 = vector.shape_cast %583 : vector<1x128xi1> to vector<1x128xi1>
    %585 = vector.broadcast %584 : vector<1x128xi1> to vector<8x128xi1>
    %586 = vector.broadcast %cst_258 : f32 to vector<8x128xf32>
    %587 = arith.select %585, %581, %586 : vector<8x128xi1>, vector<8x128xf32>
    %c126_i32_259 = arith.constant 126 : i32
    %588 = tpu.dynamic_rotate %541 by %c126_i32_259 dim 1 : vector<8x128xf32>, i32 -> vector<8x128xf32>
    %c13_i32_260 = arith.constant 13 : i32
    %589 = vector.broadcast %c13_i32_260 : i32 to vector<1x128xi32>
    %590 = arith.cmpi sle, %0, %589 : vector<1x128xi32>
    %cst_261 = arith.constant 0.000000e+00 : f32
    %591 = vector.shape_cast %590 : vector<1x128xi1> to vector<1x128xi1>
    %592 = vector.broadcast %591 : vector<1x128xi1> to vector<8x128xi1>
    %593 = vector.broadcast %cst_261 : f32 to vector<8x128xf32>
    %594 = arith.select %592, %588, %593 : vector<8x128xi1>, vector<8x128xf32>
    %c125_i32_262 = arith.constant 125 : i32
    %595 = tpu.dynamic_rotate %541 by %c125_i32_262 dim 1 : vector<8x128xf32>, i32 -> vector<8x128xf32>
    %c12_i32_263 = arith.constant 12 : i32
    %596 = vector.broadcast %c12_i32_263 : i32 to vector<1x128xi32>
    %597 = arith.cmpi sle, %0, %596 : vector<1x128xi32>
    %cst_264 = arith.constant 0.000000e+00 : f32
    %598 = vector.shape_cast %597 : vector<1x128xi1> to vector<1x128xi1>
    %599 = vector.broadcast %598 : vector<1x128xi1> to vector<8x128xi1>
    %600 = vector.broadcast %cst_264 : f32 to vector<8x128xf32>
    %601 = arith.select %599, %595, %600 : vector<8x128xi1>, vector<8x128xf32>
    %602 = tpu.concatenate %566, %573, %580, %541, %587, %594, %601, %559 in 0 : vector<8x128xf32>, vector<8x128xf32>, vector<8x128xf32>, vector<8x128xf32>, vector<8x128xf32>, vector<8x128xf32>, vector<8x128xf32>, vector<32x128xf32> -> vector<88x128xf32>
    %cst_265 = arith.constant dense<0.000000e+00> : vector<32x128xf32>
    %603 = tpu.matmul %542, %602, %cst_265 {dimension_numbers = #tpu.dot_dimension_numbers<[1], [0], [0], [1], [0, 0, 1, 1], [], []>} : vector<32x88xf32>, vector<88x128xf32>, vector<32x128xf32> -> vector<32x128xf32>
    %604 = vector.broadcast %543 : vector<32x1xf32> to vector<32x128xf32>
    %605 = arith.addf %603, %604 : vector<32x128xf32>
    %cst_266 = arith.constant 0.000000e+00 : f32
    %606 = vector.shape_cast %2 : vector<1x128xi1> to vector<1x128xi1>
    %607 = vector.broadcast %606 : vector<1x128xi1> to vector<32x128xi1>
    %608 = vector.broadcast %cst_266 : f32 to vector<32x128xf32>
    %609 = arith.select %607, %605, %608 : vector<32x128xi1>, vector<32x128xf32>
    %cst_267 = arith.constant dense<0.000000e+00> : vector<32xf32>
    %610 = vector.multi_reduction <add>, %609, %cst_267 [1] : vector<32x128xf32> to vector<32xf32>
    %611 = vector.shape_cast %610 : vector<32xf32> to vector<32x1xf32>
    %cst_268 = arith.constant 3.125000e-02 : f32
    %612 = vector.broadcast %cst_268 : f32 to vector<32x1xf32>
    %613 = arith.mulf %611, %612 : vector<32x1xf32>
    %614 = vector.broadcast %613 : vector<32x1xf32> to vector<32x128xf32>
    %615 = arith.subf %605, %614 : vector<32x128xf32>
    %cst_269 = arith.constant 0.000000e+00 : f32
    %616 = vector.shape_cast %2 : vector<1x128xi1> to vector<1x128xi1>
    %617 = vector.broadcast %616 : vector<1x128xi1> to vector<32x128xi1>
    %618 = vector.broadcast %cst_269 : f32 to vector<32x128xf32>
    %619 = arith.select %617, %615, %618 : vector<32x128xi1>, vector<32x128xf32>
    %620 = arith.mulf %619, %619 : vector<32x128xf32>
    %cst_270 = arith.constant dense<0.000000e+00> : vector<32xf32>
    %621 = vector.multi_reduction <add>, %620, %cst_270 [1] : vector<32x128xf32> to vector<32xf32>
    %622 = vector.shape_cast %621 : vector<32xf32> to vector<32x1xf32>
    %cst_271 = arith.constant 3.125000e-02 : f32
    %623 = vector.broadcast %cst_271 : f32 to vector<32x1xf32>
    %624 = arith.mulf %622, %623 : vector<32x1xf32>
    %cst_272 = arith.constant 9.99999974E-6 : f32
    %625 = vector.broadcast %cst_272 : f32 to vector<32x1xf32>
    %626 = arith.addf %624, %625 : vector<32x1xf32>
    %627 = math.rsqrt %626 : vector<32x1xf32>
    %628 = vector.broadcast %627 : vector<32x1xf32> to vector<32x128xf32>
    %629 = arith.mulf %615, %628 : vector<32x128xf32>
    %630 = vector.broadcast %544 : vector<32x1xf32> to vector<32x128xf32>
    %631 = arith.mulf %629, %630 : vector<32x128xf32>
    %632 = vector.broadcast %545 : vector<32x1xf32> to vector<32x128xf32>
    %633 = arith.addf %631, %632 : vector<32x128xf32>
    %cst_273 = arith.constant 0.000000e+00 : f32
    %634 = vector.broadcast %cst_273 : f32 to vector<32x128xf32>
    %635 = arith.maximumf %633, %634 : vector<32x128xf32>
    %c0_274 = arith.constant 0 : index
    %c0_275 = arith.constant 0 : index
    %636 = vector.load %arg42[%c0_274, %c0_275] : memref<32x1xf32, #tpu.memory_space<vmem>>, vector<32x1xf32>
    %c0_276 = arith.constant 0 : index
    %c0_277 = arith.constant 0 : index
    %637 = vector.load %arg43[%c0_276, %c0_277] : memref<32x1xf32, #tpu.memory_space<vmem>>, vector<32x1xf32>
    %cst_278 = arith.constant 0.000000e+00 : f32
    %638 = vector.shape_cast %2 : vector<1x128xi1> to vector<1x128xi1>
    %639 = vector.broadcast %638 : vector<1x128xi1> to vector<32x128xi1>
    %640 = vector.broadcast %cst_278 : f32 to vector<32x128xf32>
    %641 = arith.select %639, %338, %640 : vector<32x128xi1>, vector<32x128xf32>
    %cst_279 = arith.constant dense<0.000000e+00> : vector<32xf32>
    %642 = vector.multi_reduction <add>, %641, %cst_279 [1] : vector<32x128xf32> to vector<32xf32>
    %643 = vector.shape_cast %642 : vector<32xf32> to vector<32x1xf32>
    %cst_280 = arith.constant 3.125000e-02 : f32
    %644 = vector.broadcast %cst_280 : f32 to vector<32x1xf32>
    %645 = arith.mulf %643, %644 : vector<32x1xf32>
    %646 = vector.broadcast %645 : vector<32x1xf32> to vector<32x128xf32>
    %647 = arith.subf %338, %646 : vector<32x128xf32>
    %cst_281 = arith.constant 0.000000e+00 : f32
    %648 = vector.shape_cast %2 : vector<1x128xi1> to vector<1x128xi1>
    %649 = vector.broadcast %648 : vector<1x128xi1> to vector<32x128xi1>
    %650 = vector.broadcast %cst_281 : f32 to vector<32x128xf32>
    %651 = arith.select %649, %647, %650 : vector<32x128xi1>, vector<32x128xf32>
    %652 = arith.mulf %651, %651 : vector<32x128xf32>
    %cst_282 = arith.constant dense<0.000000e+00> : vector<32xf32>
    %653 = vector.multi_reduction <add>, %652, %cst_282 [1] : vector<32x128xf32> to vector<32xf32>
    %654 = vector.shape_cast %653 : vector<32xf32> to vector<32x1xf32>
    %cst_283 = arith.constant 3.125000e-02 : f32
    %655 = vector.broadcast %cst_283 : f32 to vector<32x1xf32>
    %656 = arith.mulf %654, %655 : vector<32x1xf32>
    %cst_284 = arith.constant 9.99999974E-6 : f32
    %657 = vector.broadcast %cst_284 : f32 to vector<32x1xf32>
    %658 = arith.addf %656, %657 : vector<32x1xf32>
    %659 = math.rsqrt %658 : vector<32x1xf32>
    %660 = vector.broadcast %659 : vector<32x1xf32> to vector<32x128xf32>
    %661 = arith.mulf %647, %660 : vector<32x128xf32>
    %662 = vector.broadcast %636 : vector<32x1xf32> to vector<32x128xf32>
    %663 = arith.mulf %661, %662 : vector<32x128xf32>
    %664 = arith.addf %635, %663 : vector<32x128xf32>
    %665 = vector.broadcast %637 : vector<32x1xf32> to vector<32x128xf32>
    %666 = arith.addf %664, %665 : vector<32x128xf32>
    %cst_285 = arith.constant 0.000000e+00 : f32
    %667 = vector.broadcast %cst_285 : f32 to vector<32x128xf32>
    %668 = arith.maximumf %666, %667 : vector<32x128xf32>
    %c0_286 = arith.constant 0 : index
    %c0_287 = arith.constant 0 : index
    %669 = vector.load %arg44[%c0_286, %c0_287] : memref<32x128xf32, #tpu.memory_space<vmem>>, vector<32x128xf32>
    tpu.vector_store %arg44[%c0_286, %c0_287], %668 {strides = array<i32>} : memref<32x128xf32, #tpu.memory_space<vmem>>, vector<32x128xf32>,
    return
  }
}

</mosaic_0001>

<llo_original>
// kernel: tpu_custom_call.1
$region0: #{tpu_custom_call.1}
  #allocation0 [shape = 'u32[]', space=smem, size = 0x4, offset = 0x4, fixed_abs, tag = 'smem constant byte address 0x4 - core index']
  #allocation1 [shape = 'u32[144,128]{1,0:T(1,128)}', space=vmem, size = 0x12000, scoped, tag = 'internal scratch']
  %s0 = inlined_call_operand.smem [shape: u32[45], index: -1, kind: input, shape index: {}]
  %s1 = sld [smem:[%s0]]
  %s2 = scalar_lea.smem %s0, 1
  %s3 = sld [smem:[%s2]]
  %s4 = scalar_lea.smem %s0, 2
  %s5 = sld [smem:[%s4]]
  %s6 = scalar_lea.smem %s0, 3
  %s7 = sld [smem:[%s6]]
  %s8 = scalar_lea.smem %s0, 4
  %s9 = sld [smem:[%s8]]
  %s10 = scalar_lea.smem %s0, 5
  %s11 = sld [smem:[%s10]]
  %s12 = scalar_lea.smem %s0, 6
  %s13 = sld [smem:[%s12]]
  %s14 = scalar_lea.smem %s0, 7
  %s15 = sld [smem:[%s14]]
  %s16 = scalar_lea.smem %s0, 8
  %s17 = sld [smem:[%s16]]
  %s18 = scalar_lea.smem %s0, 9
  %s19 = sld [smem:[%s18]]
  %s20 = scalar_lea.smem %s0, 10
  %s21 = sld [smem:[%s20]]
  %s22 = scalar_lea.smem %s0, 11
  %s23 = sld [smem:[%s22]]
  %s24 = scalar_lea.smem %s0, 12
  %s25 = sld [smem:[%s24]]
  %s26 = scalar_lea.smem %s0, 13
  %s27 = sld [smem:[%s26]]
  %s28 = scalar_lea.smem %s0, 14
  %s29 = sld [smem:[%s28]]
  %s30 = scalar_lea.smem %s0, 15
  %s31 = sld [smem:[%s30]]
  %s32 = scalar_lea.smem %s0, 16
  %s33 = sld [smem:[%s32]]
  %s34 = scalar_lea.smem %s0, 17
  %s35 = sld [smem:[%s34]]
  %s36 = scalar_lea.smem %s0, 18
  %s37 = sld [smem:[%s36]]
  %s38 = scalar_lea.smem %s0, 19
  %s39 = sld [smem:[%s38]]
  %s40 = scalar_lea.smem %s0, 20
  %s41 = sld [smem:[%s40]]
  %s42 = scalar_lea.smem %s0, 21
  %s43 = sld [smem:[%s42]]
  %s44 = scalar_lea.smem %s0, 22
  %s45 = sld [smem:[%s44]]
  %s46 = scalar_lea.smem %s0, 23
  %s47 = sld [smem:[%s46]]
  %s48 = scalar_lea.smem %s0, 24
  %s49 = sld [smem:[%s48]]
  %s50 = scalar_lea.smem %s0, 25
  %s51 = sld [smem:[%s50]]
  %s52 = scalar_lea.smem %s0, 26
  %s53 = sld [smem:[%s52]]
  %s54 = scalar_lea.smem %s0, 27
  %s55 = sld [smem:[%s54]]
  %s56 = scalar_lea.smem %s0, 28
  %s57 = sld [smem:[%s56]]
  %s58 = scalar_lea.smem %s0, 29
  %s59 = sld [smem:[%s58]]
  %s60 = scalar_lea.smem %s0, 30
  %s61 = sld [smem:[%s60]]
  %s62 = scalar_lea.smem %s0, 31
  %s63 = sld [smem:[%s62]]
  %s64 = scalar_lea.smem %s0, 32
  %s65 = sld [smem:[%s64]]
  %s66 = scalar_lea.smem %s0, 33
  %s67 = sld [smem:[%s66]]
  %s68 = scalar_lea.smem %s0, 34
  %s69 = sld [smem:[%s68]]
  %s70 = scalar_lea.smem %s0, 35
  %s71 = sld [smem:[%s70]]
  %s72 = scalar_lea.smem %s0, 36
  %s73 = sld [smem:[%s72]]
  %s74 = scalar_lea.smem %s0, 37
  %s75 = sld [smem:[%s74]]
  %s76 = scalar_lea.smem %s0, 38
  %s77 = sld [smem:[%s76]]
  %s78 = scalar_lea.smem %s0, 39
  %s79 = sld [smem:[%s78]]
  %s80 = scalar_lea.smem %s0, 40
  %s81 = sld [smem:[%s80]]
  %s82 = scalar_lea.smem %s0, 41
  %s83 = sld [smem:[%s82]]
  %s84 = scalar_lea.smem %s0, 42
  %s85 = sld [smem:[%s84]]
  %s86 = scalar_lea.smem %s0, 43
  %s87 = sld [smem:[%s86]]
  %s88 = scalar_lea.smem %s0, 44
  %s89 = sld [smem:[%s88]]
  %s90 = sld [smem:[#allocation0]]
  $region186: #{tpu_custom_call.1} parent=0
    _
  %s92 = ssub.s32 1, %s90
  %s93 = scalar_select 0, %s92, %s90
  $region1: #{tpu_custom_call.1} parent=0
    #allocation2 [shape = 'u8[16384]{0}', space=vmem, size = 0x4000, scoped, tag = 'output window, operand 0, single buffered']
    #allocation3 [shape = 's32[1]{0}', space=sflag, size = 0x4, scoped, tag = 'scoped memory for tpu_custom_call.1']
    %94 = vsyncpa [#allocation3], 0
    // Predicated region
    $region2: #{tpu_custom_call.1} parent=1 // pred_check
      _
    $region3: #{tpu_custom_call.1} parent=1 // pred_check_branch
      %96 = sbr.rel (0) target = $region5
    $region4: #{tpu_custom_call.1} parent=1 // pred_region
      _
    $region5: #{tpu_custom_call.1} parent=1 // pred_fallthru
      _
    // Predicated region
    $region6: #{tpu_custom_call.1} parent=1 // pred_check
      _
    $region7: #{tpu_custom_call.1} parent=1 // pred_check_branch
      %98 = sbr.rel (0) target = $region9
    $region8: #{tpu_custom_call.1} parent=1 // pred_region
      _
    $region9: #{tpu_custom_call.1} parent=1 // pred_fallthru
      _
    // Predicated region
    $region10: #{tpu_custom_call.1} parent=1 // pred_check
      _
    $region11: #{tpu_custom_call.1} parent=1 // pred_check_branch
      %100 = sbr.rel (0) target = $region13
    $region12: #{tpu_custom_call.1} parent=1 // pred_region
      _
    $region13: #{tpu_custom_call.1} parent=1 // pred_fallthru
      _
    // Predicated region
    $region14: #{tpu_custom_call.1} parent=1 // pred_check
      _
    $region15: #{tpu_custom_call.1} parent=1 // pred_check_branch
      %102 = sbr.rel (0) target = $region17
    $region16: #{tpu_custom_call.1} parent=1 // pred_region
      _
    $region17: #{tpu_custom_call.1} parent=1 // pred_fallthru
      _
    // Predicated region
    $region18: #{tpu_custom_call.1} parent=1 // pred_check
      _
    $region19: #{tpu_custom_call.1} parent=1 // pred_check_branch
      %104 = sbr.rel (0) target = $region21
    $region20: #{tpu_custom_call.1} parent=1 // pred_region
      _
    $region21: #{tpu_custom_call.1} parent=1 // pred_fallthru
      _
    // Predicated region
    $region22: #{tpu_custom_call.1} parent=1 // pred_check
      _
    $region23: #{tpu_custom_call.1} parent=1 // pred_check_branch
      %106 = sbr.rel (0) target = $region25
    $region24: #{tpu_custom_call.1} parent=1 // pred_region
      _
    $region25: #{tpu_custom_call.1} parent=1 // pred_fallthru
      _
    // Predicated region
    $region26: #{tpu_custom_call.1} parent=1 // pred_check
      _
    $region27: #{tpu_custom_call.1} parent=1 // pred_check_branch
      %108 = sbr.rel (0) target = $region29
    $region28: #{tpu_custom_call.1} parent=1 // pred_region
      _
    $region29: #{tpu_custom_call.1} parent=1 // pred_fallthru
      _
    // Predicated region
    $region30: #{tpu_custom_call.1} parent=1 // pred_check
      _
    $region31: #{tpu_custom_call.1} parent=1 // pred_check_branch
      %110 = sbr.rel (0) target = $region33
    $region32: #{tpu_custom_call.1} parent=1 // pred_region
      _
    $region33: #{tpu_custom_call.1} parent=1 // pred_fallthru
      _
    // Predicated region
    $region34: #{tpu_custom_call.1} parent=1 // pred_check
      _
    $region35: #{tpu_custom_call.1} parent=1 // pred_check_branch
      %112 = sbr.rel (0) target = $region37
    $region36: #{tpu_custom_call.1} parent=1 // pred_region
      _
    $region37: #{tpu_custom_call.1} parent=1 // pred_fallthru
      _
    // Predicated region
    $region38: #{tpu_custom_call.1} parent=1 // pred_check
      _
    $region39: #{tpu_custom_call.1} parent=1 // pred_check_branch
      %114 = sbr.rel (0) target = $region41
    $region40: #{tpu_custom_call.1} parent=1 // pred_region
      _
    $region41: #{tpu_custom_call.1} parent=1 // pred_fallthru
      _
    // Predicated region
    $region42: #{tpu_custom_call.1} parent=1 // pred_check
      _
    $region43: #{tpu_custom_call.1} parent=1 // pred_check_branch
      %116 = sbr.rel (0) target = $region45
    $region44: #{tpu_custom_call.1} parent=1 // pred_region
      _
    $region45: #{tpu_custom_call.1} parent=1 // pred_fallthru
      _
    // Predicated region
    $region46: #{tpu_custom_call.1} parent=1 // pred_check
      _
    $region47: #{tpu_custom_call.1} parent=1 // pred_check_branch
      %118 = sbr.rel (0) target = $region49
    $region48: #{tpu_custom_call.1} parent=1 // pred_region
      _
    $region49: #{tpu_custom_call.1} parent=1 // pred_fallthru
      _
    // Predicated region
    $region50: #{tpu_custom_call.1} parent=1 // pred_check
      _
    $region51: #{tpu_custom_call.1} parent=1 // pred_check_branch
      %120 = sbr.rel (0) target = $region53
    $region52: #{tpu_custom_call.1} parent=1 // pred_region
      _
    $region53: #{tpu_custom_call.1} parent=1 // pred_fallthru
      _
    // Predicated region
    $region54: #{tpu_custom_call.1} parent=1 // pred_check
      _
    $region55: #{tpu_custom_call.1} parent=1 // pred_check_branch
      %122 = sbr.rel (0) target = $region57
    $region56: #{tpu_custom_call.1} parent=1 // pred_region
      _
    $region57: #{tpu_custom_call.1} parent=1 // pred_fallthru
      _
    // Predicated region
    $region58: #{tpu_custom_call.1} parent=1 // pred_check
      _
    $region59: #{tpu_custom_call.1} parent=1 // pred_check_branch
      %124 = sbr.rel (0) target = $region61
    $region60: #{tpu_custom_call.1} parent=1 // pred_region
      _
    $region61: #{tpu_custom_call.1} parent=1 // pred_fallthru
      _
    // Predicated region
    $region62: #{tpu_custom_call.1} parent=1 // pred_check
      _
    $region63: #{tpu_custom_call.1} parent=1 // pred_check_branch
      %126 = sbr.rel (0) target = $region65
    $region64: #{tpu_custom_call.1} parent=1 // pred_region
      _
    $region65: #{tpu_custom_call.1} parent=1 // pred_fallthru
      _
    // Predicated region
    $region66: #{tpu_custom_call.1} parent=1 // pred_check
      _
    $region67: #{tpu_custom_call.1} parent=1 // pred_check_branch
      %128 = sbr.rel (0) target = $region69
    $region68: #{tpu_custom_call.1} parent=1 // pred_region
      _
    $region69: #{tpu_custom_call.1} parent=1 // pred_fallthru
      _
    // Predicated region
    $region70: #{tpu_custom_call.1} parent=1 // pred_check
      _
    $region71: #{tpu_custom_call.1} parent=1 // pred_check_branch
      %130 = sbr.rel (0) target = $region73
    $region72: #{tpu_custom_call.1} parent=1 // pred_region
      _
    $region73: #{tpu_custom_call.1} parent=1 // pred_fallthru
      _
    // Predicated region
    $region74: #{tpu_custom_call.1} parent=1 // pred_check
      _
    $region75: #{tpu_custom_call.1} parent=1 // pred_check_branch
      %132 = sbr.rel (0) target = $region77
    $region76: #{tpu_custom_call.1} parent=1 // pred_region
      _
    $region77: #{tpu_custom_call.1} parent=1 // pred_fallthru
      _
    // Predicated region
    $region78: #{tpu_custom_call.1} parent=1 // pred_check
      _
    $region79: #{tpu_custom_call.1} parent=1 // pred_check_branch
      %134 = sbr.rel (0) target = $region81
    $region80: #{tpu_custom_call.1} parent=1 // pred_region
      _
    $region81: #{tpu_custom_call.1} parent=1 // pred_fallthru
      _
    // Predicated region
    $region82: #{tpu_custom_call.1} parent=1 // pred_check
      _
    $region83: #{tpu_custom_call.1} parent=1 // pred_check_branch
      %136 = sbr.rel (0) target = $region85
    $region84: #{tpu_custom_call.1} parent=1 // pred_region
      _
    $region85: #{tpu_custom_call.1} parent=1 // pred_fallthru
      _
    // Predicated region
    $region86: #{tpu_custom_call.1} parent=1 // pred_check
      _
    $region87: #{tpu_custom_call.1} parent=1 // pred_check_branch
      %138 = sbr.rel (0) target = $region89
    $region88: #{tpu_custom_call.1} parent=1 // pred_region
      _
    $region89: #{tpu_custom_call.1} parent=1 // pred_fallthru
      _
    // Predicated region
    $region90: #{tpu_custom_call.1} parent=1 // pred_check
      _
    $region91: #{tpu_custom_call.1} parent=1 // pred_check_branch
      %140 = sbr.rel (0) target = $region93
    $region92: #{tpu_custom_call.1} parent=1 // pred_region
      _
    $region93: #{tpu_custom_call.1} parent=1 // pred_fallthru
      _
    // Predicated region
    $region94: #{tpu_custom_call.1} parent=1 // pred_check
      _
    $region95: #{tpu_custom_call.1} parent=1 // pred_check_branch
      %142 = sbr.rel (0) target = $region97
    $region96: #{tpu_custom_call.1} parent=1 // pred_region
      _
    $region97: #{tpu_custom_call.1} parent=1 // pred_fallthru
      _
    // Predicated region
    $region98: #{tpu_custom_call.1} parent=1 // pred_check
      _
    $region99: #{tpu_custom_call.1} parent=1 // pred_check_branch
      %144 = sbr.rel (0) target = $region101
    $region100: #{tpu_custom_call.1} parent=1 // pred_region
      _
    $region101: #{tpu_custom_call.1} parent=1 // pred_fallthru
      _
    // Predicated region
    $region102: #{tpu_custom_call.1} parent=1 // pred_check
      _
    $region103: #{tpu_custom_call.1} parent=1 // pred_check_branch
      %146 = sbr.rel (0) target = $region105
    $region104: #{tpu_custom_call.1} parent=1 // pred_region
      _
    $region105: #{tpu_custom_call.1} parent=1 // pred_fallthru
      _
    // Predicated region
    $region106: #{tpu_custom_call.1} parent=1 // pred_check
      _
    $region107: #{tpu_custom_call.1} parent=1 // pred_check_branch
      %148 = sbr.rel (0) target = $region109
    $region108: #{tpu_custom_call.1} parent=1 // pred_region
      _
    $region109: #{tpu_custom_call.1} parent=1 // pred_fallthru
      _
    // Predicated region
    $region110: #{tpu_custom_call.1} parent=1 // pred_check
      _
    $region111: #{tpu_custom_call.1} parent=1 // pred_check_branch
      %150 = sbr.rel (0) target = $region113
    $region112: #{tpu_custom_call.1} parent=1 // pred_region
      _
    $region113: #{tpu_custom_call.1} parent=1 // pred_fallthru
      _
    // Predicated region
    $region114: #{tpu_custom_call.1} parent=1 // pred_check
      _
    $region115: #{tpu_custom_call.1} parent=1 // pred_check_branch
      %152 = sbr.rel (0) target = $region117
    $region116: #{tpu_custom_call.1} parent=1 // pred_region
      _
    $region117: #{tpu_custom_call.1} parent=1 // pred_fallthru
      _
    // Predicated region
    $region118: #{tpu_custom_call.1} parent=1 // pred_check
      _
    $region119: #{tpu_custom_call.1} parent=1 // pred_check_branch
      %154 = sbr.rel (0) target = $region121
    $region120: #{tpu_custom_call.1} parent=1 // pred_region
      _
    $region121: #{tpu_custom_call.1} parent=1 // pred_fallthru
      _
    // Predicated region
    $region122: #{tpu_custom_call.1} parent=1 // pred_check
      _
    $region123: #{tpu_custom_call.1} parent=1 // pred_check_branch
      %156 = sbr.rel (0) target = $region125
    $region124: #{tpu_custom_call.1} parent=1 // pred_region
      _
    $region125: #{tpu_custom_call.1} parent=1 // pred_fallthru
      _
    // Predicated region
    $region126: #{tpu_custom_call.1} parent=1 // pred_check
      _
    $region127: #{tpu_custom_call.1} parent=1 // pred_check_branch
      %158 = sbr.rel (0) target = $region129
    $region128: #{tpu_custom_call.1} parent=1 // pred_region
      _
    $region129: #{tpu_custom_call.1} parent=1 // pred_fallthru
      _
    // Predicated region
    $region130: #{tpu_custom_call.1} parent=1 // pred_check
      _
    $region131: #{tpu_custom_call.1} parent=1 // pred_check_branch
      %160 = sbr.rel (0) target = $region133
    $region132: #{tpu_custom_call.1} parent=1 // pred_region
      _
    $region133: #{tpu_custom_call.1} parent=1 // pred_fallthru
      _
    // Predicated region
    $region134: #{tpu_custom_call.1} parent=1 // pred_check
      _
    $region135: #{tpu_custom_call.1} parent=1 // pred_check_branch
      %162 = sbr.rel (0) target = $region137
    $region136: #{tpu_custom_call.1} parent=1 // pred_region
      _
    $region137: #{tpu_custom_call.1} parent=1 // pred_fallthru
      _
    // Predicated region
    $region138: #{tpu_custom_call.1} parent=1 // pred_check
      _
    $region139: #{tpu_custom_call.1} parent=1 // pred_check_branch
      %164 = sbr.rel (0) target = $region141
    $region140: #{tpu_custom_call.1} parent=1 // pred_region
      _
    $region141: #{tpu_custom_call.1} parent=1 // pred_fallthru
      _
    // Predicated region
    $region142: #{tpu_custom_call.1} parent=1 // pred_check
      _
    $region143: #{tpu_custom_call.1} parent=1 // pred_check_branch
      %166 = sbr.rel (0) target = $region145
    $region144: #{tpu_custom_call.1} parent=1 // pred_region
      _
    $region145: #{tpu_custom_call.1} parent=1 // pred_fallthru
      _
    // Predicated region
    $region146: #{tpu_custom_call.1} parent=1 // pred_check
      _
    $region147: #{tpu_custom_call.1} parent=1 // pred_check_branch
      %168 = sbr.rel (0) target = $region149
    $region148: #{tpu_custom_call.1} parent=1 // pred_region
      _
    $region149: #{tpu_custom_call.1} parent=1 // pred_fallthru
      _
    // Predicated region
    $region150: #{tpu_custom_call.1} parent=1 // pred_check
      _
    $region151: #{tpu_custom_call.1} parent=1 // pred_check_branch
      %170 = sbr.rel (0) target = $region153
    $region152: #{tpu_custom_call.1} parent=1 // pred_region
      _
    $region153: #{tpu_custom_call.1} parent=1 // pred_fallthru
      _
    // Predicated region
    $region154: #{tpu_custom_call.1} parent=1 // pred_check
      _
    $region155: #{tpu_custom_call.1} parent=1 // pred_check_branch
      %172 = sbr.rel (0) target = $region157
    $region156: #{tpu_custom_call.1} parent=1 // pred_region
      _
    $region157: #{tpu_custom_call.1} parent=1 // pred_fallthru
      _
    // Predicated region
    $region158: #{tpu_custom_call.1} parent=1 // pred_check
      _
    $region159: #{tpu_custom_call.1} parent=1 // pred_check_branch
      %174 = sbr.rel (0) target = $region161
    $region160: #{tpu_custom_call.1} parent=1 // pred_region
      _
    $region161: #{tpu_custom_call.1} parent=1 // pred_fallthru
      _
    // Predicated region
    $region162: #{tpu_custom_call.1} parent=1 // pred_check
      _
    $region163: #{tpu_custom_call.1} parent=1 // pred_check_branch
      %176 = sbr.rel (0) target = $region165
    $region164: #{tpu_custom_call.1} parent=1 // pred_region
      _
    $region165: #{tpu_custom_call.1} parent=1 // pred_fallthru
      _
    // Predicated region
    $region166: #{tpu_custom_call.1} parent=1 // pred_check
      _
    $region167: #{tpu_custom_call.1} parent=1 // pred_check_branch
      %178 = sbr.rel (0) target = $region169
    $region168: #{tpu_custom_call.1} parent=1 // pred_region
      _
    $region169: #{tpu_custom_call.1} parent=1 // pred_fallthru
      _
    // Predicated region
    $region170: #{tpu_custom_call.1} parent=1 // pred_check
      _
    $region171: #{tpu_custom_call.1} parent=1 // pred_check_branch
      %180 = sbr.rel (0) target = $region173
    $region172: #{tpu_custom_call.1} parent=1 // pred_region
      _
    $region173: #{tpu_custom_call.1} parent=1 // pred_fallthru
      _
    // Predicated region
    $region174: #{tpu_custom_call.1} parent=1 // pred_check
      _
    $region175: #{tpu_custom_call.1} parent=1 // pred_check_branch
      %182 = sbr.rel (0) target = $region177
    $region176: #{tpu_custom_call.1} parent=1 // pred_region
      _
    $region177: #{tpu_custom_call.1} parent=1 // pred_fallthru
      _
    %v183 = vld [vmem:[%s1] sm:$0x1]
    %vm184 = vcmp.lt.s32.totalorder %v183, 16
    %v185 = vld [vmem:[%s3] sm:$0xf]
    %v186 = vld [vmem:[%s5] sm:$0xff]
    %v187 = vld [vmem:[%s7] sm:$0xff]
    %189 = vset.pattern.permute.xlu0 0
    %190 = vperm.xlu0 %189, %v187
    %v191 = vpop.permute.xlu0 %190
    %vm193 = vcmask 31744
    %v195 = vsel %vm193, %v186, 0
    %vm197 = vcmask 1043456
    %v199 = vsel %vm197, %v185, 0
    %201 = vmatprep.subr.mxu0 0.0
    %202 = vmatpush1.msra.mxu0 %v199
    %203 = vmatprep.subr.mxu0 0.0
    %204 = vmatpush1.msra.mxu0 0.0
    %205 = vmatprep.subr.mxu0 0.0
    %206 = vmatpush1.msra.mxu0 0.0
    %207 = vmatprep.subr.mxu0 0.0
    %208 = vmatpush1.msra.mxu0 0.0
    %209 = vmatprep.subr.mxu0 0.0
    %210 = vmatpush1.msra.mxu0 0.0
    %211 = vmatprep.subr.mxu0 0.0
    %212 = vmatpush1.msra.mxu0 0.0
    %213 = vmatprep.subr.mxu0 0.0
    %214 = vmatpush1.msra.mxu0 0.0
    %215 = vmatprep.subr.mxu0 0.0
    %216 = vmatpush1.msra.mxu0 0.0
    %217 = vmatprep.subr.mxu0 0.0
    %218 = vmatpush1.msra.mxu0 0.0
    %219 = vmatprep.subr.mxu0 0.0
    %220 = vmatpush1.msra.mxu0 0.0
    %221 = vmatprep.subr.mxu0 0.0
    %222 = vmatpush1.msra.mxu0 0.0
    %223 = vmatprep.subr.mxu0 0.0
    %224 = vmatpush1.msra.mxu0 0.0
    %225 = vmatprep.subr.mxu0 0.0
    %226 = vmatpush1.msra.mxu0 0.0
    %227 = vmatprep.subr.mxu0 0.0
    %228 = vmatpush1.msra.mxu0 0.0
    %229 = vmatprep.subr.mxu0 0.0
    %230 = vmatpush1.msra.mxu0 0.0
    %231 = vmatprep.subr.mxu0 0.0
    %232 = vmatpush1.msra.mxu0 0.0
    %233 = vmatprep.subr.mxu0 0.0
    %234 = vmatpush1.msra.mxu0 0.0
    %235 = vmatprep.subr.mxu0 0.0
    %236 = vmatpush1.msra.mxu0 0.0
    %237 = vmatprep.subr.mxu0 0.0
    %238 = vmatpush1.msra.mxu0 0.0
    %239 = vmatprep.subr.mxu0 0.0
    %240 = vmatpush1.msra.mxu0 0.0
    %241 = vmatprep.subr.mxu0 0.0
    %242 = vmatpush1.msra.mxu0 0.0
    %243 = vmatprep.subr.mxu0 0.0
    %244 = vmatpush1.msra.mxu0 0.0
    %245 = vmatprep.subr.mxu0 0.0
    %246 = vmatpush1.msra.mxu0 0.0
    %247 = vmatprep.subr.mxu0 0.0
    %248 = vmatpush1.msra.mxu0 0.0
    %249 = vmatprep.subr.mxu0 0.0
    %250 = vmatpush1.msra.mxu0 0.0
    %251 = vmatprep.subr.mxu0 0.0
    %252 = vmatpush1.msra.mxu0 0.0
    %253 = vmatprep.subr.mxu0 0.0
    %254 = vmatpush1.msra.mxu0 0.0
    %255 = vmatprep.subr.mxu0 0.0
    %256 = vmatpush1.msra.mxu0 0.0
    %257 = vmatprep.subr.mxu0 0.0
    %258 = vmatpush1.msra.mxu0 0.0
    %259 = vmatprep.subr.mxu0 0.0
    %260 = vmatpush1.msra.mxu0 0.0
    %261 = vmatprep.subr.mxu0 0.0
    %262 = vmatpush1.msra.mxu0 0.0
    %263 = vmatprep.subr.mxu0 0.0
    %264 = vmatpush1.msra.mxu0 0.0
    %265 = vmatprep.mubr.f32.mxu0 0.0
    %266 = vmatmul.mubr.f32.gmra.mrb[0].mxu0 %v195
    %v267 = vpop.f32.mrb[0].mxu0
    %v268 = vadd.f32 %v191, %v267
    %v269 = vpop.f32.mrb[0].mxu0
    %270 = vdwg.mxu0
    %v271 = vld [vmem:[%s9] sm:$0xff]
    %v272 = vld [vmem:[%s9 + $0x8] sm:$0xff]
    %v273 = vld [vmem:[%s9 + $0x10] sm:$0xff]
    %v274 = vld [vmem:[%s9 + $0x18] sm:$0xff]
    %v275 = vld [vmem:[%s11] sm:$0xff]
    %v276 = vld [vmem:[%s11 + $0x8] sm:$0xff]
    %v277 = vld [vmem:[%s11 + $0x10] sm:$0xff]
    %v278 = vld [vmem:[%s11 + $0x18] sm:$0xff]
    %v279 = vld [vmem:[%s13] sm:$0xff]
    %v280 = vld [vmem:[%s13 + $0x8] sm:$0xff]
    %v281 = vld [vmem:[%s13 + $0x10] sm:$0xff]
    %v282 = vld [vmem:[%s13 + $0x18] sm:$0xff]
    %v283 = vld [vmem:[%s15] sm:$0xff]
    %v284 = vld [vmem:[%s15 + $0x8] sm:$0xff]
    %v285 = vld [vmem:[%s15 + $0x10] sm:$0xff]
    %v286 = vld [vmem:[%s15 + $0x18] sm:$0xff]
    %287 = vrot.lane.b32.xlu0 %v185, 1
    %v288 = vpop.permute.xlu0 %287
    %vm289 = vcmp.ge.s32.totalorder %v183, 1
    %v290 = vsel %vm289, 1, 0
    %v291 = vlaneseq
    %v292 = vshrl.u32 %v291, 7
    %v293 = vsub.s32 0, %v292
    %v294 = vrot.slane %v290, %v293
    %vm295 = vcmp.eq.s32.totalorder %v294, 1
    %v296 = vsel %vm295, %v288, %v185
    %v297 = vmax.f32 %v296, %v185
    %298 = vrot.lane.b32.xlu0 %v185, 127
    %v299 = vpop.permute.xlu0 %298
    %vm300 = vcmp.le.s32.totalorder %v183, 14
    %v301 = vsel %vm300, 1, 0
    %v302 = vlaneseq
    %v303 = vshrl.u32 %v302, 7
    %v304 = vsub.s32 0, %v303
    %v305 = vrot.slane %v301, %v304
    %vm306 = vcmp.eq.s32.totalorder %v305, 1
    %v307 = vsel %vm306, %v299, %v185
    %v308 = vmax.f32 %v297, %v307
    %309 = vrot.lane.b32.xlu0 %v268, 3
    %v310 = vpop.permute.xlu0 %309
    %vm311 = vcmp.ge.s32.totalorder %v183, 3
    %v312 = vsel %vm311, 1, 0
    %v313 = vlaneseq
    %v314 = vshrl.u32 %v313, 7
    %v315 = vsub.s32 0, %v314
    %v316 = vrot.slane %v312, %v315
    %vm317 = vcmp.eq.s32.totalorder %v316, 1
    %v318 = vsel %vm317, %v310, 0.0
    %319 = vrot.lane.b32.xlu0 %v268, 2
    %v320 = vpop.permute.xlu0 %319
    %vm321 = vcmp.ge.s32.totalorder %v183, 2
    %v322 = vsel %vm321, 1, 0
    %v323 = vlaneseq
    %v324 = vshrl.u32 %v323, 7
    %v325 = vsub.s32 0, %v324
    %v326 = vrot.slane %v322, %v325
    %vm327 = vcmp.eq.s32.totalorder %v326, 1
    %v328 = vsel %vm327, %v320, 0.0
    %329 = vrot.lane.b32.xlu0 %v268, 1
    %v330 = vpop.permute.xlu0 %329
    %v331 = vsel %vm295, %v330, 0.0
    %332 = vrot.lane.b32.xlu0 %v268, 127
    %v333 = vpop.permute.xlu0 %332
    %v334 = vsel %vm306, %v333, 0.0
    %335 = vrot.lane.b32.xlu0 %v268, 126
    %v336 = vpop.permute.xlu0 %335
    %vm337 = vcmp.le.s32.totalorder %v183, 13
    %v338 = vsel %vm337, 1, 0
    %v339 = vlaneseq
    %v340 = vshrl.u32 %v339, 7
    %v341 = vsub.s32 0, %v340
    %v342 = vrot.slane %v338, %v341
    %vm343 = vcmp.eq.s32.totalorder %v342, 1
    %v344 = vsel %vm343, %v336, 0.0
    %345 = vrot.lane.b32.xlu0 %v268, 125
    %v346 = vpop.permute.xlu0 %345
    %vm347 = vcmp.le.s32.totalorder %v183, 12
    %v348 = vsel %vm347, 1, 0
    %v349 = vlaneseq
    %v350 = vshrl.u32 %v349, 7
    %v351 = vsub.s32 0, %v350
    %v352 = vrot.slane %v348, %v351
    %vm353 = vcmp.eq.s32.totalorder %v352, 1
    %v354 = vsel %vm353, %v346, 0.0
    %356 = vset.pattern.permute.xlu0 0
    %357 = vperm.xlu0 %356, %v275
    %v358 = vpop.permute.xlu0 %357
    %361 = vset.pattern.permute.xlu0 0
    %362 = vperm.xlu0 %361, %v276
    %v363 = vpop.permute.xlu0 %362
    %366 = vset.pattern.permute.xlu0 0
    %367 = vperm.xlu0 %366, %v277
    %v368 = vpop.permute.xlu0 %367
    %371 = vset.pattern.permute.xlu0 0
    %372 = vperm.xlu0 %371, %v278
    %v373 = vpop.permute.xlu0 %372
    %vm375 = vcmask 490496
    %v377 = vsel %vm375, %v271, 0
    %v380 = vsel %vm375, %v272, 0
    %v383 = vsel %vm375, %v273, 0
    %v386 = vsel %vm375, %v274, 0
    %v389 = vsel %vm197, %v308, 0
    %391 = vmatprep.subr.mxu0 0.0
    %392 = vmatpush1.msra.mxu0 %v318
    %393 = vmatprep.subr.mxu0 0.0
    %394 = vmatpush1.msra.mxu0 %v328
    %395 = vmatprep.subr.mxu0 0.0
    %396 = vmatpush1.msra.mxu0 %v331
    %397 = vmatprep.subr.mxu0 0.0
    %398 = vmatpush1.msra.mxu0 %v268
    %399 = vmatprep.subr.mxu0 0.0
    %400 = vmatpush1.msra.mxu0 %v334
    %401 = vmatprep.subr.mxu0 0.0
    %402 = vmatpush1.msra.mxu0 %v344
    %403 = vmatprep.subr.mxu0 0.0
    %404 = vmatpush1.msra.mxu0 %v354
    %405 = vmatprep.subr.mxu0 0.0
    %406 = vmatpush1.msra.mxu0 %v389
    %407 = vmatprep.subr.mxu0 0.0
    %408 = vmatpush1.msra.mxu0 0.0
    %409 = vmatprep.subr.mxu0 0.0
    %410 = vmatpush1.msra.mxu0 0.0
    %411 = vmatprep.subr.mxu0 0.0
    %412 = vmatpush1.msra.mxu0 0.0
    %413 = vmatprep.subr.mxu0 0.0
    %414 = vmatpush1.msra.mxu0 0.0
    %415 = vmatprep.subr.mxu0 0.0
    %416 = vmatpush1.msra.mxu0 0.0
    %417 = vmatprep.subr.mxu0 0.0
    %418 = vmatpush1.msra.mxu0 0.0
    %419 = vmatprep.subr.mxu0 0.0
    %420 = vmatpush1.msra.mxu0 0.0
    %421 = vmatprep.subr.mxu0 0.0
    %422 = vmatpush1.msra.mxu0 0.0
    %423 = vmatprep.subr.mxu0 0.0
    %424 = vmatpush1.msra.mxu0 0.0
    %425 = vmatprep.subr.mxu0 0.0
    %426 = vmatpush1.msra.mxu0 0.0
    %427 = vmatprep.subr.mxu0 0.0
    %428 = vmatpush1.msra.mxu0 0.0
    %429 = vmatprep.subr.mxu0 0.0
    %430 = vmatpush1.msra.mxu0 0.0
    %431 = vmatprep.subr.mxu0 0.0
    %432 = vmatpush1.msra.mxu0 0.0
    %433 = vmatprep.subr.mxu0 0.0
    %434 = vmatpush1.msra.mxu0 0.0
    %435 = vmatprep.subr.mxu0 0.0
    %436 = vmatpush1.msra.mxu0 0.0
    %437 = vmatprep.subr.mxu0 0.0
    %438 = vmatpush1.msra.mxu0 0.0
    %439 = vmatprep.subr.mxu0 0.0
    %440 = vmatpush1.msra.mxu0 0.0
    %441 = vmatprep.subr.mxu0 0.0
    %442 = vmatpush1.msra.mxu0 0.0
    %443 = vmatprep.subr.mxu0 0.0
    %444 = vmatpush1.msra.mxu0 0.0
    %445 = vmatprep.subr.mxu0 0.0
    %446 = vmatpush1.msra.mxu0 0.0
    %447 = vmatprep.subr.mxu0 0.0
    %448 = vmatpush1.msra.mxu0 0.0
    %449 = vmatprep.subr.mxu0 0.0
    %450 = vmatpush1.msra.mxu0 0.0
    %451 = vmatprep.subr.mxu0 0.0
    %452 = vmatpush1.msra.mxu0 0.0
    %453 = vmatprep.subr.mxu0 0.0
    %454 = vmatpush1.msra.mxu0 0.0
    %455 = vmatprep.mubr.f32.mxu0 0.0
    %456 = vmatmul.mubr.f32.gmra.mrb[0].mxu0 %v377
    %v457 = vpop.f32.mrb[0].mxu0
    %v458 = vadd.f32 %v358, %v457
    %v459 = vpop.f32.mrb[0].mxu0
    %460 = vmatprep.mubr.f32.mxu0 0.0
    %461 = vmatmul.mubr.f32.gmra.mrb[0].mxu0 %v380
    %v462 = vpop.f32.mrb[0].mxu0
    %v463 = vadd.f32 %v363, %v462
    %v464 = vpop.f32.mrb[0].mxu0
    %465 = vmatprep.mubr.f32.mxu0 0.0
    %466 = vmatmul.mubr.f32.gmra.mrb[0].mxu0 %v383
    %v467 = vpop.f32.mrb[0].mxu0
    %v468 = vadd.f32 %v368, %v467
    %v469 = vpop.f32.mrb[0].mxu0
    %470 = vmatprep.mubr.f32.mxu0 0.0
    %471 = vmatmul.mubr.f32.gmra.mrb[0].mxu0 %v386
    %v472 = vpop.f32.mrb[0].mxu0
    %v473 = vadd.f32 %v373, %v472
    %v474 = vpop.f32.mrb[0].mxu0
    %475 = vdwg.mxu0
    %v476 = vsel %vm184, 1, 0
    %v477 = vlaneseq
    %v478 = vshrl.u32 %v477, 7
    %v479 = vsub.s32 0, %v478
    %v480 = vrot.slane %v476, %v479
    %vm481 = vcmp.eq.s32.totalorder %v480, 1
    %v482 = vsel %vm481, %v458, 0.0
    %v483 = vsel %vm481, %v463, 0.0
    %v484 = vsel %vm481, %v468, 0.0
    %v485 = vsel %vm481, %v473, 0.0
    %486 = vadd.xlane.f32.xlu0 %v482
    %v487 = vpop.xlane.xlu0 %486
    %488 = vadd.xlane.f32.xlu0 %v483
    %v489 = vpop.xlane.xlu0 %488
    %490 = vadd.xlane.f32.xlu0 %v484
    %v491 = vpop.xlane.xlu0 %490
    %492 = vadd.xlane.f32.xlu0 %v485
    %v493 = vpop.xlane.xlu0 %492
    %v494 = vmul.f32 %v487, 0.03125
    %v495 = vmul.f32 %v489, 0.03125
    %v496 = vmul.f32 %v491, 0.03125
    %v497 = vmul.f32 %v493, 0.03125
    %v498 = vsub.f32 %v458, %v494
    %v499 = vsub.f32 %v463, %v495
    %v500 = vsub.f32 %v468, %v496
    %v501 = vsub.f32 %v473, %v497
    %v502 = vsel %vm481, %v498, 0.0
    %v503 = vsel %vm481, %v499, 0.0
    %v504 = vsel %vm481, %v500, 0.0
    %v505 = vsel %vm481, %v501, 0.0
    %v506 = vmul.f32 %v502, %v502
    %v507 = vmul.f32 %v503, %v503
    %v508 = vmul.f32 %v504, %v504
    %v509 = vmul.f32 %v505, %v505
    %510 = vadd.xlane.f32.xlu0 %v506
    %v511 = vpop.xlane.xlu0 %510
    %512 = vadd.xlane.f32.xlu0 %v507
    %v513 = vpop.xlane.xlu0 %512
    %514 = vadd.xlane.f32.xlu0 %v508
    %v515 = vpop.xlane.xlu0 %514
    %516 = vadd.xlane.f32.xlu0 %v509
    %v517 = vpop.xlane.xlu0 %516
    %v518 = vmul.f32 %v511, 0.03125
    %v519 = vmul.f32 %v513, 0.03125
    %v520 = vmul.f32 %v515, 0.03125
    %v521 = vmul.f32 %v517, 0.03125
    %v522 = vadd.f32 %v518, 1e-05
    %v523 = vadd.f32 %v519, 1e-05
    %v524 = vadd.f32 %v520, 1e-05
    %v525 = vadd.f32 %v521, 1e-05
    %v526 = vrsqrt.pop %v522
    %v527 = vrsqrt.pop %v523
    %v528 = vrsqrt.pop %v524
    %v529 = vrsqrt.pop %v525
    %v530 = vmul.f32 %v498, %v526
    %v531 = vmul.f32 %v499, %v527
    %v532 = vmul.f32 %v500, %v528
    %v533 = vmul.f32 %v501, %v529
    %535 = vset.pattern.permute.xlu0 0
    %536 = vperm.xlu0 %535, %v279
    %v537 = vpop.permute.xlu0 %536
    %540 = vset.pattern.permute.xlu0 0
    %541 = vperm.xlu0 %540, %v280
    %v542 = vpop.permute.xlu0 %541
    %545 = vset.pattern.permute.xlu0 0
    %546 = vperm.xlu0 %545, %v281
    %v547 = vpop.permute.xlu0 %546
    %550 = vset.pattern.permute.xlu0 0
    %551 = vperm.xlu0 %550, %v282
    %v552 = vpop.permute.xlu0 %551
    %v554 = vmul.f32 %v530, %v537
    %v555 = vmul.f32 %v531, %v542
    %v556 = vmul.f32 %v532, %v547
    %v557 = vmul.f32 %v533, %v552
    %559 = vset.pattern.permute.xlu0 0
    %560 = vperm.xlu0 %559, %v283
    %v561 = vpop.permute.xlu0 %560
    %564 = vset.pattern.permute.xlu0 0
    %565 = vperm.xlu0 %564, %v284
    %v566 = vpop.permute.xlu0 %565
    %569 = vset.pattern.permute.xlu0 0
    %570 = vperm.xlu0 %569, %v285
    %v571 = vpop.permute.xlu0 %570
    %574 = vset.pattern.permute.xlu0 0
    %575 = vperm.xlu0 %574, %v286
    %v576 = vpop.permute.xlu0 %575
    %v578 = vadd.f32 %v554, %v561
    %v579 = vadd.f32 %v555, %v566
    %v580 = vadd.f32 %v556, %v571
    %v581 = vadd.f32 %v557, %v576
    %v582 = vmax.f32 %v578, 0.0
    %v583 = vmax.f32 %v579, 0.0
    %v584 = vmax.f32 %v580, 0.0
    %v585 = vmax.f32 %v581, 0.0
    %v586 = vld [vmem:[%s17] sm:$0xff]
    %v587 = vld [vmem:[%s19] sm:$0xff]
    %589 = vset.pattern.permute.xlu0 0
    %590 = vperm.xlu0 %589, %v587
    %v591 = vpop.permute.xlu0 %590
    %vm593 = vcmask 261120
    %v595 = vsel %vm593, %v586, 0
    %597 = vmatprep.subr.mxu0 0.0
    %598 = vmatpush1.msra.mxu0 %v582
    %599 = vmatprep.subr.mxu0 0.0
    %600 = vmatpush1.msra.mxu0 %v583
    %601 = vmatprep.subr.mxu0 0.0
    %602 = vmatpush1.msra.mxu0 %v584
    %603 = vmatprep.subr.mxu0 0.0
    %604 = vmatpush1.msra.mxu0 %v585
    %605 = vmatprep.subr.mxu0 0.0
    %606 = vmatpush1.msra.mxu0 0.0
    %607 = vmatprep.subr.mxu0 0.0
    %608 = vmatpush1.msra.mxu0 0.0
    %609 = vmatprep.subr.mxu0 0.0
    %610 = vmatpush1.msra.mxu0 0.0
    %611 = vmatprep.subr.mxu0 0.0
    %612 = vmatpush1.msra.mxu0 0.0
    %613 = vmatprep.subr.mxu0 0.0
    %614 = vmatpush1.msra.mxu0 0.0
    %615 = vmatprep.subr.mxu0 0.0
    %616 = vmatpush1.msra.mxu0 0.0
    %617 = vmatprep.subr.mxu0 0.0
    %618 = vmatpush1.msra.mxu0 0.0
    %619 = vmatprep.subr.mxu0 0.0
    %620 = vmatpush1.msra.mxu0 0.0
    %621 = vmatprep.subr.mxu0 0.0
    %622 = vmatpush1.msra.mxu0 0.0
    %623 = vmatprep.subr.mxu0 0.0
    %624 = vmatpush1.msra.mxu0 0.0
    %625 = vmatprep.subr.mxu0 0.0
    %626 = vmatpush1.msra.mxu0 0.0
    %627 = vmatprep.subr.mxu0 0.0
    %628 = vmatpush1.msra.mxu0 0.0
    %629 = vmatprep.subr.mxu0 0.0
    %630 = vmatpush1.msra.mxu0 0.0
    %631 = vmatprep.subr.mxu0 0.0
    %632 = vmatpush1.msra.mxu0 0.0
    %633 = vmatprep.subr.mxu0 0.0
    %634 = vmatpush1.msra.mxu0 0.0
    %635 = vmatprep.subr.mxu0 0.0
    %636 = vmatpush1.msra.mxu0 0.0
    %637 = vmatprep.subr.mxu0 0.0
    %638 = vmatpush1.msra.mxu0 0.0
    %639 = vmatprep.subr.mxu0 0.0
    %640 = vmatpush1.msra.mxu0 0.0
    %641 = vmatprep.subr.mxu0 0.0
    %642 = vmatpush1.msra.mxu0 0.0
    %643 = vmatprep.subr.mxu0 0.0
    %644 = vmatpush1.msra.mxu0 0.0
    %645 = vmatprep.subr.mxu0 0.0
    %646 = vmatpush1.msra.mxu0 0.0
    %647 = vmatprep.subr.mxu0 0.0
    %648 = vmatpush1.msra.mxu0 0.0
    %649 = vmatprep.subr.mxu0 0.0
    %650 = vmatpush1.msra.mxu0 0.0
    %651 = vmatprep.subr.mxu0 0.0
    %652 = vmatpush1.msra.mxu0 0.0
    %653 = vmatprep.subr.mxu0 0.0
    %654 = vmatpush1.msra.mxu0 0.0
    %655 = vmatprep.subr.mxu0 0.0
    %656 = vmatpush1.msra.mxu0 0.0
    %657 = vmatprep.subr.mxu0 0.0
    %658 = vmatpush1.msra.mxu0 0.0
    %659 = vmatprep.subr.mxu0 0.0
    %660 = vmatpush1.msra.mxu0 0.0
    %661 = vmatprep.mubr.f32.mxu0 0.0
    %662 = vmatmul.mubr.f32.gmra.mrb[0].mxu0 %v595
    %v663 = vpop.f32.mrb[0].mxu0
    %v664 = vadd.f32 %v591, %v663
    %v665 = vpop.f32.mrb[0].mxu0
    %666 = vdwg.mxu0
    %v667 = vld [vmem:[%s21] sm:$0xff]
    %v668 = vld [vmem:[%s21 + $0x8] sm:$0xff]
    %v669 = vld [vmem:[%s21 + $0x10] sm:$0xff]
    %v670 = vld [vmem:[%s21 + $0x18] sm:$0xff]
    %v671 = vld [vmem:[%s23] sm:$0xff]
    %v672 = vld [vmem:[%s23 + $0x8] sm:$0xff]
    %v673 = vld [vmem:[%s23 + $0x10] sm:$0xff]
    %v674 = vld [vmem:[%s23 + $0x18] sm:$0xff]
    %v675 = vld [vmem:[%s25] sm:$0xff]
    %v676 = vld [vmem:[%s25 + $0x8] sm:$0xff]
    %v677 = vld [vmem:[%s25 + $0x10] sm:$0xff]
    %v678 = vld [vmem:[%s25 + $0x18] sm:$0xff]
    %v679 = vld [vmem:[%s27] sm:$0xff]
    %v680 = vld [vmem:[%s27 + $0x8] sm:$0xff]
    %v681 = vld [vmem:[%s27 + $0x10] sm:$0xff]
    %v682 = vld [vmem:[%s27 + $0x18] sm:$0xff]
    %683 = vrot.lane.b32.xlu0 %v582, 1
    %v684 = vpop.permute.xlu0 %683
    %685 = vrot.lane.b32.xlu0 %v583, 1
    %v686 = vpop.permute.xlu0 %685
    %687 = vrot.lane.b32.xlu0 %v584, 1
    %v688 = vpop.permute.xlu0 %687
    %689 = vrot.lane.b32.xlu0 %v585, 1
    %v690 = vpop.permute.xlu0 %689
    %v691 = vsel %vm295, %v684, %v582
    %v692 = vsel %vm295, %v686, %v583
    %v693 = vsel %vm295, %v688, %v584
    %v694 = vsel %vm295, %v690, %v585
    %v695 = vmax.f32 %v691, %v582
    %v696 = vmax.f32 %v692, %v583
    %v697 = vmax.f32 %v693, %v584
    %v698 = vmax.f32 %v694, %v585
    %699 = vrot.lane.b32.xlu0 %v582, 127
    %v700 = vpop.permute.xlu0 %699
    %701 = vrot.lane.b32.xlu0 %v583, 127
    %v702 = vpop.permute.xlu0 %701
    %703 = vrot.lane.b32.xlu0 %v584, 127
    %v704 = vpop.permute.xlu0 %703
    %705 = vrot.lane.b32.xlu0 %v585, 127
    %v706 = vpop.permute.xlu0 %705
    %v707 = vsel %vm306, %v700, %v582
    %v708 = vsel %vm306, %v702, %v583
    %v709 = vsel %vm306, %v704, %v584
    %v710 = vsel %vm306, %v706, %v585
    %v711 = vmax.f32 %v695, %v707
    %v712 = vmax.f32 %v696, %v708
    %v713 = vmax.f32 %v697, %v709
    %v714 = vmax.f32 %v698, %v710
    %715 = vrot.lane.b32.xlu0 %v664, 3
    %v716 = vpop.permute.xlu0 %715
    %v717 = vsel %vm317, %v716, 0.0
    %718 = vrot.lane.b32.xlu0 %v664, 2
    %v719 = vpop.permute.xlu0 %718
    %v720 = vsel %vm327, %v719, 0.0
    %721 = vrot.lane.b32.xlu0 %v664, 1
    %v722 = vpop.permute.xlu0 %721
    %v723 = vsel %vm295, %v722, 0.0
    %724 = vrot.lane.b32.xlu0 %v664, 127
    %v725 = vpop.permute.xlu0 %724
    %v726 = vsel %vm306, %v725, 0.0
    %727 = vrot.lane.b32.xlu0 %v664, 126
    %v728 = vpop.permute.xlu0 %727
    %v729 = vsel %vm343, %v728, 0.0
    %730 = vrot.lane.b32.xlu0 %v664, 125
    %v731 = vpop.permute.xlu0 %730
    %v732 = vsel %vm353, %v731, 0.0
    %734 = vset.pattern.permute.xlu0 0
    %735 = vperm.xlu0 %734, %v671
    %v736 = vpop.permute.xlu0 %735
    %739 = vset.pattern.permute.xlu0 0
    %740 = vperm.xlu0 %739, %v672
    %v741 = vpop.permute.xlu0 %740
    %744 = vset.pattern.permute.xlu0 0
    %745 = vperm.xlu0 %744, %v673
    %v746 = vpop.permute.xlu0 %745
    %749 = vset.pattern.permute.xlu0 0
    %750 = vperm.xlu0 %749, %v674
    %v751 = vpop.permute.xlu0 %750
    %vm753 = vcmask 719872
    %v755 = vsel %vm753, %v667, 0
    %v758 = vsel %vm753, %v668, 0
    %v761 = vsel %vm753, %v669, 0
    %v764 = vsel %vm753, %v670, 0
    %766 = vmatprep.subr.mxu0 0.0
    %767 = vmatpush1.msra.mxu0 %v717
    %768 = vmatprep.subr.mxu0 0.0
    %769 = vmatpush1.msra.mxu0 %v720
    %770 = vmatprep.subr.mxu0 0.0
    %771 = vmatpush1.msra.mxu0 %v723
    %772 = vmatprep.subr.mxu0 0.0
    %773 = vmatpush1.msra.mxu0 %v664
    %774 = vmatprep.subr.mxu0 0.0
    %775 = vmatpush1.msra.mxu0 %v726
    %776 = vmatprep.subr.mxu0 0.0
    %777 = vmatpush1.msra.mxu0 %v729
    %778 = vmatprep.subr.mxu0 0.0
    %779 = vmatpush1.msra.mxu0 %v732
    %780 = vmatprep.subr.mxu0 0.0
    %781 = vmatpush1.msra.mxu0 %v711
    %782 = vmatprep.subr.mxu0 0.0
    %783 = vmatpush1.msra.mxu0 %v712
    %784 = vmatprep.subr.mxu0 0.0
    %785 = vmatpush1.msra.mxu0 %v713
    %786 = vmatprep.subr.mxu0 0.0
    %787 = vmatpush1.msra.mxu0 %v714
    %788 = vmatprep.subr.mxu0 0.0
    %789 = vmatpush1.msra.mxu0 0.0
    %790 = vmatprep.subr.mxu0 0.0
    %791 = vmatpush1.msra.mxu0 0.0
    %792 = vmatprep.subr.mxu0 0.0
    %793 = vmatpush1.msra.mxu0 0.0
    %794 = vmatprep.subr.mxu0 0.0
    %795 = vmatpush1.msra.mxu0 0.0
    %796 = vmatprep.subr.mxu0 0.0
    %797 = vmatpush1.msra.mxu0 0.0
    %798 = vmatprep.subr.mxu0 0.0
    %799 = vmatpush1.msra.mxu0 0.0
    %800 = vmatprep.subr.mxu0 0.0
    %801 = vmatpush1.msra.mxu0 0.0
    %802 = vmatprep.subr.mxu0 0.0
    %803 = vmatpush1.msra.mxu0 0.0
    %804 = vmatprep.subr.mxu0 0.0
    %805 = vmatpush1.msra.mxu0 0.0
    %806 = vmatprep.subr.mxu0 0.0
    %807 = vmatpush1.msra.mxu0 0.0
    %808 = vmatprep.subr.mxu0 0.0
    %809 = vmatpush1.msra.mxu0 0.0
    %810 = vmatprep.subr.mxu0 0.0
    %811 = vmatpush1.msra.mxu0 0.0
    %812 = vmatprep.subr.mxu0 0.0
    %813 = vmatpush1.msra.mxu0 0.0
    %814 = vmatprep.subr.mxu0 0.0
    %815 = vmatpush1.msra.mxu0 0.0
    %816 = vmatprep.subr.mxu0 0.0
    %817 = vmatpush1.msra.mxu0 0.0
    %818 = vmatprep.subr.mxu0 0.0
    %819 = vmatpush1.msra.mxu0 0.0
    %820 = vmatprep.subr.mxu0 0.0
    %821 = vmatpush1.msra.mxu0 0.0
    %822 = vmatprep.subr.mxu0 0.0
    %823 = vmatpush1.msra.mxu0 0.0
    %824 = vmatprep.subr.mxu0 0.0
    %825 = vmatpush1.msra.mxu0 0.0
    %826 = vmatprep.subr.mxu0 0.0
    %827 = vmatpush1.msra.mxu0 0.0
    %828 = vmatprep.subr.mxu0 0.0
    %829 = vmatpush1.msra.mxu0 0.0
    %830 = vmatprep.mubr.f32.mxu0 0.0
    %831 = vmatmul.mubr.f32.gmra.mrb[0].mxu0 %v755
    %v832 = vpop.f32.mrb[0].mxu0
    %v833 = vadd.f32 %v736, %v832
    %v834 = vpop.f32.mrb[0].mxu0
    %835 = vmatprep.mubr.f32.mxu0 0.0
    %836 = vmatmul.mubr.f32.gmra.mrb[0].mxu0 %v758
    %v837 = vpop.f32.mrb[0].mxu0
    %v838 = vadd.f32 %v741, %v837
    %v839 = vpop.f32.mrb[0].mxu0
    %840 = vmatprep.mubr.f32.mxu0 0.0
    %841 = vmatmul.mubr.f32.gmra.mrb[0].mxu0 %v761
    %v842 = vpop.f32.mrb[0].mxu0
    %v843 = vadd.f32 %v746, %v842
    %v844 = vpop.f32.mrb[0].mxu0
    %845 = vmatprep.mubr.f32.mxu0 0.0
    %846 = vmatmul.mubr.f32.gmra.mrb[0].mxu0 %v764
    %v847 = vpop.f32.mrb[0].mxu0
    %v848 = vadd.f32 %v751, %v847
    %v849 = vpop.f32.mrb[0].mxu0
    %850 = vdwg.mxu0
    %v851 = vsel %vm481, %v833, 0.0
    %v852 = vsel %vm481, %v838, 0.0
    %v853 = vsel %vm481, %v843, 0.0
    %v854 = vsel %vm481, %v848, 0.0
    %855 = vadd.xlane.f32.xlu0 %v851
    %v856 = vpop.xlane.xlu0 %855
    %857 = vadd.xlane.f32.xlu0 %v852
    %v858 = vpop.xlane.xlu0 %857
    %859 = vadd.xlane.f32.xlu0 %v853
    %v860 = vpop.xlane.xlu0 %859
    %861 = vadd.xlane.f32.xlu0 %v854
    %v862 = vpop.xlane.xlu0 %861
    %v863 = vmul.f32 %v856, 0.03125
    %v864 = vmul.f32 %v858, 0.03125
    %v865 = vmul.f32 %v860, 0.03125
    %v866 = vmul.f32 %v862, 0.03125
    %v867 = vsub.f32 %v833, %v863
    %v868 = vsub.f32 %v838, %v864
    %v869 = vsub.f32 %v843, %v865
    %v870 = vsub.f32 %v848, %v866
    %v871 = vsel %vm481, %v867, 0.0
    %v872 = vsel %vm481, %v868, 0.0
    %v873 = vsel %vm481, %v869, 0.0
    %v874 = vsel %vm481, %v870, 0.0
    %v875 = vmul.f32 %v871, %v871
    %v876 = vmul.f32 %v872, %v872
    %v877 = vmul.f32 %v873, %v873
    %v878 = vmul.f32 %v874, %v874
    %879 = vadd.xlane.f32.xlu0 %v875
    %v880 = vpop.xlane.xlu0 %879
    %881 = vadd.xlane.f32.xlu0 %v876
    %v882 = vpop.xlane.xlu0 %881
    %883 = vadd.xlane.f32.xlu0 %v877
    %v884 = vpop.xlane.xlu0 %883
    %885 = vadd.xlane.f32.xlu0 %v878
    %v886 = vpop.xlane.xlu0 %885
    %v887 = vmul.f32 %v880, 0.03125
    %v888 = vmul.f32 %v882, 0.03125
    %v889 = vmul.f32 %v884, 0.03125
    %v890 = vmul.f32 %v886, 0.03125
    %v891 = vadd.f32 %v887, 1e-05
    %v892 = vadd.f32 %v888, 1e-05
    %v893 = vadd.f32 %v889, 1e-05
    %v894 = vadd.f32 %v890, 1e-05
    %v895 = vrsqrt.pop %v891
    %v896 = vrsqrt.pop %v892
    %v897 = vrsqrt.pop %v893
    %v898 = vrsqrt.pop %v894
    %v899 = vmul.f32 %v867, %v895
    %v900 = vmul.f32 %v868, %v896
    %v901 = vmul.f32 %v869, %v897
    %v902 = vmul.f32 %v870, %v898
    %904 = vset.pattern.permute.xlu0 0
    %905 = vperm.xlu0 %904, %v675
    %v906 = vpop.permute.xlu0 %905
    %909 = vset.pattern.permute.xlu0 0
    %910 = vperm.xlu0 %909, %v676
    %v911 = vpop.permute.xlu0 %910
    %914 = vset.pattern.permute.xlu0 0
    %915 = vperm.xlu0 %914, %v677
    %v916 = vpop.permute.xlu0 %915
    %919 = vset.pattern.permute.xlu0 0
    %920 = vperm.xlu0 %919, %v678
    %v921 = vpop.permute.xlu0 %920
    %v923 = vmul.f32 %v899, %v906
    %v924 = vmul.f32 %v900, %v911
    %v925 = vmul.f32 %v901, %v916
    %v926 = vmul.f32 %v902, %v921
    %928 = vset.pattern.permute.xlu0 0
    %929 = vperm.xlu0 %928, %v679
    %v930 = vpop.permute.xlu0 %929
    %933 = vset.pattern.permute.xlu0 0
    %934 = vperm.xlu0 %933, %v680
    %v935 = vpop.permute.xlu0 %934
    %938 = vset.pattern.permute.xlu0 0
    %939 = vperm.xlu0 %938, %v681
    %v940 = vpop.permute.xlu0 %939
    %943 = vset.pattern.permute.xlu0 0
    %944 = vperm.xlu0 %943, %v682
    %v945 = vpop.permute.xlu0 %944
    %v947 = vadd.f32 %v923, %v930
    %v948 = vadd.f32 %v924, %v935
    %v949 = vadd.f32 %v925, %v940
    %v950 = vadd.f32 %v926, %v945
    %v951 = vmax.f32 %v947, 0.0
    %v952 = vmax.f32 %v948, 0.0
    %v953 = vmax.f32 %v949, 0.0
    %v954 = vmax.f32 %v950, 0.0
    %v955 = vld [vmem:[%s29] sm:$0xff]
    %v956 = vld [vmem:[%s31] sm:$0xff]
    %958 = vset.pattern.permute.xlu0 0
    %959 = vperm.xlu0 %958, %v956
    %v960 = vpop.permute.xlu0 %959
    %v963 = vsel %vm593, %v955, 0
    %965 = vmatprep.subr.mxu0 0.0
    %966 = vmatpush1.msra.mxu0 %v951
    %967 = vmatprep.subr.mxu0 0.0
    %968 = vmatpush1.msra.mxu0 %v952
    %969 = vmatprep.subr.mxu0 0.0
    %970 = vmatpush1.msra.mxu0 %v953
    %971 = vmatprep.subr.mxu0 0.0
    %972 = vmatpush1.msra.mxu0 %v954
    %973 = vmatprep.subr.mxu0 0.0
    %974 = vmatpush1.msra.mxu0 0.0
    %975 = vmatprep.subr.mxu0 0.0
    %976 = vmatpush1.msra.mxu0 0.0
    %977 = vmatprep.subr.mxu0 0.0
    %978 = vmatpush1.msra.mxu0 0.0
    %979 = vmatprep.subr.mxu0 0.0
    %980 = vmatpush1.msra.mxu0 0.0
    %981 = vmatprep.subr.mxu0 0.0
    %982 = vmatpush1.msra.mxu0 0.0
    %983 = vmatprep.subr.mxu0 0.0
    %984 = vmatpush1.msra.mxu0 0.0
    %985 = vmatprep.subr.mxu0 0.0
    %986 = vmatpush1.msra.mxu0 0.0
    %987 = vmatprep.subr.mxu0 0.0
    %988 = vmatpush1.msra.mxu0 0.0
    %989 = vmatprep.subr.mxu0 0.0
    %990 = vmatpush1.msra.mxu0 0.0
    %991 = vmatprep.subr.mxu0 0.0
    %992 = vmatpush1.msra.mxu0 0.0
    %993 = vmatprep.subr.mxu0 0.0
    %994 = vmatpush1.msra.mxu0 0.0
    %995 = vmatprep.subr.mxu0 0.0
    %996 = vmatpush1.msra.mxu0 0.0
    %997 = vmatprep.subr.mxu0 0.0
    %998 = vmatpush1.msra.mxu0 0.0
    %999 = vmatprep.subr.mxu0 0.0
    %1000 = vmatpush1.msra.mxu0 0.0
    %1001 = vmatprep.subr.mxu0 0.0
    %1002 = vmatpush1.msra.mxu0 0.0
    %1003 = vmatprep.subr.mxu0 0.0
    %1004 = vmatpush1.msra.mxu0 0.0
    %1005 = vmatprep.subr.mxu0 0.0
    %1006 = vmatpush1.msra.mxu0 0.0
    %1007 = vmatprep.subr.mxu0 0.0
    %1008 = vmatpush1.msra.mxu0 0.0
    %1009 = vmatprep.subr.mxu0 0.0
    %1010 = vmatpush1.msra.mxu0 0.0
    %1011 = vmatprep.subr.mxu0 0.0
    %1012 = vmatpush1.msra.mxu0 0.0
    %1013 = vmatprep.subr.mxu0 0.0
    %1014 = vmatpush1.msra.mxu0 0.0
    %1015 = vmatprep.subr.mxu0 0.0
    %1016 = vmatpush1.msra.mxu0 0.0
    %1017 = vmatprep.subr.mxu0 0.0
    %1018 = vmatpush1.msra.mxu0 0.0
    %1019 = vmatprep.subr.mxu0 0.0
    %1020 = vmatpush1.msra.mxu0 0.0
    %1021 = vmatprep.subr.mxu0 0.0
    %1022 = vmatpush1.msra.mxu0 0.0
    %1023 = vmatprep.subr.mxu0 0.0
    %1024 = vmatpush1.msra.mxu0 0.0
    %1025 = vmatprep.subr.mxu0 0.0
    %1026 = vmatpush1.msra.mxu0 0.0
    %1027 = vmatprep.subr.mxu0 0.0
    %1028 = vmatpush1.msra.mxu0 0.0
    %1029 = vmatprep.mubr.f32.mxu0 0.0
    %1030 = vmatmul.mubr.f32.gmra.mrb[0].mxu0 %v963
    %v1031 = vpop.f32.mrb[0].mxu0
    %v1032 = vadd.f32 %v960, %v1031
    %v1033 = vpop.f32.mrb[0].mxu0
    %1034 = vdwg.mxu0
    %v1035 = vld [vmem:[%s33] sm:$0xff]
    %v1036 = vld [vmem:[%s33 + $0x8] sm:$0xff]
    %v1037 = vld [vmem:[%s33 + $0x10] sm:$0xff]
    %v1038 = vld [vmem:[%s33 + $0x18] sm:$0xff]
    %v1039 = vld [vmem:[%s35] sm:$0xff]
    %v1040 = vld [vmem:[%s35 + $0x8] sm:$0xff]
    %v1041 = vld [vmem:[%s35 + $0x10] sm:$0xff]
    %v1042 = vld [vmem:[%s35 + $0x18] sm:$0xff]
    %v1043 = vld [vmem:[%s37] sm:$0xff]
    %v1044 = vld [vmem:[%s37 + $0x8] sm:$0xff]
    %v1045 = vld [vmem:[%s37 + $0x10] sm:$0xff]
    %v1046 = vld [vmem:[%s37 + $0x18] sm:$0xff]
    %v1047 = vld [vmem:[%s39] sm:$0xff]
    %v1048 = vld [vmem:[%s39 + $0x8] sm:$0xff]
    %v1049 = vld [vmem:[%s39 + $0x10] sm:$0xff]
    %v1050 = vld [vmem:[%s39 + $0x18] sm:$0xff]
    %1051 = vrot.lane.b32.xlu0 %v951, 1
    %v1052 = vpop.permute.xlu0 %1051
    %1053 = vrot.lane.b32.xlu0 %v952, 1
    %v1054 = vpop.permute.xlu0 %1053
    %1055 = vrot.lane.b32.xlu0 %v953, 1
    %v1056 = vpop.permute.xlu0 %1055
    %1057 = vrot.lane.b32.xlu0 %v954, 1
    %v1058 = vpop.permute.xlu0 %1057
    %v1059 = vsel %vm295, %v1052, %v951
    %v1060 = vsel %vm295, %v1054, %v952
    %v1061 = vsel %vm295, %v1056, %v953
    %v1062 = vsel %vm295, %v1058, %v954
    %v1063 = vmax.f32 %v1059, %v951
    %v1064 = vmax.f32 %v1060, %v952
    %v1065 = vmax.f32 %v1061, %v953
    %v1066 = vmax.f32 %v1062, %v954
    %1067 = vrot.lane.b32.xlu0 %v951, 127
    %v1068 = vpop.permute.xlu0 %1067
    %1069 = vrot.lane.b32.xlu0 %v952, 127
    %v1070 = vpop.permute.xlu0 %1069
    %1071 = vrot.lane.b32.xlu0 %v953, 127
    %v1072 = vpop.permute.xlu0 %1071
    %1073 = vrot.lane.b32.xlu0 %v954, 127
    %v1074 = vpop.permute.xlu0 %1073
    %v1075 = vsel %vm306, %v1068, %v951
    %v1076 = vsel %vm306, %v1070, %v952
    %v1077 = vsel %vm306, %v1072, %v953
    %v1078 = vsel %vm306, %v1074, %v954
    %v1079 = vmax.f32 %v1063, %v1075
    %v1080 = vmax.f32 %v1064, %v1076
    %v1081 = vmax.f32 %v1065, %v1077
    %v1082 = vmax.f32 %v1066, %v1078
    %1083 = vrot.lane.b32.xlu0 %v1032, 3
    %v1084 = vpop.permute.xlu0 %1083
    %v1085 = vsel %vm317, %v1084, 0.0
    %1086 = vrot.lane.b32.xlu0 %v1032, 2
    %v1087 = vpop.permute.xlu0 %1086
    %v1088 = vsel %vm327, %v1087, 0.0
    %1089 = vrot.lane.b32.xlu0 %v1032, 1
    %v1090 = vpop.permute.xlu0 %1089
    %v1091 = vsel %vm295, %v1090, 0.0
    %1092 = vrot.lane.b32.xlu0 %v1032, 127
    %v1093 = vpop.permute.xlu0 %1092
    %v1094 = vsel %vm306, %v1093, 0.0
    %1095 = vrot.lane.b32.xlu0 %v1032, 126
    %v1096 = vpop.permute.xlu0 %1095
    %v1097 = vsel %vm343, %v1096, 0.0
    %1098 = vrot.lane.b32.xlu0 %v1032, 125
    %v1099 = vpop.permute.xlu0 %1098
    %v1100 = vsel %vm353, %v1099, 0.0
    %1102 = vset.pattern.permute.xlu0 0
    %1103 = vperm.xlu0 %1102, %v1039
    %v1104 = vpop.permute.xlu0 %1103
    %1107 = vset.pattern.permute.xlu0 0
    %1108 = vperm.xlu0 %1107, %v1040
    %v1109 = vpop.permute.xlu0 %1108
    %1112 = vset.pattern.permute.xlu0 0
    %1113 = vperm.xlu0 %1112, %v1041
    %v1114 = vpop.permute.xlu0 %1113
    %1117 = vset.pattern.permute.xlu0 0
    %1118 = vperm.xlu0 %1117, %v1042
    %v1119 = vpop.permute.xlu0 %1118
    %v1122 = vsel %vm753, %v1035, 0
    %v1125 = vsel %vm753, %v1036, 0
    %v1128 = vsel %vm753, %v1037, 0
    %v1131 = vsel %vm753, %v1038, 0
    %1133 = vmatprep.subr.mxu0 0.0
    %1134 = vmatpush1.msra.mxu0 %v1085
    %1135 = vmatprep.subr.mxu0 0.0
    %1136 = vmatpush1.msra.mxu0 %v1088
    %1137 = vmatprep.subr.mxu0 0.0
    %1138 = vmatpush1.msra.mxu0 %v1091
    %1139 = vmatprep.subr.mxu0 0.0
    %1140 = vmatpush1.msra.mxu0 %v1032
    %1141 = vmatprep.subr.mxu0 0.0
    %1142 = vmatpush1.msra.mxu0 %v1094
    %1143 = vmatprep.subr.mxu0 0.0
    %1144 = vmatpush1.msra.mxu0 %v1097
    %1145 = vmatprep.subr.mxu0 0.0
    %1146 = vmatpush1.msra.mxu0 %v1100
    %1147 = vmatprep.subr.mxu0 0.0
    %1148 = vmatpush1.msra.mxu0 %v1079
    %1149 = vmatprep.subr.mxu0 0.0
    %1150 = vmatpush1.msra.mxu0 %v1080
    %1151 = vmatprep.subr.mxu0 0.0
    %1152 = vmatpush1.msra.mxu0 %v1081
    %1153 = vmatprep.subr.mxu0 0.0
    %1154 = vmatpush1.msra.mxu0 %v1082
    %1155 = vmatprep.subr.mxu0 0.0
    %1156 = vmatpush1.msra.mxu0 0.0
    %1157 = vmatprep.subr.mxu0 0.0
    %1158 = vmatpush1.msra.mxu0 0.0
    %1159 = vmatprep.subr.mxu0 0.0
    %1160 = vmatpush1.msra.mxu0 0.0
    %1161 = vmatprep.subr.mxu0 0.0
    %1162 = vmatpush1.msra.mxu0 0.0
    %1163 = vmatprep.subr.mxu0 0.0
    %1164 = vmatpush1.msra.mxu0 0.0
    %1165 = vmatprep.subr.mxu0 0.0
    %1166 = vmatpush1.msra.mxu0 0.0
    %1167 = vmatprep.subr.mxu0 0.0
    %1168 = vmatpush1.msra.mxu0 0.0
    %1169 = vmatprep.subr.mxu0 0.0
    %1170 = vmatpush1.msra.mxu0 0.0
    %1171 = vmatprep.subr.mxu0 0.0
    %1172 = vmatpush1.msra.mxu0 0.0
    %1173 = vmatprep.subr.mxu0 0.0
    %1174 = vmatpush1.msra.mxu0 0.0
    %1175 = vmatprep.subr.mxu0 0.0
    %1176 = vmatpush1.msra.mxu0 0.0
    %1177 = vmatprep.subr.mxu0 0.0
    %1178 = vmatpush1.msra.mxu0 0.0
    %1179 = vmatprep.subr.mxu0 0.0
    %1180 = vmatpush1.msra.mxu0 0.0
    %1181 = vmatprep.subr.mxu0 0.0
    %1182 = vmatpush1.msra.mxu0 0.0
    %1183 = vmatprep.subr.mxu0 0.0
    %1184 = vmatpush1.msra.mxu0 0.0
    %1185 = vmatprep.subr.mxu0 0.0
    %1186 = vmatpush1.msra.mxu0 0.0
    %1187 = vmatprep.subr.mxu0 0.0
    %1188 = vmatpush1.msra.mxu0 0.0
    %1189 = vmatprep.subr.mxu0 0.0
    %1190 = vmatpush1.msra.mxu0 0.0
    %1191 = vmatprep.subr.mxu0 0.0
    %1192 = vmatpush1.msra.mxu0 0.0
    %1193 = vmatprep.subr.mxu0 0.0
    %1194 = vmatpush1.msra.mxu0 0.0
    %1195 = vmatprep.subr.mxu0 0.0
    %1196 = vmatpush1.msra.mxu0 0.0
    %1197 = vmatprep.mubr.f32.mxu0 0.0
    %1198 = vmatmul.mubr.f32.gmra.mrb[0].mxu0 %v1122
    %v1199 = vpop.f32.mrb[0].mxu0
    %v1200 = vadd.f32 %v1104, %v1199
    %v1201 = vpop.f32.mrb[0].mxu0
    %1202 = vmatprep.mubr.f32.mxu0 0.0
    %1203 = vmatmul.mubr.f32.gmra.mrb[0].mxu0 %v1125
    %v1204 = vpop.f32.mrb[0].mxu0
    %v1205 = vadd.f32 %v1109, %v1204
    %v1206 = vpop.f32.mrb[0].mxu0
    %1207 = vmatprep.mubr.f32.mxu0 0.0
    %1208 = vmatmul.mubr.f32.gmra.mrb[0].mxu0 %v1128
    %v1209 = vpop.f32.mrb[0].mxu0
    %v1210 = vadd.f32 %v1114, %v1209
    %v1211 = vpop.f32.mrb[0].mxu0
    %1212 = vmatprep.mubr.f32.mxu0 0.0
    %1213 = vmatmul.mubr.f32.gmra.mrb[0].mxu0 %v1131
    %v1214 = vpop.f32.mrb[0].mxu0
    %v1215 = vadd.f32 %v1119, %v1214
    %v1216 = vpop.f32.mrb[0].mxu0
    %1217 = vdwg.mxu0
    %v1218 = vsel %vm481, %v1200, 0.0
    %v1219 = vsel %vm481, %v1205, 0.0
    %v1220 = vsel %vm481, %v1210, 0.0
    %v1221 = vsel %vm481, %v1215, 0.0
    %1222 = vadd.xlane.f32.xlu0 %v1218
    %v1223 = vpop.xlane.xlu0 %1222
    %1224 = vadd.xlane.f32.xlu0 %v1219
    %v1225 = vpop.xlane.xlu0 %1224
    %1226 = vadd.xlane.f32.xlu0 %v1220
    %v1227 = vpop.xlane.xlu0 %1226
    %1228 = vadd.xlane.f32.xlu0 %v1221
    %v1229 = vpop.xlane.xlu0 %1228
    %v1230 = vmul.f32 %v1223, 0.03125
    %v1231 = vmul.f32 %v1225, 0.03125
    %v1232 = vmul.f32 %v1227, 0.03125
    %v1233 = vmul.f32 %v1229, 0.03125
    %v1234 = vsub.f32 %v1200, %v1230
    %v1235 = vsub.f32 %v1205, %v1231
    %v1236 = vsub.f32 %v1210, %v1232
    %v1237 = vsub.f32 %v1215, %v1233
    %v1238 = vsel %vm481, %v1234, 0.0
    %v1239 = vsel %vm481, %v1235, 0.0
    %v1240 = vsel %vm481, %v1236, 0.0
    %v1241 = vsel %vm481, %v1237, 0.0
    %v1242 = vmul.f32 %v1238, %v1238
    %v1243 = vmul.f32 %v1239, %v1239
    %v1244 = vmul.f32 %v1240, %v1240
    %v1245 = vmul.f32 %v1241, %v1241
    %1246 = vadd.xlane.f32.xlu0 %v1242
    %v1247 = vpop.xlane.xlu0 %1246
    %1248 = vadd.xlane.f32.xlu0 %v1243
    %v1249 = vpop.xlane.xlu0 %1248
    %1250 = vadd.xlane.f32.xlu0 %v1244
    %v1251 = vpop.xlane.xlu0 %1250
    %1252 = vadd.xlane.f32.xlu0 %v1245
    %v1253 = vpop.xlane.xlu0 %1252
    %v1254 = vmul.f32 %v1247, 0.03125
    %v1255 = vmul.f32 %v1249, 0.03125
    %v1256 = vmul.f32 %v1251, 0.03125
    %v1257 = vmul.f32 %v1253, 0.03125
    %v1258 = vadd.f32 %v1254, 1e-05
    %v1259 = vadd.f32 %v1255, 1e-05
    %v1260 = vadd.f32 %v1256, 1e-05
    %v1261 = vadd.f32 %v1257, 1e-05
    %v1262 = vrsqrt.pop %v1258
    %v1263 = vrsqrt.pop %v1259
    %v1264 = vrsqrt.pop %v1260
    %v1265 = vrsqrt.pop %v1261
    %v1266 = vmul.f32 %v1234, %v1262
    %v1267 = vmul.f32 %v1235, %v1263
    %v1268 = vmul.f32 %v1236, %v1264
    %v1269 = vmul.f32 %v1237, %v1265
    %1271 = vset.pattern.permute.xlu0 0
    %1272 = vperm.xlu0 %1271, %v1043
    %v1273 = vpop.permute.xlu0 %1272
    %1276 = vset.pattern.permute.xlu0 0
    %1277 = vperm.xlu0 %1276, %v1044
    %v1278 = vpop.permute.xlu0 %1277
    %1281 = vset.pattern.permute.xlu0 0
    %1282 = vperm.xlu0 %1281, %v1045
    %v1283 = vpop.permute.xlu0 %1282
    %1286 = vset.pattern.permute.xlu0 0
    %1287 = vperm.xlu0 %1286, %v1046
    %v1288 = vpop.permute.xlu0 %1287
    %v1290 = vmul.f32 %v1266, %v1273
    %v1291 = vmul.f32 %v1267, %v1278
    %v1292 = vmul.f32 %v1268, %v1283
    %v1293 = vmul.f32 %v1269, %v1288
    %1295 = vset.pattern.permute.xlu0 0
    %1296 = vperm.xlu0 %1295, %v1047
    %v1297 = vpop.permute.xlu0 %1296
    %1300 = vset.pattern.permute.xlu0 0
    %1301 = vperm.xlu0 %1300, %v1048
    %v1302 = vpop.permute.xlu0 %1301
    %1305 = vset.pattern.permute.xlu0 0
    %1306 = vperm.xlu0 %1305, %v1049
    %v1307 = vpop.permute.xlu0 %1306
    %1310 = vset.pattern.permute.xlu0 0
    %1311 = vperm.xlu0 %1310, %v1050
    %v1312 = vpop.permute.xlu0 %1311
    %v1314 = vadd.f32 %v1290, %v1297
    %v1315 = vadd.f32 %v1291, %v1302
    %v1316 = vadd.f32 %v1292, %v1307
    %v1317 = vadd.f32 %v1293, %v1312
    %v1318 = vmax.f32 %v1314, 0.0
    %v1319 = vmax.f32 %v1315, 0.0
    %v1320 = vmax.f32 %v1316, 0.0
    %v1321 = vmax.f32 %v1317, 0.0
    %v1322 = vld [vmem:[%s41] sm:$0xff]
    %v1323 = vld [vmem:[%s41 + $0x8] sm:$0xff]
    %v1324 = vld [vmem:[%s41 + $0x10] sm:$0xff]
    %v1325 = vld [vmem:[%s41 + $0x18] sm:$0xff]
    %v1326 = vld [vmem:[%s43] sm:$0xff]
    %v1327 = vld [vmem:[%s43 + $0x8] sm:$0xff]
    %v1328 = vld [vmem:[%s43 + $0x10] sm:$0xff]
    %v1329 = vld [vmem:[%s43 + $0x18] sm:$0xff]
    %1331 = vset.pattern.permute.xlu0 0
    %1332 = vperm.xlu0 %1331, %v1326
    %v1333 = vpop.permute.xlu0 %1332
    %1336 = vset.pattern.permute.xlu0 0
    %1337 = vperm.xlu0 %1336, %v1327
    %v1338 = vpop.permute.xlu0 %1337
    %1341 = vset.pattern.permute.xlu0 0
    %1342 = vperm.xlu0 %1341, %v1328
    %v1343 = vpop.permute.xlu0 %1342
    %1346 = vset.pattern.permute.xlu0 0
    %1347 = vperm.xlu0 %1346, %v1329
    %v1348 = vpop.permute.xlu0 %1347
    %v1351 = vsel %vm193, %v1322, 0
    %v1354 = vsel %vm193, %v1323, 0
    %v1357 = vsel %vm193, %v1324, 0
    %v1360 = vsel %vm193, %v1325, 0
    %1362 = vmatprep.subr.mxu0 0.0
    %1363 = vmatpush1.msra.mxu0 %v199
    %1364 = vmatprep.subr.mxu0 0.0
    %1365 = vmatpush1.msra.mxu0 0.0
    %1366 = vmatprep.subr.mxu0 0.0
    %1367 = vmatpush1.msra.mxu0 0.0
    %1368 = vmatprep.subr.mxu0 0.0
    %1369 = vmatpush1.msra.mxu0 0.0
    %1370 = vmatprep.subr.mxu0 0.0
    %1371 = vmatpush1.msra.mxu0 0.0
    %1372 = vmatprep.subr.mxu0 0.0
    %1373 = vmatpush1.msra.mxu0 0.0
    %1374 = vmatprep.subr.mxu0 0.0
    %1375 = vmatpush1.msra.mxu0 0.0
    %1376 = vmatprep.subr.mxu0 0.0
    %1377 = vmatpush1.msra.mxu0 0.0
    %1378 = vmatprep.subr.mxu0 0.0
    %1379 = vmatpush1.msra.mxu0 0.0
    %1380 = vmatprep.subr.mxu0 0.0
    %1381 = vmatpush1.msra.mxu0 0.0
    %1382 = vmatprep.subr.mxu0 0.0
    %1383 = vmatpush1.msra.mxu0 0.0
    %1384 = vmatprep.subr.mxu0 0.0
    %1385 = vmatpush1.msra.mxu0 0.0
    %1386 = vmatprep.subr.mxu0 0.0
    %1387 = vmatpush1.msra.mxu0 0.0
    %1388 = vmatprep.subr.mxu0 0.0
    %1389 = vmatpush1.msra.mxu0 0.0
    %1390 = vmatprep.subr.mxu0 0.0
    %1391 = vmatpush1.msra.mxu0 0.0
    %1392 = vmatprep.subr.mxu0 0.0
    %1393 = vmatpush1.msra.mxu0 0.0
    %1394 = vmatprep.subr.mxu0 0.0
    %1395 = vmatpush1.msra.mxu0 0.0
    %1396 = vmatprep.subr.mxu0 0.0
    %1397 = vmatpush1.msra.mxu0 0.0
    %1398 = vmatprep.subr.mxu0 0.0
    %1399 = vmatpush1.msra.mxu0 0.0
    %1400 = vmatprep.subr.mxu0 0.0
    %1401 = vmatpush1.msra.mxu0 0.0
    %1402 = vmatprep.subr.mxu0 0.0
    %1403 = vmatpush1.msra.mxu0 0.0
    %1404 = vmatprep.subr.mxu0 0.0
    %1405 = vmatpush1.msra.mxu0 0.0
    %1406 = vmatprep.subr.mxu0 0.0
    %1407 = vmatpush1.msra.mxu0 0.0
    %1408 = vmatprep.subr.mxu0 0.0
    %1409 = vmatpush1.msra.mxu0 0.0
    %1410 = vmatprep.subr.mxu0 0.0
    %1411 = vmatpush1.msra.mxu0 0.0
    %1412 = vmatprep.subr.mxu0 0.0
    %1413 = vmatpush1.msra.mxu0 0.0
    %1414 = vmatprep.subr.mxu0 0.0
    %1415 = vmatpush1.msra.mxu0 0.0
    %1416 = vmatprep.subr.mxu0 0.0
    %1417 = vmatpush1.msra.mxu0 0.0
    %1418 = vmatprep.subr.mxu0 0.0
    %1419 = vmatpush1.msra.mxu0 0.0
    %1420 = vmatprep.subr.mxu0 0.0
    %1421 = vmatpush1.msra.mxu0 0.0
    %1422 = vmatprep.subr.mxu0 0.0
    %1423 = vmatpush1.msra.mxu0 0.0
    %1424 = vmatprep.subr.mxu0 0.0
    %1425 = vmatpush1.msra.mxu0 0.0
    %1426 = vmatprep.mubr.f32.mxu0 0.0
    %1427 = vmatmul.mubr.f32.gmra.mrb[0].mxu0 %v1351
    %v1428 = vpop.f32.mrb[0].mxu0
    %v1429 = vadd.f32 %v1333, %v1428
    %v1430 = vpop.f32.mrb[0].mxu0
    %1431 = vmatprep.mubr.f32.mxu0 0.0
    %1432 = vmatmul.mubr.f32.gmra.mrb[0].mxu0 %v1354
    %v1433 = vpop.f32.mrb[0].mxu0
    %v1434 = vadd.f32 %v1338, %v1433
    %v1435 = vpop.f32.mrb[0].mxu0
    %1436 = vmatprep.mubr.f32.mxu0 0.0
    %1437 = vmatmul.mubr.f32.gmra.mrb[0].mxu0 %v1357
    %v1438 = vpop.f32.mrb[0].mxu0
    %v1439 = vadd.f32 %v1343, %v1438
    %v1440 = vpop.f32.mrb[0].mxu0
    %1441 = vmatprep.mubr.f32.mxu0 0.0
    %1442 = vmatmul.mubr.f32.gmra.mrb[0].mxu0 %v1360
    %v1443 = vpop.f32.mrb[0].mxu0
    %v1444 = vadd.f32 %v1348, %v1443
    %v1445 = vpop.f32.mrb[0].mxu0
    %1446 = vdwg.mxu0
    %v1447 = vld [vmem:[%s45] sm:$0xff]
    %v1448 = vld [vmem:[%s45 + $0x8] sm:$0xff]
    %v1449 = vld [vmem:[%s45 + $0x10] sm:$0xff]
    %v1450 = vld [vmem:[%s45 + $0x18] sm:$0xff]
    %v1451 = vld [vmem:[%s47] sm:$0xff]
    %v1452 = vld [vmem:[%s47 + $0x8] sm:$0xff]
    %v1453 = vld [vmem:[%s47 + $0x10] sm:$0xff]
    %v1454 = vld [vmem:[%s47 + $0x18] sm:$0xff]
    %v1455 = vsel %vm481, %v1429, 0.0
    %v1456 = vsel %vm481, %v1434, 0.0
    %v1457 = vsel %vm481, %v1439, 0.0
    %v1458 = vsel %vm481, %v1444, 0.0
    %1459 = vadd.xlane.f32.xlu0 %v1455
    %v1460 = vpop.xlane.xlu0 %1459
    %1461 = vadd.xlane.f32.xlu0 %v1456
    %v1462 = vpop.xlane.xlu0 %1461
    %1463 = vadd.xlane.f32.xlu0 %v1457
    %v1464 = vpop.xlane.xlu0 %1463
    %1465 = vadd.xlane.f32.xlu0 %v1458
    %v1466 = vpop.xlane.xlu0 %1465
    %v1467 = vmul.f32 %v1460, 0.03125
    %v1468 = vmul.f32 %v1462, 0.03125
    %v1469 = vmul.f32 %v1464, 0.03125
    %v1470 = vmul.f32 %v1466, 0.03125
    %v1471 = vsub.f32 %v1429, %v1467
    %v1472 = vsub.f32 %v1434, %v1468
    %v1473 = vsub.f32 %v1439, %v1469
    %v1474 = vsub.f32 %v1444, %v1470
    %v1475 = vsel %vm481, %v1471, 0.0
    %v1476 = vsel %vm481, %v1472, 0.0
    %v1477 = vsel %vm481, %v1473, 0.0
    %v1478 = vsel %vm481, %v1474, 0.0
    %v1479 = vmul.f32 %v1475, %v1475
    %v1480 = vmul.f32 %v1476, %v1476
    %v1481 = vmul.f32 %v1477, %v1477
    %v1482 = vmul.f32 %v1478, %v1478
    %1483 = vadd.xlane.f32.xlu0 %v1479
    %v1484 = vpop.xlane.xlu0 %1483
    %1485 = vadd.xlane.f32.xlu0 %v1480
    %v1486 = vpop.xlane.xlu0 %1485
    %1487 = vadd.xlane.f32.xlu0 %v1481
    %v1488 = vpop.xlane.xlu0 %1487
    %1489 = vadd.xlane.f32.xlu0 %v1482
    %v1490 = vpop.xlane.xlu0 %1489
    %v1491 = vmul.f32 %v1484, 0.03125
    %v1492 = vmul.f32 %v1486, 0.03125
    %v1493 = vmul.f32 %v1488, 0.03125
    %v1494 = vmul.f32 %v1490, 0.03125
    %v1495 = vadd.f32 %v1491, 1e-05
    %v1496 = vadd.f32 %v1492, 1e-05
    %v1497 = vadd.f32 %v1493, 1e-05
    %v1498 = vadd.f32 %v1494, 1e-05
    %v1499 = vrsqrt.pop %v1495
    %v1500 = vrsqrt.pop %v1496
    %v1501 = vrsqrt.pop %v1497
    %v1502 = vrsqrt.pop %v1498
    %v1503 = vmul.f32 %v1471, %v1499
    %v1504 = vmul.f32 %v1472, %v1500
    %v1505 = vmul.f32 %v1473, %v1501
    %v1506 = vmul.f32 %v1474, %v1502
    %1508 = vset.pattern.permute.xlu0 0
    %1509 = vperm.xlu0 %1508, %v1447
    %v1510 = vpop.permute.xlu0 %1509
    %1513 = vset.pattern.permute.xlu0 0
    %1514 = vperm.xlu0 %1513, %v1448
    %v1515 = vpop.permute.xlu0 %1514
    %1518 = vset.pattern.permute.xlu0 0
    %1519 = vperm.xlu0 %1518, %v1449
    %v1520 = vpop.permute.xlu0 %1519
    %1523 = vset.pattern.permute.xlu0 0
    %1524 = vperm.xlu0 %1523, %v1450
    %v1525 = vpop.permute.xlu0 %1524
    %v1527 = vmul.f32 %v1503, %v1510
    %v1528 = vmul.f32 %v1504, %v1515
    %v1529 = vmul.f32 %v1505, %v1520
    %v1530 = vmul.f32 %v1506, %v1525
    %v1531 = vadd.f32 %v1318, %v1527
    %v1532 = vadd.f32 %v1319, %v1528
    %v1533 = vadd.f32 %v1320, %v1529
    %v1534 = vadd.f32 %v1321, %v1530
    %1536 = vset.pattern.permute.xlu0 0
    %1537 = vperm.xlu0 %1536, %v1451
    %v1538 = vpop.permute.xlu0 %1537
    %1541 = vset.pattern.permute.xlu0 0
    %1542 = vperm.xlu0 %1541, %v1452
    %v1543 = vpop.permute.xlu0 %1542
    %1546 = vset.pattern.permute.xlu0 0
    %1547 = vperm.xlu0 %1546, %v1453
    %v1548 = vpop.permute.xlu0 %1547
    %1551 = vset.pattern.permute.xlu0 0
    %1552 = vperm.xlu0 %1551, %v1454
    %v1553 = vpop.permute.xlu0 %1552
    %v1555 = vadd.f32 %v1531, %v1538
    %v1556 = vadd.f32 %v1532, %v1543
    %v1557 = vadd.f32 %v1533, %v1548
    %v1558 = vadd.f32 %v1534, %v1553
    %v1559 = vmax.f32 %v1555, 0.0
    %v1560 = vmax.f32 %v1556, 0.0
    %v1561 = vmax.f32 %v1557, 0.0
    %v1562 = vmax.f32 %v1558, 0.0
    %v1563 = vld [vmem:[%s49] sm:$0xff]
    %v1564 = vld [vmem:[%s51] sm:$0xff]
    %1566 = vset.pattern.permute.xlu0 0
    %1567 = vperm.xlu0 %1566, %v1564
    %v1568 = vpop.permute.xlu0 %1567
    %v1571 = vsel %vm593, %v1563, 0
    %1573 = vmatprep.subr.mxu0 0.0
    %1574 = vmatpush1.msra.mxu0 %v1559
    %1575 = vmatprep.subr.mxu0 0.0
    %1576 = vmatpush1.msra.mxu0 %v1560
    %1577 = vmatprep.subr.mxu0 0.0
    %1578 = vmatpush1.msra.mxu0 %v1561
    %1579 = vmatprep.subr.mxu0 0.0
    %1580 = vmatpush1.msra.mxu0 %v1562
    %1581 = vmatprep.subr.mxu0 0.0
    %1582 = vmatpush1.msra.mxu0 0.0
    %1583 = vmatprep.subr.mxu0 0.0
    %1584 = vmatpush1.msra.mxu0 0.0
    %1585 = vmatprep.subr.mxu0 0.0
    %1586 = vmatpush1.msra.mxu0 0.0
    %1587 = vmatprep.subr.mxu0 0.0
    %1588 = vmatpush1.msra.mxu0 0.0
    %1589 = vmatprep.subr.mxu0 0.0
    %1590 = vmatpush1.msra.mxu0 0.0
    %1591 = vmatprep.subr.mxu0 0.0
    %1592 = vmatpush1.msra.mxu0 0.0
    %1593 = vmatprep.subr.mxu0 0.0
    %1594 = vmatpush1.msra.mxu0 0.0
    %1595 = vmatprep.subr.mxu0 0.0
    %1596 = vmatpush1.msra.mxu0 0.0
    %1597 = vmatprep.subr.mxu0 0.0
    %1598 = vmatpush1.msra.mxu0 0.0
    %1599 = vmatprep.subr.mxu0 0.0
    %1600 = vmatpush1.msra.mxu0 0.0
    %1601 = vmatprep.subr.mxu0 0.0
    %1602 = vmatpush1.msra.mxu0 0.0
    %1603 = vmatprep.subr.mxu0 0.0
    %1604 = vmatpush1.msra.mxu0 0.0
    %1605 = vmatprep.subr.mxu0 0.0
    %1606 = vmatpush1.msra.mxu0 0.0
    %1607 = vmatprep.subr.mxu0 0.0
    %1608 = vmatpush1.msra.mxu0 0.0
    %1609 = vmatprep.subr.mxu0 0.0
    %1610 = vmatpush1.msra.mxu0 0.0
    %1611 = vmatprep.subr.mxu0 0.0
    %1612 = vmatpush1.msra.mxu0 0.0
    %1613 = vmatprep.subr.mxu0 0.0
    %1614 = vmatpush1.msra.mxu0 0.0
    %1615 = vmatprep.subr.mxu0 0.0
    %1616 = vmatpush1.msra.mxu0 0.0
    %1617 = vmatprep.subr.mxu0 0.0
    %1618 = vmatpush1.msra.mxu0 0.0
    %1619 = vmatprep.subr.mxu0 0.0
    %1620 = vmatpush1.msra.mxu0 0.0
    %1621 = vmatprep.subr.mxu0 0.0
    %1622 = vmatpush1.msra.mxu0 0.0
    %1623 = vmatprep.subr.mxu0 0.0
    %1624 = vmatpush1.msra.mxu0 0.0
    %1625 = vmatprep.subr.mxu0 0.0
    %1626 = vmatpush1.msra.mxu0 0.0
    %1627 = vmatprep.subr.mxu0 0.0
    %1628 = vmatpush1.msra.mxu0 0.0
    %1629 = vmatprep.subr.mxu0 0.0
    %1630 = vmatpush1.msra.mxu0 0.0
    %1631 = vmatprep.subr.mxu0 0.0
    %1632 = vmatpush1.msra.mxu0 0.0
    %1633 = vmatprep.subr.mxu0 0.0
    %1634 = vmatpush1.msra.mxu0 0.0
    %1635 = vmatprep.subr.mxu0 0.0
    %1636 = vmatpush1.msra.mxu0 0.0
    %1637 = vmatprep.mubr.f32.mxu0 0.0
    %1638 = vmatmul.mubr.f32.gmra.mrb[0].mxu0 %v1571
    %v1639 = vpop.f32.mrb[0].mxu0
    %v1640 = vadd.f32 %v1568, %v1639
    %v1641 = vpop.f32.mrb[0].mxu0
    %1642 = vdwg.mxu0
    %v1643 = vld [vmem:[%s53] sm:$0xff]
    %v1644 = vld [vmem:[%s53 + $0x8] sm:$0xff]
    %v1645 = vld [vmem:[%s53 + $0x10] sm:$0xff]
    %v1646 = vld [vmem:[%s53 + $0x18] sm:$0xff]
    %v1647 = vld [vmem:[%s55] sm:$0xff]
    %v1648 = vld [vmem:[%s55 + $0x8] sm:$0xff]
    %v1649 = vld [vmem:[%s55 + $0x10] sm:$0xff]
    %v1650 = vld [vmem:[%s55 + $0x18] sm:$0xff]
    %v1651 = vld [vmem:[%s57] sm:$0xff]
    %v1652 = vld [vmem:[%s57 + $0x8] sm:$0xff]
    %v1653 = vld [vmem:[%s57 + $0x10] sm:$0xff]
    %v1654 = vld [vmem:[%s57 + $0x18] sm:$0xff]
    %v1655 = vld [vmem:[%s59] sm:$0xff]
    %v1656 = vld [vmem:[%s59 + $0x8] sm:$0xff]
    %v1657 = vld [vmem:[%s59 + $0x10] sm:$0xff]
    %v1658 = vld [vmem:[%s59 + $0x18] sm:$0xff]
    %1659 = vrot.lane.b32.xlu0 %v1559, 1
    %v1660 = vpop.permute.xlu0 %1659
    %1661 = vrot.lane.b32.xlu0 %v1560, 1
    %v1662 = vpop.permute.xlu0 %1661
    %1663 = vrot.lane.b32.xlu0 %v1561, 1
    %v1664 = vpop.permute.xlu0 %1663
    %1665 = vrot.lane.b32.xlu0 %v1562, 1
    %v1666 = vpop.permute.xlu0 %1665
    %v1667 = vsel %vm295, %v1660, %v1559
    %v1668 = vsel %vm295, %v1662, %v1560
    %v1669 = vsel %vm295, %v1664, %v1561
    %v1670 = vsel %vm295, %v1666, %v1562
    %v1671 = vmax.f32 %v1667, %v1559
    %v1672 = vmax.f32 %v1668, %v1560
    %v1673 = vmax.f32 %v1669, %v1561
    %v1674 = vmax.f32 %v1670, %v1562
    %1675 = vrot.lane.b32.xlu0 %v1559, 127
    %v1676 = vpop.permute.xlu0 %1675
    %1677 = vrot.lane.b32.xlu0 %v1560, 127
    %v1678 = vpop.permute.xlu0 %1677
    %1679 = vrot.lane.b32.xlu0 %v1561, 127
    %v1680 = vpop.permute.xlu0 %1679
    %1681 = vrot.lane.b32.xlu0 %v1562, 127
    %v1682 = vpop.permute.xlu0 %1681
    %v1683 = vsel %vm306, %v1676, %v1559
    %v1684 = vsel %vm306, %v1678, %v1560
    %v1685 = vsel %vm306, %v1680, %v1561
    %v1686 = vsel %vm306, %v1682, %v1562
    %v1687 = vmax.f32 %v1671, %v1683
    %v1688 = vmax.f32 %v1672, %v1684
    %v1689 = vmax.f32 %v1673, %v1685
    %v1690 = vmax.f32 %v1674, %v1686
    %1691 = vrot.lane.b32.xlu0 %v1640, 3
    %v1692 = vpop.permute.xlu0 %1691
    %v1693 = vsel %vm317, %v1692, 0.0
    %1694 = vrot.lane.b32.xlu0 %v1640, 2
    %v1695 = vpop.permute.xlu0 %1694
    %v1696 = vsel %vm327, %v1695, 0.0
    %1697 = vrot.lane.b32.xlu0 %v1640, 1
    %v1698 = vpop.permute.xlu0 %1697
    %v1699 = vsel %vm295, %v1698, 0.0
    %1700 = vrot.lane.b32.xlu0 %v1640, 127
    %v1701 = vpop.permute.xlu0 %1700
    %v1702 = vsel %vm306, %v1701, 0.0
    %1703 = vrot.lane.b32.xlu0 %v1640, 126
    %v1704 = vpop.permute.xlu0 %1703
    %v1705 = vsel %vm343, %v1704, 0.0
    %1706 = vrot.lane.b32.xlu0 %v1640, 125
    %v1707 = vpop.permute.xlu0 %1706
    %v1708 = vsel %vm353, %v1707, 0.0
    %1710 = vset.pattern.permute.xlu0 0
    %1711 = vperm.xlu0 %1710, %v1647
    %v1712 = vpop.permute.xlu0 %1711
    %1715 = vset.pattern.permute.xlu0 0
    %1716 = vperm.xlu0 %1715, %v1648
    %v1717 = vpop.permute.xlu0 %1716
    %1720 = vset.pattern.permute.xlu0 0
    %1721 = vperm.xlu0 %1720, %v1649
    %v1722 = vpop.permute.xlu0 %1721
    %1725 = vset.pattern.permute.xlu0 0
    %1726 = vperm.xlu0 %1725, %v1650
    %v1727 = vpop.permute.xlu0 %1726
    %v1730 = vsel %vm753, %v1643, 0
    %v1733 = vsel %vm753, %v1644, 0
    %v1736 = vsel %vm753, %v1645, 0
    %v1739 = vsel %vm753, %v1646, 0
    %1741 = vmatprep.subr.mxu0 0.0
    %1742 = vmatpush1.msra.mxu0 %v1693
    %1743 = vmatprep.subr.mxu0 0.0
    %1744 = vmatpush1.msra.mxu0 %v1696
    %1745 = vmatprep.subr.mxu0 0.0
    %1746 = vmatpush1.msra.mxu0 %v1699
    %1747 = vmatprep.subr.mxu0 0.0
    %1748 = vmatpush1.msra.mxu0 %v1640
    %1749 = vmatprep.subr.mxu0 0.0
    %1750 = vmatpush1.msra.mxu0 %v1702
    %1751 = vmatprep.subr.mxu0 0.0
    %1752 = vmatpush1.msra.mxu0 %v1705
    %1753 = vmatprep.subr.mxu0 0.0
    %1754 = vmatpush1.msra.mxu0 %v1708
    %1755 = vmatprep.subr.mxu0 0.0
    %1756 = vmatpush1.msra.mxu0 %v1687
    %1757 = vmatprep.subr.mxu0 0.0
    %1758 = vmatpush1.msra.mxu0 %v1688
    %1759 = vmatprep.subr.mxu0 0.0
    %1760 = vmatpush1.msra.mxu0 %v1689
    %1761 = vmatprep.subr.mxu0 0.0
    %1762 = vmatpush1.msra.mxu0 %v1690
    %1763 = vmatprep.subr.mxu0 0.0
    %1764 = vmatpush1.msra.mxu0 0.0
    %1765 = vmatprep.subr.mxu0 0.0
    %1766 = vmatpush1.msra.mxu0 0.0
    %1767 = vmatprep.subr.mxu0 0.0
    %1768 = vmatpush1.msra.mxu0 0.0
    %1769 = vmatprep.subr.mxu0 0.0
    %1770 = vmatpush1.msra.mxu0 0.0
    %1771 = vmatprep.subr.mxu0 0.0
    %1772 = vmatpush1.msra.mxu0 0.0
    %1773 = vmatprep.subr.mxu0 0.0
    %1774 = vmatpush1.msra.mxu0 0.0
    %1775 = vmatprep.subr.mxu0 0.0
    %1776 = vmatpush1.msra.mxu0 0.0
    %1777 = vmatprep.subr.mxu0 0.0
    %1778 = vmatpush1.msra.mxu0 0.0
    %1779 = vmatprep.subr.mxu0 0.0
    %1780 = vmatpush1.msra.mxu0 0.0
    %1781 = vmatprep.subr.mxu0 0.0
    %1782 = vmatpush1.msra.mxu0 0.0
    %1783 = vmatprep.subr.mxu0 0.0
    %1784 = vmatpush1.msra.mxu0 0.0
    %1785 = vmatprep.subr.mxu0 0.0
    %1786 = vmatpush1.msra.mxu0 0.0
    %1787 = vmatprep.subr.mxu0 0.0
    %1788 = vmatpush1.msra.mxu0 0.0
    %1789 = vmatprep.subr.mxu0 0.0
    %1790 = vmatpush1.msra.mxu0 0.0
    %1791 = vmatprep.subr.mxu0 0.0
    %1792 = vmatpush1.msra.mxu0 0.0
    %1793 = vmatprep.subr.mxu0 0.0
    %1794 = vmatpush1.msra.mxu0 0.0
    %1795 = vmatprep.subr.mxu0 0.0
    %1796 = vmatpush1.msra.mxu0 0.0
    %1797 = vmatprep.subr.mxu0 0.0
    %1798 = vmatpush1.msra.mxu0 0.0
    %1799 = vmatprep.subr.mxu0 0.0
    %1800 = vmatpush1.msra.mxu0 0.0
    %1801 = vmatprep.subr.mxu0 0.0
    %1802 = vmatpush1.msra.mxu0 0.0
    %1803 = vmatprep.subr.mxu0 0.0
    %1804 = vmatpush1.msra.mxu0 0.0
    %1805 = vmatprep.mubr.f32.mxu0 0.0
    %1806 = vmatmul.mubr.f32.gmra.mrb[0].mxu0 %v1730
    %v1807 = vpop.f32.mrb[0].mxu0
    %v1808 = vadd.f32 %v1712, %v1807
    %v1809 = vpop.f32.mrb[0].mxu0
    %1810 = vmatprep.mubr.f32.mxu0 0.0
    %1811 = vmatmul.mubr.f32.gmra.mrb[0].mxu0 %v1733
    %v1812 = vpop.f32.mrb[0].mxu0
    %v1813 = vadd.f32 %v1717, %v1812
    %v1814 = vpop.f32.mrb[0].mxu0
    %1815 = vmatprep.mubr.f32.mxu0 0.0
    %1816 = vmatmul.mubr.f32.gmra.mrb[0].mxu0 %v1736
    %v1817 = vpop.f32.mrb[0].mxu0
    %v1818 = vadd.f32 %v1722, %v1817
    %v1819 = vpop.f32.mrb[0].mxu0
    %1820 = vmatprep.mubr.f32.mxu0 0.0
    %1821 = vmatmul.mubr.f32.gmra.mrb[0].mxu0 %v1739
    %v1822 = vpop.f32.mrb[0].mxu0
    %v1823 = vadd.f32 %v1727, %v1822
    %v1824 = vpop.f32.mrb[0].mxu0
    %1825 = vdwg.mxu0
    %v1826 = vsel %vm481, %v1808, 0.0
    %v1827 = vsel %vm481, %v1813, 0.0
    %v1828 = vsel %vm481, %v1818, 0.0
    %v1829 = vsel %vm481, %v1823, 0.0
    %1830 = vadd.xlane.f32.xlu0 %v1826
    %v1831 = vpop.xlane.xlu0 %1830
    %1832 = vadd.xlane.f32.xlu0 %v1827
    %v1833 = vpop.xlane.xlu0 %1832
    %1834 = vadd.xlane.f32.xlu0 %v1828
    %v1835 = vpop.xlane.xlu0 %1834
    %1836 = vadd.xlane.f32.xlu0 %v1829
    %v1837 = vpop.xlane.xlu0 %1836
    %v1838 = vmul.f32 %v1831, 0.03125
    %v1839 = vmul.f32 %v1833, 0.03125
    %v1840 = vmul.f32 %v1835, 0.03125
    %v1841 = vmul.f32 %v1837, 0.03125
    %v1842 = vsub.f32 %v1808, %v1838
    %v1843 = vsub.f32 %v1813, %v1839
    %v1844 = vsub.f32 %v1818, %v1840
    %v1845 = vsub.f32 %v1823, %v1841
    %v1846 = vsel %vm481, %v1842, 0.0
    %v1847 = vsel %vm481, %v1843, 0.0
    %v1848 = vsel %vm481, %v1844, 0.0
    %v1849 = vsel %vm481, %v1845, 0.0
    %v1850 = vmul.f32 %v1846, %v1846
    %v1851 = vmul.f32 %v1847, %v1847
    %v1852 = vmul.f32 %v1848, %v1848
    %v1853 = vmul.f32 %v1849, %v1849
    %1854 = vadd.xlane.f32.xlu0 %v1850
    %v1855 = vpop.xlane.xlu0 %1854
    %1856 = vadd.xlane.f32.xlu0 %v1851
    %v1857 = vpop.xlane.xlu0 %1856
    %1858 = vadd.xlane.f32.xlu0 %v1852
    %v1859 = vpop.xlane.xlu0 %1858
    %1860 = vadd.xlane.f32.xlu0 %v1853
    %v1861 = vpop.xlane.xlu0 %1860
    %v1862 = vmul.f32 %v1855, 0.03125
    %v1863 = vmul.f32 %v1857, 0.03125
    %v1864 = vmul.f32 %v1859, 0.03125
    %v1865 = vmul.f32 %v1861, 0.03125
    %v1866 = vadd.f32 %v1862, 1e-05
    %v1867 = vadd.f32 %v1863, 1e-05
    %v1868 = vadd.f32 %v1864, 1e-05
    %v1869 = vadd.f32 %v1865, 1e-05
    %v1870 = vrsqrt.pop %v1866
    %v1871 = vrsqrt.pop %v1867
    %v1872 = vrsqrt.pop %v1868
    %v1873 = vrsqrt.pop %v1869
    %v1874 = vmul.f32 %v1842, %v1870
    %v1875 = vmul.f32 %v1843, %v1871
    %v1876 = vmul.f32 %v1844, %v1872
    %v1877 = vmul.f32 %v1845, %v1873
    %1879 = vset.pattern.permute.xlu0 0
    %1880 = vperm.xlu0 %1879, %v1651
    %v1881 = vpop.permute.xlu0 %1880
    %1884 = vset.pattern.permute.xlu0 0
    %1885 = vperm.xlu0 %1884, %v1652
    %v1886 = vpop.permute.xlu0 %1885
    %1889 = vset.pattern.permute.xlu0 0
    %1890 = vperm.xlu0 %1889, %v1653
    %v1891 = vpop.permute.xlu0 %1890
    %1894 = vset.pattern.permute.xlu0 0
    %1895 = vperm.xlu0 %1894, %v1654
    %v1896 = vpop.permute.xlu0 %1895
    %v1898 = vmul.f32 %v1874, %v1881
    %v1899 = vmul.f32 %v1875, %v1886
    %v1900 = vmul.f32 %v1876, %v1891
    %v1901 = vmul.f32 %v1877, %v1896
    %1903 = vset.pattern.permute.xlu0 0
    %1904 = vperm.xlu0 %1903, %v1655
    %v1905 = vpop.permute.xlu0 %1904
    %1908 = vset.pattern.permute.xlu0 0
    %1909 = vperm.xlu0 %1908, %v1656
    %v1910 = vpop.permute.xlu0 %1909
    %1913 = vset.pattern.permute.xlu0 0
    %1914 = vperm.xlu0 %1913, %v1657
    %v1915 = vpop.permute.xlu0 %1914
    %1918 = vset.pattern.permute.xlu0 0
    %1919 = vperm.xlu0 %1918, %v1658
    %v1920 = vpop.permute.xlu0 %1919
    %v1922 = vadd.f32 %v1898, %v1905
    %v1923 = vadd.f32 %v1899, %v1910
    %v1924 = vadd.f32 %v1900, %v1915
    %v1925 = vadd.f32 %v1901, %v1920
    %v1926 = vmax.f32 %v1922, 0.0
    %v1927 = vmax.f32 %v1923, 0.0
    %v1928 = vmax.f32 %v1924, 0.0
    %v1929 = vmax.f32 %v1925, 0.0
    %v1930 = vld [vmem:[%s61] sm:$0xff]
    %v1931 = vld [vmem:[%s63] sm:$0xff]
    %1933 = vset.pattern.permute.xlu0 0
    %1934 = vperm.xlu0 %1933, %v1931
    %v1935 = vpop.permute.xlu0 %1934
    %v1938 = vsel %vm593, %v1930, 0
    %1940 = vmatprep.subr.mxu0 0.0
    %1941 = vmatpush1.msra.mxu0 %v1926
    %1942 = vmatprep.subr.mxu0 0.0
    %1943 = vmatpush1.msra.mxu0 %v1927
    %1944 = vmatprep.subr.mxu0 0.0
    %1945 = vmatpush1.msra.mxu0 %v1928
    %1946 = vmatprep.subr.mxu0 0.0
    %1947 = vmatpush1.msra.mxu0 %v1929
    %1948 = vmatprep.subr.mxu0 0.0
    %1949 = vmatpush1.msra.mxu0 0.0
    %1950 = vmatprep.subr.mxu0 0.0
    %1951 = vmatpush1.msra.mxu0 0.0
    %1952 = vmatprep.subr.mxu0 0.0
    %1953 = vmatpush1.msra.mxu0 0.0
    %1954 = vmatprep.subr.mxu0 0.0
    %1955 = vmatpush1.msra.mxu0 0.0
    %1956 = vmatprep.subr.mxu0 0.0
    %1957 = vmatpush1.msra.mxu0 0.0
    %1958 = vmatprep.subr.mxu0 0.0
    %1959 = vmatpush1.msra.mxu0 0.0
    %1960 = vmatprep.subr.mxu0 0.0
    %1961 = vmatpush1.msra.mxu0 0.0
    %1962 = vmatprep.subr.mxu0 0.0
    %1963 = vmatpush1.msra.mxu0 0.0
    %1964 = vmatprep.subr.mxu0 0.0
    %1965 = vmatpush1.msra.mxu0 0.0
    %1966 = vmatprep.subr.mxu0 0.0
    %1967 = vmatpush1.msra.mxu0 0.0
    %1968 = vmatprep.subr.mxu0 0.0
    %1969 = vmatpush1.msra.mxu0 0.0
    %1970 = vmatprep.subr.mxu0 0.0
    %1971 = vmatpush1.msra.mxu0 0.0
    %1972 = vmatprep.subr.mxu0 0.0
    %1973 = vmatpush1.msra.mxu0 0.0
    %1974 = vmatprep.subr.mxu0 0.0
    %1975 = vmatpush1.msra.mxu0 0.0
    %1976 = vmatprep.subr.mxu0 0.0
    %1977 = vmatpush1.msra.mxu0 0.0
    %1978 = vmatprep.subr.mxu0 0.0
    %1979 = vmatpush1.msra.mxu0 0.0
    %1980 = vmatprep.subr.mxu0 0.0
    %1981 = vmatpush1.msra.mxu0 0.0
    %1982 = vmatprep.subr.mxu0 0.0
    %1983 = vmatpush1.msra.mxu0 0.0
    %1984 = vmatprep.subr.mxu0 0.0
    %1985 = vmatpush1.msra.mxu0 0.0
    %1986 = vmatprep.subr.mxu0 0.0
    %1987 = vmatpush1.msra.mxu0 0.0
    %1988 = vmatprep.subr.mxu0 0.0
    %1989 = vmatpush1.msra.mxu0 0.0
    %1990 = vmatprep.subr.mxu0 0.0
    %1991 = vmatpush1.msra.mxu0 0.0
    %1992 = vmatprep.subr.mxu0 0.0
    %1993 = vmatpush1.msra.mxu0 0.0
    %1994 = vmatprep.subr.mxu0 0.0
    %1995 = vmatpush1.msra.mxu0 0.0
    %1996 = vmatprep.subr.mxu0 0.0
    %1997 = vmatpush1.msra.mxu0 0.0
    %1998 = vmatprep.subr.mxu0 0.0
    %1999 = vmatpush1.msra.mxu0 0.0
    %2000 = vmatprep.subr.mxu0 0.0
    %2001 = vmatpush1.msra.mxu0 0.0
    %2002 = vmatprep.subr.mxu0 0.0
    %2003 = vmatpush1.msra.mxu0 0.0
    %2004 = vmatprep.mubr.f32.mxu0 0.0
    %2005 = vmatmul.mubr.f32.gmra.mrb[0].mxu0 %v1938
    %v2006 = vpop.f32.mrb[0].mxu0
    %v2007 = vadd.f32 %v1935, %v2006
    %v2008 = vpop.f32.mrb[0].mxu0
    %2009 = vdwg.mxu0
    %v2010 = vld [vmem:[%s65] sm:$0xff]
    %v2011 = vld [vmem:[%s65 + $0x8] sm:$0xff]
    %v2012 = vld [vmem:[%s65 + $0x10] sm:$0xff]
    %v2013 = vld [vmem:[%s65 + $0x18] sm:$0xff]
    %v2014 = vld [vmem:[%s67] sm:$0xff]
    %v2015 = vld [vmem:[%s67 + $0x8] sm:$0xff]
    %v2016 = vld [vmem:[%s67 + $0x10] sm:$0xff]
    %v2017 = vld [vmem:[%s67 + $0x18] sm:$0xff]
    %v2018 = vld [vmem:[%s69] sm:$0xff]
    %v2019 = vld [vmem:[%s69 + $0x8] sm:$0xff]
    %v2020 = vld [vmem:[%s69 + $0x10] sm:$0xff]
    %v2021 = vld [vmem:[%s69 + $0x18] sm:$0xff]
    %v2022 = vld [vmem:[%s71] sm:$0xff]
    %v2023 = vld [vmem:[%s71 + $0x8] sm:$0xff]
    %v2024 = vld [vmem:[%s71 + $0x10] sm:$0xff]
    %v2025 = vld [vmem:[%s71 + $0x18] sm:$0xff]
    %2026 = vrot.lane.b32.xlu0 %v1926, 1
    %v2027 = vpop.permute.xlu0 %2026
    %2028 = vrot.lane.b32.xlu0 %v1927, 1
    %v2029 = vpop.permute.xlu0 %2028
    %2030 = vrot.lane.b32.xlu0 %v1928, 1
    %v2031 = vpop.permute.xlu0 %2030
    %2032 = vrot.lane.b32.xlu0 %v1929, 1
    %v2033 = vpop.permute.xlu0 %2032
    %v2034 = vsel %vm295, %v2027, %v1926
    %v2035 = vsel %vm295, %v2029, %v1927
    %v2036 = vsel %vm295, %v2031, %v1928
    %v2037 = vsel %vm295, %v2033, %v1929
    %v2038 = vmax.f32 %v2034, %v1926
    %v2039 = vmax.f32 %v2035, %v1927
    %v2040 = vmax.f32 %v2036, %v1928
    %v2041 = vmax.f32 %v2037, %v1929
    %2042 = vrot.lane.b32.xlu0 %v1926, 127
    %v2043 = vpop.permute.xlu0 %2042
    %2044 = vrot.lane.b32.xlu0 %v1927, 127
    %v2045 = vpop.permute.xlu0 %2044
    %2046 = vrot.lane.b32.xlu0 %v1928, 127
    %v2047 = vpop.permute.xlu0 %2046
    %2048 = vrot.lane.b32.xlu0 %v1929, 127
    %v2049 = vpop.permute.xlu0 %2048
    %v2050 = vsel %vm306, %v2043, %v1926
    %v2051 = vsel %vm306, %v2045, %v1927
    %v2052 = vsel %vm306, %v2047, %v1928
    %v2053 = vsel %vm306, %v2049, %v1929
    %v2054 = vmax.f32 %v2038, %v2050
    %v2055 = vmax.f32 %v2039, %v2051
    %v2056 = vmax.f32 %v2040, %v2052
    %v2057 = vmax.f32 %v2041, %v2053
    %2058 = vrot.lane.b32.xlu0 %v2007, 3
    %v2059 = vpop.permute.xlu0 %2058
    %v2060 = vsel %vm317, %v2059, 0.0
    %2061 = vrot.lane.b32.xlu0 %v2007, 2
    %v2062 = vpop.permute.xlu0 %2061
    %v2063 = vsel %vm327, %v2062, 0.0
    %2064 = vrot.lane.b32.xlu0 %v2007, 1
    %v2065 = vpop.permute.xlu0 %2064
    %v2066 = vsel %vm295, %v2065, 0.0
    %2067 = vrot.lane.b32.xlu0 %v2007, 127
    %v2068 = vpop.permute.xlu0 %2067
    %v2069 = vsel %vm306, %v2068, 0.0
    %2070 = vrot.lane.b32.xlu0 %v2007, 126
    %v2071 = vpop.permute.xlu0 %2070
    %v2072 = vsel %vm343, %v2071, 0.0
    %2073 = vrot.lane.b32.xlu0 %v2007, 125
    %v2074 = vpop.permute.xlu0 %2073
    %v2075 = vsel %vm353, %v2074, 0.0
    %2077 = vset.pattern.permute.xlu0 0
    %2078 = vperm.xlu0 %2077, %v2014
    %v2079 = vpop.permute.xlu0 %2078
    %2082 = vset.pattern.permute.xlu0 0
    %2083 = vperm.xlu0 %2082, %v2015
    %v2084 = vpop.permute.xlu0 %2083
    %2087 = vset.pattern.permute.xlu0 0
    %2088 = vperm.xlu0 %2087, %v2016
    %v2089 = vpop.permute.xlu0 %2088
    %2092 = vset.pattern.permute.xlu0 0
    %2093 = vperm.xlu0 %2092, %v2017
    %v2094 = vpop.permute.xlu0 %2093
    %v2097 = vsel %vm753, %v2010, 0
    %v2100 = vsel %vm753, %v2011, 0
    %v2103 = vsel %vm753, %v2012, 0
    %v2106 = vsel %vm753, %v2013, 0
    %2108 = vmatprep.subr.mxu0 0.0
    %2109 = vmatpush1.msra.mxu0 %v2060
    %2110 = vmatprep.subr.mxu0 0.0
    %2111 = vmatpush1.msra.mxu0 %v2063
    %2112 = vmatprep.subr.mxu0 0.0
    %2113 = vmatpush1.msra.mxu0 %v2066
    %2114 = vmatprep.subr.mxu0 0.0
    %2115 = vmatpush1.msra.mxu0 %v2007
    %2116 = vmatprep.subr.mxu0 0.0
    %2117 = vmatpush1.msra.mxu0 %v2069
    %2118 = vmatprep.subr.mxu0 0.0
    %2119 = vmatpush1.msra.mxu0 %v2072
    %2120 = vmatprep.subr.mxu0 0.0
    %2121 = vmatpush1.msra.mxu0 %v2075
    %2122 = vmatprep.subr.mxu0 0.0
    %2123 = vmatpush1.msra.mxu0 %v2054
    %2124 = vmatprep.subr.mxu0 0.0
    %2125 = vmatpush1.msra.mxu0 %v2055
    %2126 = vmatprep.subr.mxu0 0.0
    %2127 = vmatpush1.msra.mxu0 %v2056
    %2128 = vmatprep.subr.mxu0 0.0
    %2129 = vmatpush1.msra.mxu0 %v2057
    %2130 = vmatprep.subr.mxu0 0.0
    %2131 = vmatpush1.msra.mxu0 0.0
    %2132 = vmatprep.subr.mxu0 0.0
    %2133 = vmatpush1.msra.mxu0 0.0
    %2134 = vmatprep.subr.mxu0 0.0
    %2135 = vmatpush1.msra.mxu0 0.0
    %2136 = vmatprep.subr.mxu0 0.0
    %2137 = vmatpush1.msra.mxu0 0.0
    %2138 = vmatprep.subr.mxu0 0.0
    %2139 = vmatpush1.msra.mxu0 0.0
    %2140 = vmatprep.subr.mxu0 0.0
    %2141 = vmatpush1.msra.mxu0 0.0
    %2142 = vmatprep.subr.mxu0 0.0
    %2143 = vmatpush1.msra.mxu0 0.0
    %2144 = vmatprep.subr.mxu0 0.0
    %2145 = vmatpush1.msra.mxu0 0.0
    %2146 = vmatprep.subr.mxu0 0.0
    %2147 = vmatpush1.msra.mxu0 0.0
    %2148 = vmatprep.subr.mxu0 0.0
    %2149 = vmatpush1.msra.mxu0 0.0
    %2150 = vmatprep.subr.mxu0 0.0
    %2151 = vmatpush1.msra.mxu0 0.0
    %2152 = vmatprep.subr.mxu0 0.0
    %2153 = vmatpush1.msra.mxu0 0.0
    %2154 = vmatprep.subr.mxu0 0.0
    %2155 = vmatpush1.msra.mxu0 0.0
    %2156 = vmatprep.subr.mxu0 0.0
    %2157 = vmatpush1.msra.mxu0 0.0
    %2158 = vmatprep.subr.mxu0 0.0
    %2159 = vmatpush1.msra.mxu0 0.0
    %2160 = vmatprep.subr.mxu0 0.0
    %2161 = vmatpush1.msra.mxu0 0.0
    %2162 = vmatprep.subr.mxu0 0.0
    %2163 = vmatpush1.msra.mxu0 0.0
    %2164 = vmatprep.subr.mxu0 0.0
    %2165 = vmatpush1.msra.mxu0 0.0
    %2166 = vmatprep.subr.mxu0 0.0
    %2167 = vmatpush1.msra.mxu0 0.0
    %2168 = vmatprep.subr.mxu0 0.0
    %2169 = vmatpush1.msra.mxu0 0.0
    %2170 = vmatprep.subr.mxu0 0.0
    %2171 = vmatpush1.msra.mxu0 0.0
    %2172 = vmatprep.mubr.f32.mxu0 0.0
    %2173 = vmatmul.mubr.f32.gmra.mrb[0].mxu0 %v2097
    %v2174 = vpop.f32.mrb[0].mxu0
    %v2175 = vadd.f32 %v2079, %v2174
    %v2176 = vpop.f32.mrb[0].mxu0
    %2177 = vmatprep.mubr.f32.mxu0 0.0
    %2178 = vmatmul.mubr.f32.gmra.mrb[0].mxu0 %v2100
    %v2179 = vpop.f32.mrb[0].mxu0
    %v2180 = vadd.f32 %v2084, %v2179
    %v2181 = vpop.f32.mrb[0].mxu0
    %2182 = vmatprep.mubr.f32.mxu0 0.0
    %2183 = vmatmul.mubr.f32.gmra.mrb[0].mxu0 %v2103
    %v2184 = vpop.f32.mrb[0].mxu0
    %v2185 = vadd.f32 %v2089, %v2184
    %v2186 = vpop.f32.mrb[0].mxu0
    %2187 = vmatprep.mubr.f32.mxu0 0.0
    %2188 = vmatmul.mubr.f32.gmra.mrb[0].mxu0 %v2106
    %v2189 = vpop.f32.mrb[0].mxu0
    %v2190 = vadd.f32 %v2094, %v2189
    %v2191 = vpop.f32.mrb[0].mxu0
    %2192 = vdwg.mxu0
    %v2193 = vsel %vm481, %v2175, 0.0
    %v2194 = vsel %vm481, %v2180, 0.0
    %v2195 = vsel %vm481, %v2185, 0.0
    %v2196 = vsel %vm481, %v2190, 0.0
    %2197 = vadd.xlane.f32.xlu0 %v2193
    %v2198 = vpop.xlane.xlu0 %2197
    %2199 = vadd.xlane.f32.xlu0 %v2194
    %v2200 = vpop.xlane.xlu0 %2199
    %2201 = vadd.xlane.f32.xlu0 %v2195
    %v2202 = vpop.xlane.xlu0 %2201
    %2203 = vadd.xlane.f32.xlu0 %v2196
    %v2204 = vpop.xlane.xlu0 %2203
    %v2205 = vmul.f32 %v2198, 0.03125
    %v2206 = vmul.f32 %v2200, 0.03125
    %v2207 = vmul.f32 %v2202, 0.03125
    %v2208 = vmul.f32 %v2204, 0.03125
    %v2209 = vsub.f32 %v2175, %v2205
    %v2210 = vsub.f32 %v2180, %v2206
    %v2211 = vsub.f32 %v2185, %v2207
    %v2212 = vsub.f32 %v2190, %v2208
    %v2213 = vsel %vm481, %v2209, 0.0
    %v2214 = vsel %vm481, %v2210, 0.0
    %v2215 = vsel %vm481, %v2211, 0.0
    %v2216 = vsel %vm481, %v2212, 0.0
    %v2217 = vmul.f32 %v2213, %v2213
    %v2218 = vmul.f32 %v2214, %v2214
    %v2219 = vmul.f32 %v2215, %v2215
    %v2220 = vmul.f32 %v2216, %v2216
    %2221 = vadd.xlane.f32.xlu0 %v2217
    %v2222 = vpop.xlane.xlu0 %2221
    %2223 = vadd.xlane.f32.xlu0 %v2218
    %v2224 = vpop.xlane.xlu0 %2223
    %2225 = vadd.xlane.f32.xlu0 %v2219
    %v2226 = vpop.xlane.xlu0 %2225
    %2227 = vadd.xlane.f32.xlu0 %v2220
    %v2228 = vpop.xlane.xlu0 %2227
    %v2229 = vmul.f32 %v2222, 0.03125
    %v2230 = vmul.f32 %v2224, 0.03125
    %v2231 = vmul.f32 %v2226, 0.03125
    %v2232 = vmul.f32 %v2228, 0.03125
    %v2233 = vadd.f32 %v2229, 1e-05
    %v2234 = vadd.f32 %v2230, 1e-05
    %v2235 = vadd.f32 %v2231, 1e-05
    %v2236 = vadd.f32 %v2232, 1e-05
    %v2237 = vrsqrt.pop %v2233
    %v2238 = vrsqrt.pop %v2234
    %v2239 = vrsqrt.pop %v2235
    %v2240 = vrsqrt.pop %v2236
    %v2241 = vmul.f32 %v2209, %v2237
    %v2242 = vmul.f32 %v2210, %v2238
    %v2243 = vmul.f32 %v2211, %v2239
    %v2244 = vmul.f32 %v2212, %v2240
    %2246 = vset.pattern.permute.xlu0 0
    %2247 = vperm.xlu0 %2246, %v2018
    %v2248 = vpop.permute.xlu0 %2247
    %2251 = vset.pattern.permute.xlu0 0
    %2252 = vperm.xlu0 %2251, %v2019
    %v2253 = vpop.permute.xlu0 %2252
    %2256 = vset.pattern.permute.xlu0 0
    %2257 = vperm.xlu0 %2256, %v2020
    %v2258 = vpop.permute.xlu0 %2257
    %2261 = vset.pattern.permute.xlu0 0
    %2262 = vperm.xlu0 %2261, %v2021
    %v2263 = vpop.permute.xlu0 %2262
    %v2265 = vmul.f32 %v2241, %v2248
    %v2266 = vmul.f32 %v2242, %v2253
    %v2267 = vmul.f32 %v2243, %v2258
    %v2268 = vmul.f32 %v2244, %v2263
    %2270 = vset.pattern.permute.xlu0 0
    %2271 = vperm.xlu0 %2270, %v2022
    %v2272 = vpop.permute.xlu0 %2271
    %2275 = vset.pattern.permute.xlu0 0
    %2276 = vperm.xlu0 %2275, %v2023
    %v2277 = vpop.permute.xlu0 %2276
    %2280 = vset.pattern.permute.xlu0 0
    %2281 = vperm.xlu0 %2280, %v2024
    %v2282 = vpop.permute.xlu0 %2281
    %2285 = vset.pattern.permute.xlu0 0
    %2286 = vperm.xlu0 %2285, %v2025
    %v2287 = vpop.permute.xlu0 %2286
    %v2289 = vadd.f32 %v2265, %v2272
    %v2290 = vadd.f32 %v2266, %v2277
    %v2291 = vadd.f32 %v2267, %v2282
    %v2292 = vadd.f32 %v2268, %v2287
    %v2293 = vmax.f32 %v2289, 0.0
    %v2294 = vmax.f32 %v2290, 0.0
    %v2295 = vmax.f32 %v2291, 0.0
    %v2296 = vmax.f32 %v2292, 0.0
    %v2297 = vld [vmem:[%s73] sm:$0xff]
    %v2298 = vld [vmem:[%s75] sm:$0xff]
    %2300 = vset.pattern.permute.xlu0 0
    %2301 = vperm.xlu0 %2300, %v2298
    %v2302 = vpop.permute.xlu0 %2301
    %v2305 = vsel %vm593, %v2297, 0
    %2307 = vmatprep.subr.mxu0 0.0
    %2308 = vmatpush1.msra.mxu0 %v2293
    %2309 = vmatprep.subr.mxu0 0.0
    %2310 = vmatpush1.msra.mxu0 %v2294
    %2311 = vmatprep.subr.mxu0 0.0
    %2312 = vmatpush1.msra.mxu0 %v2295
    %2313 = vmatprep.subr.mxu0 0.0
    %2314 = vmatpush1.msra.mxu0 %v2296
    %2315 = vmatprep.subr.mxu0 0.0
    %2316 = vmatpush1.msra.mxu0 0.0
    %2317 = vmatprep.subr.mxu0 0.0
    %2318 = vmatpush1.msra.mxu0 0.0
    %2319 = vmatprep.subr.mxu0 0.0
    %2320 = vmatpush1.msra.mxu0 0.0
    %2321 = vmatprep.subr.mxu0 0.0
    %2322 = vmatpush1.msra.mxu0 0.0
    %2323 = vmatprep.subr.mxu0 0.0
    %2324 = vmatpush1.msra.mxu0 0.0
    %2325 = vmatprep.subr.mxu0 0.0
    %2326 = vmatpush1.msra.mxu0 0.0
    %2327 = vmatprep.subr.mxu0 0.0
    %2328 = vmatpush1.msra.mxu0 0.0
    %2329 = vmatprep.subr.mxu0 0.0
    %2330 = vmatpush1.msra.mxu0 0.0
    %2331 = vmatprep.subr.mxu0 0.0
    %2332 = vmatpush1.msra.mxu0 0.0
    %2333 = vmatprep.subr.mxu0 0.0
    %2334 = vmatpush1.msra.mxu0 0.0
    %2335 = vmatprep.subr.mxu0 0.0
    %2336 = vmatpush1.msra.mxu0 0.0
    %2337 = vmatprep.subr.mxu0 0.0
    %2338 = vmatpush1.msra.mxu0 0.0
    %2339 = vmatprep.subr.mxu0 0.0
    %2340 = vmatpush1.msra.mxu0 0.0
    %2341 = vmatprep.subr.mxu0 0.0
    %2342 = vmatpush1.msra.mxu0 0.0
    %2343 = vmatprep.subr.mxu0 0.0
    %2344 = vmatpush1.msra.mxu0 0.0
    %2345 = vmatprep.subr.mxu0 0.0
    %2346 = vmatpush1.msra.mxu0 0.0
    %2347 = vmatprep.subr.mxu0 0.0
    %2348 = vmatpush1.msra.mxu0 0.0
    %2349 = vmatprep.subr.mxu0 0.0
    %2350 = vmatpush1.msra.mxu0 0.0
    %2351 = vmatprep.subr.mxu0 0.0
    %2352 = vmatpush1.msra.mxu0 0.0
    %2353 = vmatprep.subr.mxu0 0.0
    %2354 = vmatpush1.msra.mxu0 0.0
    %2355 = vmatprep.subr.mxu0 0.0
    %2356 = vmatpush1.msra.mxu0 0.0
    %2357 = vmatprep.subr.mxu0 0.0
    %2358 = vmatpush1.msra.mxu0 0.0
    %2359 = vmatprep.subr.mxu0 0.0
    %2360 = vmatpush1.msra.mxu0 0.0
    %2361 = vmatprep.subr.mxu0 0.0
    %2362 = vmatpush1.msra.mxu0 0.0
    %2363 = vmatprep.subr.mxu0 0.0
    %2364 = vmatpush1.msra.mxu0 0.0
    %2365 = vmatprep.subr.mxu0 0.0
    %2366 = vmatpush1.msra.mxu0 0.0
    %2367 = vmatprep.subr.mxu0 0.0
    %2368 = vmatpush1.msra.mxu0 0.0
    %2369 = vmatprep.subr.mxu0 0.0
    %2370 = vmatpush1.msra.mxu0 0.0
    %2371 = vmatprep.mubr.f32.mxu0 0.0
    %2372 = vmatmul.mubr.f32.gmra.mrb[0].mxu0 %v2305
    %v2373 = vpop.f32.mrb[0].mxu0
    %v2374 = vadd.f32 %v2302, %v2373
    %v2375 = vpop.f32.mrb[0].mxu0
    %2376 = vdwg.mxu0
    %v2377 = vld [vmem:[%s77] sm:$0xff]
    %v2378 = vld [vmem:[%s77 + $0x8] sm:$0xff]
    %v2379 = vld [vmem:[%s77 + $0x10] sm:$0xff]
    %v2380 = vld [vmem:[%s77 + $0x18] sm:$0xff]
    %v2381 = vld [vmem:[%s79] sm:$0xff]
    %v2382 = vld [vmem:[%s79 + $0x8] sm:$0xff]
    %v2383 = vld [vmem:[%s79 + $0x10] sm:$0xff]
    %v2384 = vld [vmem:[%s79 + $0x18] sm:$0xff]
    %v2385 = vld [vmem:[%s81] sm:$0xff]
    %v2386 = vld [vmem:[%s81 + $0x8] sm:$0xff]
    %v2387 = vld [vmem:[%s81 + $0x10] sm:$0xff]
    %v2388 = vld [vmem:[%s81 + $0x18] sm:$0xff]
    %v2389 = vld [vmem:[%s83] sm:$0xff]
    %v2390 = vld [vmem:[%s83 + $0x8] sm:$0xff]
    %v2391 = vld [vmem:[%s83 + $0x10] sm:$0xff]
    %v2392 = vld [vmem:[%s83 + $0x18] sm:$0xff]
    %2393 = vrot.lane.b32.xlu0 %v2293, 1
    %v2394 = vpop.permute.xlu0 %2393
    %2395 = vrot.lane.b32.xlu0 %v2294, 1
    %v2396 = vpop.permute.xlu0 %2395
    %2397 = vrot.lane.b32.xlu0 %v2295, 1
    %v2398 = vpop.permute.xlu0 %2397
    %2399 = vrot.lane.b32.xlu0 %v2296, 1
    %v2400 = vpop.permute.xlu0 %2399
    %v2401 = vsel %vm295, %v2394, %v2293
    %v2402 = vsel %vm295, %v2396, %v2294
    %v2403 = vsel %vm295, %v2398, %v2295
    %v2404 = vsel %vm295, %v2400, %v2296
    %v2405 = vmax.f32 %v2401, %v2293
    %v2406 = vmax.f32 %v2402, %v2294
    %v2407 = vmax.f32 %v2403, %v2295
    %v2408 = vmax.f32 %v2404, %v2296
    %2409 = vrot.lane.b32.xlu0 %v2293, 127
    %v2410 = vpop.permute.xlu0 %2409
    %2411 = vrot.lane.b32.xlu0 %v2294, 127
    %v2412 = vpop.permute.xlu0 %2411
    %2413 = vrot.lane.b32.xlu0 %v2295, 127
    %v2414 = vpop.permute.xlu0 %2413
    %2415 = vrot.lane.b32.xlu0 %v2296, 127
    %v2416 = vpop.permute.xlu0 %2415
    %v2417 = vsel %vm306, %v2410, %v2293
    %v2418 = vsel %vm306, %v2412, %v2294
    %v2419 = vsel %vm306, %v2414, %v2295
    %v2420 = vsel %vm306, %v2416, %v2296
    %v2421 = vmax.f32 %v2405, %v2417
    %v2422 = vmax.f32 %v2406, %v2418
    %v2423 = vmax.f32 %v2407, %v2419
    %v2424 = vmax.f32 %v2408, %v2420
    %2425 = vrot.lane.b32.xlu0 %v2374, 3
    %v2426 = vpop.permute.xlu0 %2425
    %v2427 = vsel %vm317, %v2426, 0.0
    %2428 = vrot.lane.b32.xlu0 %v2374, 2
    %v2429 = vpop.permute.xlu0 %2428
    %v2430 = vsel %vm327, %v2429, 0.0
    %2431 = vrot.lane.b32.xlu0 %v2374, 1
    %v2432 = vpop.permute.xlu0 %2431
    %v2433 = vsel %vm295, %v2432, 0.0
    %2434 = vrot.lane.b32.xlu0 %v2374, 127
    %v2435 = vpop.permute.xlu0 %2434
    %v2436 = vsel %vm306, %v2435, 0.0
    %2437 = vrot.lane.b32.xlu0 %v2374, 126
    %v2438 = vpop.permute.xlu0 %2437
    %v2439 = vsel %vm343, %v2438, 0.0
    %2440 = vrot.lane.b32.xlu0 %v2374, 125
    %v2441 = vpop.permute.xlu0 %2440
    %v2442 = vsel %vm353, %v2441, 0.0
    %2444 = vset.pattern.permute.xlu0 0
    %2445 = vperm.xlu0 %2444, %v2381
    %v2446 = vpop.permute.xlu0 %2445
    %2449 = vset.pattern.permute.xlu0 0
    %2450 = vperm.xlu0 %2449, %v2382
    %v2451 = vpop.permute.xlu0 %2450
    %2454 = vset.pattern.permute.xlu0 0
    %2455 = vperm.xlu0 %2454, %v2383
    %v2456 = vpop.permute.xlu0 %2455
    %2459 = vset.pattern.permute.xlu0 0
    %2460 = vperm.xlu0 %2459, %v2384
    %v2461 = vpop.permute.xlu0 %2460
    %v2464 = vsel %vm753, %v2377, 0
    %v2467 = vsel %vm753, %v2378, 0
    %v2470 = vsel %vm753, %v2379, 0
    %v2473 = vsel %vm753, %v2380, 0
    %2475 = vmatprep.subr.mxu0 0.0
    %2476 = vmatpush1.msra.mxu0 %v2427
    %2477 = vmatprep.subr.mxu0 0.0
    %2478 = vmatpush1.msra.mxu0 %v2430
    %2479 = vmatprep.subr.mxu0 0.0
    %2480 = vmatpush1.msra.mxu0 %v2433
    %2481 = vmatprep.subr.mxu0 0.0
    %2482 = vmatpush1.msra.mxu0 %v2374
    %2483 = vmatprep.subr.mxu0 0.0
    %2484 = vmatpush1.msra.mxu0 %v2436
    %2485 = vmatprep.subr.mxu0 0.0
    %2486 = vmatpush1.msra.mxu0 %v2439
    %2487 = vmatprep.subr.mxu0 0.0
    %2488 = vmatpush1.msra.mxu0 %v2442
    %2489 = vmatprep.subr.mxu0 0.0
    %2490 = vmatpush1.msra.mxu0 %v2421
    %2491 = vmatprep.subr.mxu0 0.0
    %2492 = vmatpush1.msra.mxu0 %v2422
    %2493 = vmatprep.subr.mxu0 0.0
    %2494 = vmatpush1.msra.mxu0 %v2423
    %2495 = vmatprep.subr.mxu0 0.0
    %2496 = vmatpush1.msra.mxu0 %v2424
    %2497 = vmatprep.subr.mxu0 0.0
    %2498 = vmatpush1.msra.mxu0 0.0
    %2499 = vmatprep.subr.mxu0 0.0
    %2500 = vmatpush1.msra.mxu0 0.0
    %2501 = vmatprep.subr.mxu0 0.0
    %2502 = vmatpush1.msra.mxu0 0.0
    %2503 = vmatprep.subr.mxu0 0.0
    %2504 = vmatpush1.msra.mxu0 0.0
    %2505 = vmatprep.subr.mxu0 0.0
    %2506 = vmatpush1.msra.mxu0 0.0
    %2507 = vmatprep.subr.mxu0 0.0
    %2508 = vmatpush1.msra.mxu0 0.0
    %2509 = vmatprep.subr.mxu0 0.0
    %2510 = vmatpush1.msra.mxu0 0.0
    %2511 = vmatprep.subr.mxu0 0.0
    %2512 = vmatpush1.msra.mxu0 0.0
    %2513 = vmatprep.subr.mxu0 0.0
    %2514 = vmatpush1.msra.mxu0 0.0
    %2515 = vmatprep.subr.mxu0 0.0
    %2516 = vmatpush1.msra.mxu0 0.0
    %2517 = vmatprep.subr.mxu0 0.0
    %2518 = vmatpush1.msra.mxu0 0.0
    %2519 = vmatprep.subr.mxu0 0.0
    %2520 = vmatpush1.msra.mxu0 0.0
    %2521 = vmatprep.subr.mxu0 0.0
    %2522 = vmatpush1.msra.mxu0 0.0
    %2523 = vmatprep.subr.mxu0 0.0
    %2524 = vmatpush1.msra.mxu0 0.0
    %2525 = vmatprep.subr.mxu0 0.0
    %2526 = vmatpush1.msra.mxu0 0.0
    %2527 = vmatprep.subr.mxu0 0.0
    %2528 = vmatpush1.msra.mxu0 0.0
    %2529 = vmatprep.subr.mxu0 0.0
    %2530 = vmatpush1.msra.mxu0 0.0
    %2531 = vmatprep.subr.mxu0 0.0
    %2532 = vmatpush1.msra.mxu0 0.0
    %2533 = vmatprep.subr.mxu0 0.0
    %2534 = vmatpush1.msra.mxu0 0.0
    %2535 = vmatprep.subr.mxu0 0.0
    %2536 = vmatpush1.msra.mxu0 0.0
    %2537 = vmatprep.subr.mxu0 0.0
    %2538 = vmatpush1.msra.mxu0 0.0
    %2539 = vmatprep.mubr.f32.mxu0 0.0
    %2540 = vmatmul.mubr.f32.gmra.mrb[0].mxu0 %v2464
    %v2541 = vpop.f32.mrb[0].mxu0
    %v2542 = vadd.f32 %v2446, %v2541
    %v2543 = vpop.f32.mrb[0].mxu0
    %2544 = vmatprep.mubr.f32.mxu0 0.0
    %2545 = vmatmul.mubr.f32.gmra.mrb[0].mxu0 %v2467
    %v2546 = vpop.f32.mrb[0].mxu0
    %v2547 = vadd.f32 %v2451, %v2546
    %v2548 = vpop.f32.mrb[0].mxu0
    %2549 = vmatprep.mubr.f32.mxu0 0.0
    %2550 = vmatmul.mubr.f32.gmra.mrb[0].mxu0 %v2470
    %v2551 = vpop.f32.mrb[0].mxu0
    %v2552 = vadd.f32 %v2456, %v2551
    %v2553 = vpop.f32.mrb[0].mxu0
    %2554 = vmatprep.mubr.f32.mxu0 0.0
    %2555 = vmatmul.mubr.f32.gmra.mrb[0].mxu0 %v2473
    %v2556 = vpop.f32.mrb[0].mxu0
    %v2557 = vadd.f32 %v2461, %v2556
    %v2558 = vpop.f32.mrb[0].mxu0
    %2559 = vdwg.mxu0
    %v2560 = vsel %vm481, %v2542, 0.0
    %v2561 = vsel %vm481, %v2547, 0.0
    %v2562 = vsel %vm481, %v2552, 0.0
    %v2563 = vsel %vm481, %v2557, 0.0
    %2564 = vadd.xlane.f32.xlu0 %v2560
    %v2565 = vpop.xlane.xlu0 %2564
    %2566 = vadd.xlane.f32.xlu0 %v2561
    %v2567 = vpop.xlane.xlu0 %2566
    %2568 = vadd.xlane.f32.xlu0 %v2562
    %v2569 = vpop.xlane.xlu0 %2568
    %2570 = vadd.xlane.f32.xlu0 %v2563
    %v2571 = vpop.xlane.xlu0 %2570
    %v2572 = vmul.f32 %v2565, 0.03125
    %v2573 = vmul.f32 %v2567, 0.03125
    %v2574 = vmul.f32 %v2569, 0.03125
    %v2575 = vmul.f32 %v2571, 0.03125
    %v2576 = vsub.f32 %v2542, %v2572
    %v2577 = vsub.f32 %v2547, %v2573
    %v2578 = vsub.f32 %v2552, %v2574
    %v2579 = vsub.f32 %v2557, %v2575
    %v2580 = vsel %vm481, %v2576, 0.0
    %v2581 = vsel %vm481, %v2577, 0.0
    %v2582 = vsel %vm481, %v2578, 0.0
    %v2583 = vsel %vm481, %v2579, 0.0
    %v2584 = vmul.f32 %v2580, %v2580
    %v2585 = vmul.f32 %v2581, %v2581
    %v2586 = vmul.f32 %v2582, %v2582
    %v2587 = vmul.f32 %v2583, %v2583
    %2588 = vadd.xlane.f32.xlu0 %v2584
    %v2589 = vpop.xlane.xlu0 %2588
    %2590 = vadd.xlane.f32.xlu0 %v2585
    %v2591 = vpop.xlane.xlu0 %2590
    %2592 = vadd.xlane.f32.xlu0 %v2586
    %v2593 = vpop.xlane.xlu0 %2592
    %2594 = vadd.xlane.f32.xlu0 %v2587
    %v2595 = vpop.xlane.xlu0 %2594
    %v2596 = vmul.f32 %v2589, 0.03125
    %v2597 = vmul.f32 %v2591, 0.03125
    %v2598 = vmul.f32 %v2593, 0.03125
    %v2599 = vmul.f32 %v2595, 0.03125
    %v2600 = vadd.f32 %v2596, 1e-05
    %v2601 = vadd.f32 %v2597, 1e-05
    %v2602 = vadd.f32 %v2598, 1e-05
    %v2603 = vadd.f32 %v2599, 1e-05
    %v2604 = vrsqrt.pop %v2600
    %v2605 = vrsqrt.pop %v2601
    %v2606 = vrsqrt.pop %v2602
    %v2607 = vrsqrt.pop %v2603
    %v2608 = vmul.f32 %v2576, %v2604
    %v2609 = vmul.f32 %v2577, %v2605
    %v2610 = vmul.f32 %v2578, %v2606
    %v2611 = vmul.f32 %v2579, %v2607
    %2613 = vset.pattern.permute.xlu0 0
    %2614 = vperm.xlu0 %2613, %v2385
    %v2615 = vpop.permute.xlu0 %2614
    %2618 = vset.pattern.permute.xlu0 0
    %2619 = vperm.xlu0 %2618, %v2386
    %v2620 = vpop.permute.xlu0 %2619
    %2623 = vset.pattern.permute.xlu0 0
    %2624 = vperm.xlu0 %2623, %v2387
    %v2625 = vpop.permute.xlu0 %2624
    %2628 = vset.pattern.permute.xlu0 0
    %2629 = vperm.xlu0 %2628, %v2388
    %v2630 = vpop.permute.xlu0 %2629
    %v2632 = vmul.f32 %v2608, %v2615
    %v2633 = vmul.f32 %v2609, %v2620
    %v2634 = vmul.f32 %v2610, %v2625
    %v2635 = vmul.f32 %v2611, %v2630
    %2637 = vset.pattern.permute.xlu0 0
    %2638 = vperm.xlu0 %2637, %v2389
    %v2639 = vpop.permute.xlu0 %2638
    %2642 = vset.pattern.permute.xlu0 0
    %2643 = vperm.xlu0 %2642, %v2390
    %v2644 = vpop.permute.xlu0 %2643
    %2647 = vset.pattern.permute.xlu0 0
    %2648 = vperm.xlu0 %2647, %v2391
    %v2649 = vpop.permute.xlu0 %2648
    %2652 = vset.pattern.permute.xlu0 0
    %2653 = vperm.xlu0 %2652, %v2392
    %v2654 = vpop.permute.xlu0 %2653
    %v2656 = vadd.f32 %v2632, %v2639
    %v2657 = vadd.f32 %v2633, %v2644
    %v2658 = vadd.f32 %v2634, %v2649
    %v2659 = vadd.f32 %v2635, %v2654
    %v2660 = vmax.f32 %v2656, 0.0
    %v2661 = vmax.f32 %v2657, 0.0
    %v2662 = vmax.f32 %v2658, 0.0
    %v2663 = vmax.f32 %v2659, 0.0
    %v2664 = vld [vmem:[%s85] sm:$0xff]
    %v2665 = vld [vmem:[%s85 + $0x8] sm:$0xff]
    %v2666 = vld [vmem:[%s85 + $0x10] sm:$0xff]
    %v2667 = vld [vmem:[%s85 + $0x18] sm:$0xff]
    %v2668 = vld [vmem:[%s87] sm:$0xff]
    %v2669 = vld [vmem:[%s87 + $0x8] sm:$0xff]
    %v2670 = vld [vmem:[%s87 + $0x10] sm:$0xff]
    %v2671 = vld [vmem:[%s87 + $0x18] sm:$0xff]
    %v2672 = vsel %vm481, %v1559, 0.0
    %v2673 = vsel %vm481, %v1560, 0.0
    %v2674 = vsel %vm481, %v1561, 0.0
    %v2675 = vsel %vm481, %v1562, 0.0
    %2676 = vadd.xlane.f32.xlu0 %v2672
    %v2677 = vpop.xlane.xlu0 %2676
    %2678 = vadd.xlane.f32.xlu0 %v2673
    %v2679 = vpop.xlane.xlu0 %2678
    %2680 = vadd.xlane.f32.xlu0 %v2674
    %v2681 = vpop.xlane.xlu0 %2680
    %2682 = vadd.xlane.f32.xlu0 %v2675
    %v2683 = vpop.xlane.xlu0 %2682
    %v2684 = vmul.f32 %v2677, 0.03125
    %v2685 = vmul.f32 %v2679, 0.03125
    %v2686 = vmul.f32 %v2681, 0.03125
    %v2687 = vmul.f32 %v2683, 0.03125
    %v2688 = vsub.f32 %v1559, %v2684
    %v2689 = vsub.f32 %v1560, %v2685
    %v2690 = vsub.f32 %v1561, %v2686
    %v2691 = vsub.f32 %v1562, %v2687
    %v2692 = vsel %vm481, %v2688, 0.0
    %v2693 = vsel %vm481, %v2689, 0.0
    %v2694 = vsel %vm481, %v2690, 0.0
    %v2695 = vsel %vm481, %v2691, 0.0
    %v2696 = vmul.f32 %v2692, %v2692
    %v2697 = vmul.f32 %v2693, %v2693
    %v2698 = vmul.f32 %v2694, %v2694
    %v2699 = vmul.f32 %v2695, %v2695
    %2700 = vadd.xlane.f32.xlu0 %v2696
    %v2701 = vpop.xlane.xlu0 %2700
    %2702 = vadd.xlane.f32.xlu0 %v2697
    %v2703 = vpop.xlane.xlu0 %2702
    %2704 = vadd.xlane.f32.xlu0 %v2698
    %v2705 = vpop.xlane.xlu0 %2704
    %2706 = vadd.xlane.f32.xlu0 %v2699
    %v2707 = vpop.xlane.xlu0 %2706
    %v2708 = vmul.f32 %v2701, 0.03125
    %v2709 = vmul.f32 %v2703, 0.03125
    %v2710 = vmul.f32 %v2705, 0.03125
    %v2711 = vmul.f32 %v2707, 0.03125
    %v2712 = vadd.f32 %v2708, 1e-05
    %v2713 = vadd.f32 %v2709, 1e-05
    %v2714 = vadd.f32 %v2710, 1e-05
    %v2715 = vadd.f32 %v2711, 1e-05
    %v2716 = vrsqrt.pop %v2712
    %v2717 = vrsqrt.pop %v2713
    %v2718 = vrsqrt.pop %v2714
    %v2719 = vrsqrt.pop %v2715
    %v2720 = vmul.f32 %v2688, %v2716
    %v2721 = vmul.f32 %v2689, %v2717
    %v2722 = vmul.f32 %v2690, %v2718
    %v2723 = vmul.f32 %v2691, %v2719
    %2725 = vset.pattern.permute.xlu0 0
    %2726 = vperm.xlu0 %2725, %v2664
    %v2727 = vpop.permute.xlu0 %2726
    %2730 = vset.pattern.permute.xlu0 0
    %2731 = vperm.xlu0 %2730, %v2665
    %v2732 = vpop.permute.xlu0 %2731
    %2735 = vset.pattern.permute.xlu0 0
    %2736 = vperm.xlu0 %2735, %v2666
    %v2737 = vpop.permute.xlu0 %2736
    %2740 = vset.pattern.permute.xlu0 0
    %2741 = vperm.xlu0 %2740, %v2667
    %v2742 = vpop.permute.xlu0 %2741
    %v2744 = vmul.f32 %v2720, %v2727
    %v2745 = vmul.f32 %v2721, %v2732
    %v2746 = vmul.f32 %v2722, %v2737
    %v2747 = vmul.f32 %v2723, %v2742
    %v2748 = vadd.f32 %v2660, %v2744
    %v2749 = vadd.f32 %v2661, %v2745
    %v2750 = vadd.f32 %v2662, %v2746
    %v2751 = vadd.f32 %v2663, %v2747
    %2753 = vset.pattern.permute.xlu0 0
    %2754 = vperm.xlu0 %2753, %v2668
    %v2755 = vpop.permute.xlu0 %2754
    %2758 = vset.pattern.permute.xlu0 0
    %2759 = vperm.xlu0 %2758, %v2669
    %v2760 = vpop.permute.xlu0 %2759
    %2763 = vset.pattern.permute.xlu0 0
    %2764 = vperm.xlu0 %2763, %v2670
    %v2765 = vpop.permute.xlu0 %2764
    %2768 = vset.pattern.permute.xlu0 0
    %2769 = vperm.xlu0 %2768, %v2671
    %v2770 = vpop.permute.xlu0 %2769
    %v2772 = vadd.f32 %v2748, %v2755
    %v2773 = vadd.f32 %v2749, %v2760
    %v2774 = vadd.f32 %v2750, %v2765
    %v2775 = vadd.f32 %v2751, %v2770
    %v2776 = vmax.f32 %v2772, 0.0
    %v2777 = vmax.f32 %v2773, 0.0
    %v2778 = vmax.f32 %v2774, 0.0
    %v2779 = vmax.f32 %v2775, 0.0
    %2780 = vst [vmem:[#allocation2] sm:$0xff] %v2776
    %2781 = vst [vmem:[#allocation2 + $0x8] sm:$0xff] %v2777
    %2782 = vst [vmem:[#allocation2 + $0x10] sm:$0xff] %v2778
    %2783 = vst [vmem:[#allocation2 + $0x18] sm:$0xff] %v2779
    // Predicated region
    $region178: #{tpu_custom_call.1} parent=1 // pred_check
      _
    $region179: #{tpu_custom_call.1} parent=1 // pred_check_branch
      %2785 = sbr.rel (0) target = $region181
    $region180: #{tpu_custom_call.1} parent=1 // pred_region
      %s2787 = ssub.s32 512, 512
      %2788 = vsyncadd [#allocation3], %s2787
      %s2789 = sshll.u32 [#allocation2], 4
      %s2790 = int_to_ptr.vmem [resolvable:$true] %s2789
      %2795 = dma.vmem_to_hbm [thread:$0]  %s2790, 512, %s89, [#allocation3], 128, 128, 8
    $region181: #{tpu_custom_call.1} parent=1 // pred_fallthru
      _
    // Predicated region
    $region182: #{tpu_custom_call.1} parent=1 // pred_check
      _
    $region183: #{tpu_custom_call.1} parent=1 // pred_check_branch
      %2797 = sbr.rel (0) target = $region185
    $region184: #{tpu_custom_call.1} parent=1 // pred_region
      %2798 = dma.done [#allocation3], 512
    $region185: #{tpu_custom_call.1} parent=1 // pred_fallthru
      _
    %2799 = vsyncpa [#allocation3], 1

</llo_original>
